<compile_context>
chip_gen: v6e
topology: v6e:2x2x1
jax: 0.10.0
libtpu: 0.0.40
codegen_flags: <defaults>
</compile_context>

<pallas_src>
import jax
import jax.numpy as jnp
from jax import lax
from jax.experimental import pallas as pl
from jax.experimental.pallas import tpu as pltpu


# ----------------------------------------------------------------------------
# Pallas kernel: B_blk images per grid step, channel-minor.
#   x_ref   : (B, H*W, Cin)   f32   channel-minor input block
#   s1/b1   : (1, Cin)        f32   folded BN1 scale / shift
#   w1_ref  : (Cin, Cmid)     bf16  1x1 conv weight with BN2 scale folded in
#   b2_ref  : (1, Cmid)       f32   folded BN2 shift
#   w2_ref  : (9, Cmid, Cout) bf16  3x3 conv weight, taps ordered (dy, dx)
#   out_ref : (B, H*W, Cin+Cout) f32  fused concat([x, branch], channel)
#   pad_ref : VMEM scratch (B, H+2, W+2, Cmid) f32 — zero-padded activations
# ----------------------------------------------------------------------------
def bottleneck_kernel(x_ref, s1_ref, b1_ref, w1_ref, b2_ref, w2_ref,
                      out_ref, pad_ref):
    B, HW, Cin = x_ref.shape
    Cmid = w1_ref.shape[1]
    Cout = w2_ref.shape[2]
    H = pad_ref.shape[1] - 2
    W = pad_ref.shape[2] - 2

    x = x_ref[...]                                           # (B, HW, Cin) f32

    # ---- BN1 (folded) + ReLU: channel-minor -> params broadcast over lanes ---
    y1 = jnp.maximum(x * s1_ref[...] + b1_ref[...], 0.0)     # (B, HW, Cin) f32

    # ---- 1x1 conv on the MXU (BN2 scale folded into w1), whole block at once -
    z = jnp.dot(y1.reshape(B * HW, Cin).astype(jnp.bfloat16), w1_ref[...],
                preferred_element_type=jnp.float32)          # (B*HW, Cmid) f32

    # ---- BN2 shift + ReLU ----------------------------------------------------
    y2 = jnp.maximum(z + b2_ref[...], 0.0)                   # (B*HW, Cmid) f32
    y2r = y2.reshape(B, H, W, Cmid)

    # ---- fused concat: passthrough half of torch.cat([x, branch], C) ---------
    out_ref[:, :, 0:Cin] = x

    # ---- padded slab + 3x3 conv as 9 accumulating K=Cmid dots -----------------
    # Only the 1-pixel border is zeroed each step (interior is fully
    # overwritten), which is cheap and megacore-safe.
    # TODO(synk): a bf16 pad slab would halve scratch + tap-load traffic, but
    # bf16 packs 2 rows per sublane so the odd-offset interior/border stores and
    # odd-dx tap windows need packed-sublane read-modify-write; kept f32 for
    # robust lowering (the per-tap bf16 cast below still feeds the MXU in bf16).
    zero_row = jnp.zeros((1, W + 2, Cmid), jnp.float32)
    zero_col = jnp.zeros((H, 1, Cmid), jnp.float32)
    for b in range(B):                                       # static unroll
        pad_ref[b, 0:1, :, :] = zero_row
        pad_ref[b, H + 1:H + 2, :, :] = zero_row
        pad_ref[b, 1:H + 1, 0:1, :] = zero_col
        pad_ref[b, 1:H + 1, W + 1:W + 2, :] = zero_col
        pad_ref[b, 1:H + 1, 1:W + 1, :] = y2r[b]

        acc = None
        for t in range(9):
            dy, dx = divmod(t, 3)
            tap = pad_ref[b, dy:dy + H, dx:dx + W, :].reshape(HW, Cmid)
            part = jnp.dot(tap.astype(jnp.bfloat16), w2_ref[t],
                           preferred_element_type=jnp.float32)   # (HW, Cout)
            acc = part if acc is None else acc + part

        # Branch half of the fused concat: plain channel-slab store.
        out_ref[b, :, Cin:Cin + Cout] = acc


# ----------------------------------------------------------------------------
# Blocking / VMEM heuristics.
# ----------------------------------------------------------------------------
def _pick_block_images(n, per_image_bytes, budget_bytes=6 << 20):
    """Largest divisor of n fitting the per-step budget while keeping >= 2 grid
    steps (so both v7x TensorCores get work and DMA/compute overlap exists)."""
    best = 1
    for d in range(1, n + 1):
        if n % d:
            continue
        if d * per_image_bytes > budget_bytes:
            break
        if n // d >= 2 or n == 1:
            best = d
    return best


def _vmem_limit_bytes(estimate_bytes):
    try:
        cap = pltpu.get_tpu_info().vmem_capacity_bytes
    except Exception:                       # pragma: no cover - conservative path
        cap = 64 << 20                      # v7x per-TensorCore VMEM
    # ~75% of physical leaves compiler headroom: <=48 MiB on v7x,
    # <=96 MiB on v5e/v6e (where bigger image blocks also pay off).
    return int(min(max(2 * estimate_bytes, 16 << 20), int(0.75 * cap)))


# ----------------------------------------------------------------------------
# Channel-minor forward: x_cm is (N, H*W, C).  Use this entry when chaining
# DenseNet blocks so activations never round-trip through NCHW transposes.
# ----------------------------------------------------------------------------
def bottleneck_forward_cm(x_cm, params, H, W):
    (g1, be1, m1, v1, cw1, g2, be2, m2, v2, cw2) = params
    eps = 1e-5

    N, HW, Cin = x_cm.shape
    assert HW == H * W
    Cmid = cw1.shape[0]          # conv1 weight: (Cmid, Cin, 1, 1)
    Cout = cw2.shape[0]          # conv2 weight: (Cout, Cmid, 3, 3)
    Ctot = Cin + Cout

    # Fold BN (inference mode) into per-channel scale / shift.
    s1 = g1 / jnp.sqrt(v1 + eps)
    b1 = be1 - m1 * s1
    s2 = g2 / jnp.sqrt(v2 + eps)
    b2 = be2 - m2 * s2

    # 1x1 conv weight with BN2 scale folded in; 3x3 weight as (tap, Cmid, Cout)
    # with taps ordered (dy, dx) to match the kernel's window loop.
    w1 = (jnp.transpose(cw1[:, :, 0, 0], (1, 0)) * s2[None, :]).astype(jnp.bfloat16)
    w2 = jnp.transpose(cw2, (2, 3, 1, 0)).reshape(9, Cmid, Cout).astype(jnp.bfloat16)

    s1_2d = s1.reshape(1, Cin).astype(jnp.float32)
    b1_2d = b1.reshape(1, Cin).astype(jnp.float32)
    b2_2d = b2.reshape(1, Cmid).astype(jnp.float32)

    # Per-image VMEM working set (x/out blocks, padded slab, temporaries).
    per_image_bytes = (HW * (Cin + Ctot) * 4
                       + (H + 2) * (W + 2) * Cmid * 4
                       + 6 * HW * Cmid * 4)
    B_blk = _pick_block_images(N, per_image_bytes)
    grid = (N // B_blk,)

    weight_bytes = 2 * ((Cin * Cmid + 9 * Cmid * Cout) * 2 + (2 * Cin + Cmid) * 4)
    vmem_limit = _vmem_limit_bytes(2 * B_blk * per_image_bytes + weight_bytes)

    out_cm = pl.pallas_call(
        bottleneck_kernel,
        out_shape=jax.ShapeDtypeStruct((N, HW, Ctot), jnp.float32),
        grid_spec=pltpu.PrefetchScalarGridSpec(
            num_scalar_prefetch=0,
            grid=grid,
            in_specs=[
                pl.BlockSpec((B_blk, HW, Cin), lambda n: (n, 0, 0)),
                # Grid-invariant params / weights (constant index maps): Pallas
                # revisits the same block so they are not re-DMA'd per step.
                # TODO(synk): on v7x, pipeline_mode=pl.Buffered(1) here (or a
                # one-shot scratch copy) would drop the redundant second weight
                # buffer; left at defaults for maximally portable lowering.
                pl.BlockSpec((1, Cin), lambda n: (0, 0)),
                pl.BlockSpec((1, Cin), lambda n: (0, 0)),
                pl.BlockSpec((Cin, Cmid), lambda n: (0, 0)),
                pl.BlockSpec((1, Cmid), lambda n: (0, 0)),
                pl.BlockSpec((9, Cmid, Cout), lambda n: (0, 0, 0)),
            ],
            out_specs=pl.BlockSpec((B_blk, HW, Ctot), lambda n: (n, 0, 0)),
            scratch_shapes=[
                pltpu.VMEM((B_blk, H + 2, W + 2, Cmid), jnp.float32)],
        ),
        compiler_params=pltpu.CompilerParams(
            dimension_semantics=("parallel",),
            vmem_limit_bytes=vmem_limit),
    )(x_cm, s1_2d, b1_2d, w1, b2_2d, w2)
    return out_cm


# ----------------------------------------------------------------------------
# NCHW wrapper matching the torch module's interface.  The transposes here are
# only for the standalone test; a chained DenseNet should call
# bottleneck_forward_cm and stay channel-minor across blocks.
# ----------------------------------------------------------------------------
def bottleneck_forward(x_nchw, params):
    N, Cin, H, W = x_nchw.shape
    x_cm = jnp.transpose(x_nchw, (0, 2, 3, 1)).reshape(N, H * W, Cin) \
              .astype(jnp.float32)
    out_cm = bottleneck_forward_cm(x_cm, params, H, W)
    Ctot = out_cm.shape[-1]
    return jnp.transpose(out_cm.reshape(N, H, W, Ctot), (0, 3, 1, 2))


# ----------------------------------------------------------------------------
# Pure-JAX reference (eval-mode BN, f32) for correctness checking.
# ----------------------------------------------------------------------------
def bottleneck_reference(x, params):
    (g1, be1, m1, v1, cw1, g2, be2, m2, v2, cw2) = params
    eps = 1e-5

    def bn(x, g, b, m, v):
        return (x - m[None, :, None, None]) / jnp.sqrt(v + eps)[None, :, None, None] \
               * g[None, :, None, None] + b[None, :, None, None]

    y = jnp.maximum(bn(x, g1, be1, m1, v1), 0.0)
    y = lax.conv_general_dilated(y, cw1, (1, 1), 'VALID',
                                 dimension_numbers=('NCHW', 'OIHW', 'NCHW'))
    y = jnp.maximum(bn(y, g2, be2, m2, v2), 0.0)
    y = lax.conv_general_dilated(y, cw2, (1, 1), [(1, 1), (1, 1)],
                                 dimension_numbers=('NCHW', 'OIHW', 'NCHW'))
    return jnp.concatenate([x, y], axis=1)


def init_params(key, in_channels, growth_rate):
    inner = 4 * growth_rate
    ks = jax.random.split(key, 10)
    g1  = jax.random.uniform(ks[0], (in_channels,), jnp.float32, 0.5, 1.5)
    be1 = 0.1 * jax.random.normal(ks[1], (in_channels,), jnp.float32)
    m1  = 0.1 * jax.random.normal(ks[2], (in_channels,), jnp.float32)
    v1  = jax.random.uniform(ks[3], (in_channels,), jnp.float32, 0.5, 1.5)
    cw1 = 0.1 * jax.random.normal(ks[4], (inner, in_channels, 1, 1), jnp.float32)
    g2  = jax.random.uniform(ks[5], (inner,), jnp.float32, 0.5, 1.5)
    be2 = 0.1 * jax.random.normal(ks[6], (inner,), jnp.float32)
    m2  = 0.1 * jax.random.normal(ks[7], (inner,), jnp.float32)
    v2  = jax.random.uniform(ks[8], (inner,), jnp.float32, 0.5, 1.5)
    cw2 = 0.1 * jax.random.normal(ks[9], (growth_rate, inner, 3, 3), jnp.float32)
    return (g1, be1, m1, v1, cw1, g2, be2, m2, v2, cw2)


if __name__ == "__main__":
    N, Cin, H, W = 2, 4, 16, 16
    growth_rate = 8

    key = jax.random.PRNGKey(0)
    kx, kp = jax.random.split(key)
    x = jax.random.normal(kx, (N, Cin, H, W), jnp.float32)
    params = init_params(kp, Cin, growth_rate)

    out = jax.block_until_ready(bottleneck_forward(x, params))
    ref = jax.block_until_ready(bottleneck_reference(x, params))

    assert out.shape == (N, Cin + growth_rate, H, W), out.shape
    # Passthrough channels (torch.cat's x slice) must be bit-exact.
    assert bool(jnp.array_equal(out[:, :Cin], x))
    # Branch channels use bf16 MXU operands -> compare with bf16-level tolerance.
    err = float(jnp.max(jnp.abs(out[:, Cin:] - ref[:, Cin:])))
    assert jnp.allclose(out[:, Cin:], ref[:, Cin:], atol=3e-2, rtol=3e-2), err

    print("KERNEL_OK")
</pallas_src>

<mosaic_0001>
module attributes {stable_mosaic.version = 11 : i64} {
  func.func @bottleneck_kernel(%arg0: i32, %arg1: memref<1x256x4xf32, #tpu.memory_space<vmem>>, %arg2: memref<1x4xf32, #tpu.memory_space<vmem>>, %arg3: memref<1x4xf32, #tpu.memory_space<vmem>>, %arg4: memref<4x32xbf16, #tpu.memory_space<vmem>>, %arg5: memref<1x32xf32, #tpu.memory_space<vmem>>, %arg6: memref<9x32x8xbf16, #tpu.memory_space<vmem>>, %arg7: memref<1x256x12xf32, #tpu.memory_space<vmem>>, %arg8: memref<1x18x18x32xf32, #tpu.memory_space<vmem>>) attributes {dimension_semantics = [#tpu.dimension_semantics<parallel>], iteration_bounds = array<i64: 2>, scalar_prefetch = 0 : i64, scratch_operands = 1 : i64, tpu.core_type = #tpu.core_type<tc>, window_params = [{transform_indices = @transform_0, window_bounds = array<i64: 1, 256, 4>}, {pipeline_mode = #tpu.pipeline_mode<synchronous>, transform_indices = @transform_1, window_bounds = array<i64: 1, 4>}, {pipeline_mode = #tpu.pipeline_mode<synchronous>, transform_indices = @transform_2, window_bounds = array<i64: 1, 4>}, {pipeline_mode = #tpu.pipeline_mode<synchronous>, transform_indices = @transform_3, window_bounds = array<i64: 4, 32>}, {pipeline_mode = #tpu.pipeline_mode<synchronous>, transform_indices = @transform_4, window_bounds = array<i64: 1, 32>}, {pipeline_mode = #tpu.pipeline_mode<synchronous>, transform_indices = @transform_5, window_bounds = array<i64: 9, 32, 8>}, {transform_indices = @transform_6, window_bounds = array<i64: 1, 256, 12>}]} {
    %c0 = arith.constant 0 : index
    %c0_0 = arith.constant 0 : index
    %c0_1 = arith.constant 0 : index
    %0 = vector.load %arg1[%c0, %c0_0, %c0_1] : memref<1x256x4xf32, #tpu.memory_space<vmem>>, vector<1x256x4xf32>
    %c0_2 = arith.constant 0 : index
    %c0_3 = arith.constant 0 : index
    %1 = vector.load %arg2[%c0_2, %c0_3] : memref<1x4xf32, #tpu.memory_space<vmem>>, vector<1x4xf32>
    %2 = vector.shape_cast %1 : vector<1x4xf32> to vector<1x1x4xf32>
    %3 = vector.broadcast %2 : vector<1x1x4xf32> to vector<1x256x4xf32>
    %4 = arith.mulf %0, %3 : vector<1x256x4xf32>
    %c0_4 = arith.constant 0 : index
    %c0_5 = arith.constant 0 : index
    %5 = vector.load %arg3[%c0_4, %c0_5] : memref<1x4xf32, #tpu.memory_space<vmem>>, vector<1x4xf32>
    %6 = vector.shape_cast %5 : vector<1x4xf32> to vector<1x1x4xf32>
    %7 = vector.broadcast %6 : vector<1x1x4xf32> to vector<1x256x4xf32>
    %8 = arith.addf %4, %7 : vector<1x256x4xf32>
    %cst = arith.constant 0.000000e+00 : f32
    %9 = vector.broadcast %cst : f32 to vector<1x256x4xf32>
    %10 = arith.maximumf %8, %9 : vector<1x256x4xf32>
    %11 = vector.shape_cast %10 : vector<1x256x4xf32> to vector<256x4xf32>
    %12 = arith.truncf %11 : vector<256x4xf32> to vector<256x4xbf16>
    %c0_6 = arith.constant 0 : index
    %c0_7 = arith.constant 0 : index
    %13 = vector.load %arg4[%c0_6, %c0_7] : memref<4x32xbf16, #tpu.memory_space<vmem>>, vector<4x32xbf16>
    %cst_8 = arith.constant dense<0.000000e+00> : vector<256x32xf32>
    %14 = tpu.matmul %12, %13, %cst_8 {dimension_numbers = #tpu.dot_dimension_numbers<[1], [0], [0], [1], [0, 0, 1, 1], [], []>} : vector<256x4xbf16>, vector<4x32xbf16>, vector<256x32xf32> -> vector<256x32xf32>
    %c0_9 = arith.constant 0 : index
    %c0_10 = arith.constant 0 : index
    %15 = vector.load %arg5[%c0_9, %c0_10] : memref<1x32xf32, #tpu.memory_space<vmem>>, vector<1x32xf32>
    %16 = vector.broadcast %15 : vector<1x32xf32> to vector<256x32xf32>
    %17 = arith.addf %14, %16 : vector<256x32xf32>
    %cst_11 = arith.constant 0.000000e+00 : f32
    %18 = vector.broadcast %cst_11 : f32 to vector<256x32xf32>
    %19 = arith.maximumf %17, %18 : vector<256x32xf32>
    %20 = vector.shape_cast %19 : vector<256x32xf32> to vector<1x16x16x32xf32>
    %c0_12 = arith.constant 0 : index
    %c0_13 = arith.constant 0 : index
    %c0_14 = arith.constant 0 : index
    %21 = vector.load %arg7[%c0_12, %c0_13, %c0_14] : memref<1x256x12xf32, #tpu.memory_space<vmem>>, vector<1x256x4xf32>
    tpu.vector_store %arg7[%c0_12, %c0_13, %c0_14], %0 {strides = array<i32>} : memref<1x256x12xf32, #tpu.memory_space<vmem>>, vector<1x256x4xf32>,
    %cst_15 = arith.constant 0.000000e+00 : f32
    %22 = vector.broadcast %cst_15 : f32 to vector<1x18x32xf32>
    %cst_16 = arith.constant 0.000000e+00 : f32
    %23 = vector.broadcast %cst_16 : f32 to vector<16x1x32xf32>
    %c0_17 = arith.constant 0 : index
    %c0_18 = arith.constant 0 : index
    %c0_19 = arith.constant 0 : index
    %c0_20 = arith.constant 0 : index
    %24 = vector.load %arg8[%c0_17, %c0_18, %c0_19, %c0_20] : memref<1x18x18x32xf32, #tpu.memory_space<vmem>>, vector<1x1x18x32xf32>
    %25 = vector.shape_cast %24 : vector<1x1x18x32xf32> to vector<1x18x32xf32>
    %26 = vector.shape_cast %22 : vector<1x18x32xf32> to vector<1x1x18x32xf32>
    tpu.vector_store %arg8[%c0_17, %c0_18, %c0_19, %c0_20], %26 {strides = array<i32>} : memref<1x18x18x32xf32, #tpu.memory_space<vmem>>, vector<1x1x18x32xf32>,
    %c0_21 = arith.constant 0 : index
    %c17 = arith.constant 17 : index
    %c0_22 = arith.constant 0 : index
    %c0_23 = arith.constant 0 : index
    %27 = vector.load %arg8[%c0_21, %c17, %c0_22, %c0_23] : memref<1x18x18x32xf32, #tpu.memory_space<vmem>>, vector<1x1x18x32xf32>
    %28 = vector.shape_cast %27 : vector<1x1x18x32xf32> to vector<1x18x32xf32>
    %29 = vector.shape_cast %22 : vector<1x18x32xf32> to vector<1x1x18x32xf32>
    tpu.vector_store %arg8[%c0_21, %c17, %c0_22, %c0_23], %29 {strides = array<i32>} : memref<1x18x18x32xf32, #tpu.memory_space<vmem>>, vector<1x1x18x32xf32>,
    %c0_24 = arith.constant 0 : index
    %c1 = arith.constant 1 : index
    %c0_25 = arith.constant 0 : index
    %c0_26 = arith.constant 0 : index
    %30 = vector.load %arg8[%c0_24, %c1, %c0_25, %c0_26] : memref<1x18x18x32xf32, #tpu.memory_space<vmem>>, vector<1x16x1x32xf32>
    %31 = vector.shape_cast %30 : vector<1x16x1x32xf32> to vector<16x1x32xf32>
    %32 = vector.shape_cast %23 : vector<16x1x32xf32> to vector<1x16x1x32xf32>
    tpu.vector_store %arg8[%c0_24, %c1, %c0_25, %c0_26], %32 {strides = array<i32>} : memref<1x18x18x32xf32, #tpu.memory_space<vmem>>, vector<1x16x1x32xf32>,
    %c0_27 = arith.constant 0 : index
    %c1_28 = arith.constant 1 : index
    %c17_29 = arith.constant 17 : index
    %c0_30 = arith.constant 0 : index
    %33 = vector.load %arg8[%c0_27, %c1_28, %c17_29, %c0_30] : memref<1x18x18x32xf32, #tpu.memory_space<vmem>>, vector<1x16x1x32xf32>
    %34 = vector.shape_cast %33 : vector<1x16x1x32xf32> to vector<16x1x32xf32>
    %35 = vector.shape_cast %23 : vector<16x1x32xf32> to vector<1x16x1x32xf32>
    tpu.vector_store %arg8[%c0_27, %c1_28, %c17_29, %c0_30], %35 {strides = array<i32>} : memref<1x18x18x32xf32, #tpu.memory_space<vmem>>, vector<1x16x1x32xf32>,
    %36 = vector.shape_cast %20 : vector<1x16x16x32xf32> to vector<16x16x32xf32>
    %c0_31 = arith.constant 0 : index
    %c1_32 = arith.constant 1 : index
    %c1_33 = arith.constant 1 : index
    %c0_34 = arith.constant 0 : index
    %37 = vector.load %arg8[%c0_31, %c1_32, %c1_33, %c0_34] : memref<1x18x18x32xf32, #tpu.memory_space<vmem>>, vector<1x16x16x32xf32>
    %38 = vector.shape_cast %37 : vector<1x16x16x32xf32> to vector<16x16x32xf32>
    %39 = vector.shape_cast %36 : vector<16x16x32xf32> to vector<1x16x16x32xf32>
    tpu.vector_store %arg8[%c0_31, %c1_32, %c1_33, %c0_34], %39 {strides = array<i32>} : memref<1x18x18x32xf32, #tpu.memory_space<vmem>>, vector<1x16x16x32xf32>,
    %c0_35 = arith.constant 0 : index
    %c0_36 = arith.constant 0 : index
    %c0_37 = arith.constant 0 : index
    %c0_38 = arith.constant 0 : index
    %40 = vector.load %arg8[%c0_35, %c0_36, %c0_37, %c0_38] : memref<1x18x18x32xf32, #tpu.memory_space<vmem>>, vector<1x16x16x32xf32>
    %41 = vector.shape_cast %40 : vector<1x16x16x32xf32> to vector<16x16x32xf32>
    %42 = vector.shape_cast %41 : vector<16x16x32xf32> to vector<256x32xf32>
    %43 = arith.truncf %42 : vector<256x32xf32> to vector<256x32xbf16>
    %c0_39 = arith.constant 0 : index
    %c0_40 = arith.constant 0 : index
    %c0_41 = arith.constant 0 : index
    %44 = vector.load %arg6[%c0_39, %c0_40, %c0_41] : memref<9x32x8xbf16, #tpu.memory_space<vmem>>, vector<1x32x8xbf16>
    %45 = vector.shape_cast %44 : vector<1x32x8xbf16> to vector<32x8xbf16>
    %cst_42 = arith.constant dense<0.000000e+00> : vector<256x8xf32>
    %46 = tpu.matmul %43, %45, %cst_42 {dimension_numbers = #tpu.dot_dimension_numbers<[1], [0], [0], [1], [0, 0, 1, 1], [], []>} : vector<256x32xbf16>, vector<32x8xbf16>, vector<256x8xf32> -> vector<256x8xf32>
    %c0_43 = arith.constant 0 : index
    %c0_44 = arith.constant 0 : index
    %c1_45 = arith.constant 1 : index
    %c0_46 = arith.constant 0 : index
    %47 = vector.load %arg8[%c0_43, %c0_44, %c1_45, %c0_46] : memref<1x18x18x32xf32, #tpu.memory_space<vmem>>, vector<1x16x16x32xf32>
    %48 = vector.shape_cast %47 : vector<1x16x16x32xf32> to vector<16x16x32xf32>
    %49 = vector.shape_cast %48 : vector<16x16x32xf32> to vector<256x32xf32>
    %50 = arith.truncf %49 : vector<256x32xf32> to vector<256x32xbf16>
    %c1_47 = arith.constant 1 : index
    %c0_48 = arith.constant 0 : index
    %c0_49 = arith.constant 0 : index
    %51 = vector.load %arg6[%c1_47, %c0_48, %c0_49] : memref<9x32x8xbf16, #tpu.memory_space<vmem>>, vector<1x32x8xbf16>
    %52 = vector.shape_cast %51 : vector<1x32x8xbf16> to vector<32x8xbf16>
    %cst_50 = arith.constant dense<0.000000e+00> : vector<256x8xf32>
    %53 = tpu.matmul %50, %52, %cst_50 {dimension_numbers = #tpu.dot_dimension_numbers<[1], [0], [0], [1], [0, 0, 1, 1], [], []>} : vector<256x32xbf16>, vector<32x8xbf16>, vector<256x8xf32> -> vector<256x8xf32>
    %54 = arith.addf %46, %53 : vector<256x8xf32>
    %c0_51 = arith.constant 0 : index
    %c0_52 = arith.constant 0 : index
    %c2 = arith.constant 2 : index
    %c0_53 = arith.constant 0 : index
    %55 = vector.load %arg8[%c0_51, %c0_52, %c2, %c0_53] : memref<1x18x18x32xf32, #tpu.memory_space<vmem>>, vector<1x16x16x32xf32>
    %56 = vector.shape_cast %55 : vector<1x16x16x32xf32> to vector<16x16x32xf32>
    %57 = vector.shape_cast %56 : vector<16x16x32xf32> to vector<256x32xf32>
    %58 = arith.truncf %57 : vector<256x32xf32> to vector<256x32xbf16>
    %c2_54 = arith.constant 2 : index
    %c0_55 = arith.constant 0 : index
    %c0_56 = arith.constant 0 : index
    %59 = vector.load %arg6[%c2_54, %c0_55, %c0_56] : memref<9x32x8xbf16, #tpu.memory_space<vmem>>, vector<1x32x8xbf16>
    %60 = vector.shape_cast %59 : vector<1x32x8xbf16> to vector<32x8xbf16>
    %cst_57 = arith.constant dense<0.000000e+00> : vector<256x8xf32>
    %61 = tpu.matmul %58, %60, %cst_57 {dimension_numbers = #tpu.dot_dimension_numbers<[1], [0], [0], [1], [0, 0, 1, 1], [], []>} : vector<256x32xbf16>, vector<32x8xbf16>, vector<256x8xf32> -> vector<256x8xf32>
    %62 = arith.addf %54, %61 : vector<256x8xf32>
    %c0_58 = arith.constant 0 : index
    %c1_59 = arith.constant 1 : index
    %c0_60 = arith.constant 0 : index
    %c0_61 = arith.constant 0 : index
    %63 = vector.load %arg8[%c0_58, %c1_59, %c0_60, %c0_61] : memref<1x18x18x32xf32, #tpu.memory_space<vmem>>, vector<1x16x16x32xf32>
    %64 = vector.shape_cast %63 : vector<1x16x16x32xf32> to vector<16x16x32xf32>
    %65 = vector.shape_cast %64 : vector<16x16x32xf32> to vector<256x32xf32>
    %66 = arith.truncf %65 : vector<256x32xf32> to vector<256x32xbf16>
    %c3 = arith.constant 3 : index
    %c0_62 = arith.constant 0 : index
    %c0_63 = arith.constant 0 : index
    %67 = vector.load %arg6[%c3, %c0_62, %c0_63] : memref<9x32x8xbf16, #tpu.memory_space<vmem>>, vector<1x32x8xbf16>
    %68 = vector.shape_cast %67 : vector<1x32x8xbf16> to vector<32x8xbf16>
    %cst_64 = arith.constant dense<0.000000e+00> : vector<256x8xf32>
    %69 = tpu.matmul %66, %68, %cst_64 {dimension_numbers = #tpu.dot_dimension_numbers<[1], [0], [0], [1], [0, 0, 1, 1], [], []>} : vector<256x32xbf16>, vector<32x8xbf16>, vector<256x8xf32> -> vector<256x8xf32>
    %70 = arith.addf %62, %69 : vector<256x8xf32>
    %c0_65 = arith.constant 0 : index
    %c1_66 = arith.constant 1 : index
    %c1_67 = arith.constant 1 : index
    %c0_68 = arith.constant 0 : index
    %71 = vector.load %arg8[%c0_65, %c1_66, %c1_67, %c0_68] : memref<1x18x18x32xf32, #tpu.memory_space<vmem>>, vector<1x16x16x32xf32>
    %72 = vector.shape_cast %71 : vector<1x16x16x32xf32> to vector<16x16x32xf32>
    %73 = vector.shape_cast %72 : vector<16x16x32xf32> to vector<256x32xf32>
    %74 = arith.truncf %73 : vector<256x32xf32> to vector<256x32xbf16>
    %c4 = arith.constant 4 : index
    %c0_69 = arith.constant 0 : index
    %c0_70 = arith.constant 0 : index
    %75 = vector.load %arg6[%c4, %c0_69, %c0_70] : memref<9x32x8xbf16, #tpu.memory_space<vmem>>, vector<1x32x8xbf16>
    %76 = vector.shape_cast %75 : vector<1x32x8xbf16> to vector<32x8xbf16>
    %cst_71 = arith.constant dense<0.000000e+00> : vector<256x8xf32>
    %77 = tpu.matmul %74, %76, %cst_71 {dimension_numbers = #tpu.dot_dimension_numbers<[1], [0], [0], [1], [0, 0, 1, 1], [], []>} : vector<256x32xbf16>, vector<32x8xbf16>, vector<256x8xf32> -> vector<256x8xf32>
    %78 = arith.addf %70, %77 : vector<256x8xf32>
    %c0_72 = arith.constant 0 : index
    %c1_73 = arith.constant 1 : index
    %c2_74 = arith.constant 2 : index
    %c0_75 = arith.constant 0 : index
    %79 = vector.load %arg8[%c0_72, %c1_73, %c2_74, %c0_75] : memref<1x18x18x32xf32, #tpu.memory_space<vmem>>, vector<1x16x16x32xf32>
    %80 = vector.shape_cast %79 : vector<1x16x16x32xf32> to vector<16x16x32xf32>
    %81 = vector.shape_cast %80 : vector<16x16x32xf32> to vector<256x32xf32>
    %82 = arith.truncf %81 : vector<256x32xf32> to vector<256x32xbf16>
    %c5 = arith.constant 5 : index
    %c0_76 = arith.constant 0 : index
    %c0_77 = arith.constant 0 : index
    %83 = vector.load %arg6[%c5, %c0_76, %c0_77] : memref<9x32x8xbf16, #tpu.memory_space<vmem>>, vector<1x32x8xbf16>
    %84 = vector.shape_cast %83 : vector<1x32x8xbf16> to vector<32x8xbf16>
    %cst_78 = arith.constant dense<0.000000e+00> : vector<256x8xf32>
    %85 = tpu.matmul %82, %84, %cst_78 {dimension_numbers = #tpu.dot_dimension_numbers<[1], [0], [0], [1], [0, 0, 1, 1], [], []>} : vector<256x32xbf16>, vector<32x8xbf16>, vector<256x8xf32> -> vector<256x8xf32>
    %86 = arith.addf %78, %85 : vector<256x8xf32>
    %c0_79 = arith.constant 0 : index
    %c2_80 = arith.constant 2 : index
    %c0_81 = arith.constant 0 : index
    %c0_82 = arith.constant 0 : index
    %87 = vector.load %arg8[%c0_79, %c2_80, %c0_81, %c0_82] : memref<1x18x18x32xf32, #tpu.memory_space<vmem>>, vector<1x16x16x32xf32>
    %88 = vector.shape_cast %87 : vector<1x16x16x32xf32> to vector<16x16x32xf32>
    %89 = vector.shape_cast %88 : vector<16x16x32xf32> to vector<256x32xf32>
    %90 = arith.truncf %89 : vector<256x32xf32> to vector<256x32xbf16>
    %c6 = arith.constant 6 : index
    %c0_83 = arith.constant 0 : index
    %c0_84 = arith.constant 0 : index
    %91 = vector.load %arg6[%c6, %c0_83, %c0_84] : memref<9x32x8xbf16, #tpu.memory_space<vmem>>, vector<1x32x8xbf16>
    %92 = vector.shape_cast %91 : vector<1x32x8xbf16> to vector<32x8xbf16>
    %cst_85 = arith.constant dense<0.000000e+00> : vector<256x8xf32>
    %93 = tpu.matmul %90, %92, %cst_85 {dimension_numbers = #tpu.dot_dimension_numbers<[1], [0], [0], [1], [0, 0, 1, 1], [], []>} : vector<256x32xbf16>, vector<32x8xbf16>, vector<256x8xf32> -> vector<256x8xf32>
    %94 = arith.addf %86, %93 : vector<256x8xf32>
    %c0_86 = arith.constant 0 : index
    %c2_87 = arith.constant 2 : index
    %c1_88 = arith.constant 1 : index
    %c0_89 = arith.constant 0 : index
    %95 = vector.load %arg8[%c0_86, %c2_87, %c1_88, %c0_89] : memref<1x18x18x32xf32, #tpu.memory_space<vmem>>, vector<1x16x16x32xf32>
    %96 = vector.shape_cast %95 : vector<1x16x16x32xf32> to vector<16x16x32xf32>
    %97 = vector.shape_cast %96 : vector<16x16x32xf32> to vector<256x32xf32>
    %98 = arith.truncf %97 : vector<256x32xf32> to vector<256x32xbf16>
    %c7 = arith.constant 7 : index
    %c0_90 = arith.constant 0 : index
    %c0_91 = arith.constant 0 : index
    %99 = vector.load %arg6[%c7, %c0_90, %c0_91] : memref<9x32x8xbf16, #tpu.memory_space<vmem>>, vector<1x32x8xbf16>
    %100 = vector.shape_cast %99 : vector<1x32x8xbf16> to vector<32x8xbf16>
    %cst_92 = arith.constant dense<0.000000e+00> : vector<256x8xf32>
    %101 = tpu.matmul %98, %100, %cst_92 {dimension_numbers = #tpu.dot_dimension_numbers<[1], [0], [0], [1], [0, 0, 1, 1], [], []>} : vector<256x32xbf16>, vector<32x8xbf16>, vector<256x8xf32> -> vector<256x8xf32>
    %102 = arith.addf %94, %101 : vector<256x8xf32>
    %c0_93 = arith.constant 0 : index
    %c2_94 = arith.constant 2 : index
    %c2_95 = arith.constant 2 : index
    %c0_96 = arith.constant 0 : index
    %103 = vector.load %arg8[%c0_93, %c2_94, %c2_95, %c0_96] : memref<1x18x18x32xf32, #tpu.memory_space<vmem>>, vector<1x16x16x32xf32>
    %104 = vector.shape_cast %103 : vector<1x16x16x32xf32> to vector<16x16x32xf32>
    %105 = vector.shape_cast %104 : vector<16x16x32xf32> to vector<256x32xf32>
    %106 = arith.truncf %105 : vector<256x32xf32> to vector<256x32xbf16>
    %c8 = arith.constant 8 : index
    %c0_97 = arith.constant 0 : index
    %c0_98 = arith.constant 0 : index
    %107 = vector.load %arg6[%c8, %c0_97, %c0_98] : memref<9x32x8xbf16, #tpu.memory_space<vmem>>, vector<1x32x8xbf16>
    %108 = vector.shape_cast %107 : vector<1x32x8xbf16> to vector<32x8xbf16>
    %cst_99 = arith.constant dense<0.000000e+00> : vector<256x8xf32>
    %109 = tpu.matmul %106, %108, %cst_99 {dimension_numbers = #tpu.dot_dimension_numbers<[1], [0], [0], [1], [0, 0, 1, 1], [], []>} : vector<256x32xbf16>, vector<32x8xbf16>, vector<256x8xf32> -> vector<256x8xf32>
    %110 = arith.addf %102, %109 : vector<256x8xf32>
    %c0_100 = arith.constant 0 : index
    %c0_101 = arith.constant 0 : index
    %c4_102 = arith.constant 4 : index
    %111 = vector.load %arg7[%c0_100, %c0_101, %c4_102] : memref<1x256x12xf32, #tpu.memory_space<vmem>>, vector<1x256x8xf32>
    %112 = vector.shape_cast %111 : vector<1x256x8xf32> to vector<256x8xf32>
    %113 = vector.shape_cast %110 : vector<256x8xf32> to vector<1x256x8xf32>
    tpu.vector_store %arg7[%c0_100, %c0_101, %c4_102], %113 {strides = array<i32>} : memref<1x256x12xf32, #tpu.memory_space<vmem>>, vector<1x256x8xf32>,
    return
  }
  func.func @transform_0(%arg0: i32) -> (i32, i32, i32) {
    %c0_i32 = arith.constant 0 : i32
    %c0_i32_0 = arith.constant 0 : i32
    %c0_i32_1 = arith.constant 0 : i32
    return %arg0, %c0_i32, %c0_i32_0 : i32, i32, i32
  }
  func.func @transform_1(%arg0: i32) -> (i32, i32) {
    %c0_i32 = arith.constant 0 : i32
    %c0_i32_0 = arith.constant 0 : i32
    %c0_i32_1 = arith.constant 0 : i32
    return %c0_i32, %c0_i32_0 : i32, i32
  }
  func.func @transform_2(%arg0: i32) -> (i32, i32) {
    %c0_i32 = arith.constant 0 : i32
    %c0_i32_0 = arith.constant 0 : i32
    %c0_i32_1 = arith.constant 0 : i32
    return %c0_i32, %c0_i32_0 : i32, i32
  }
  func.func @transform_3(%arg0: i32) -> (i32, i32) {
    %c0_i32 = arith.constant 0 : i32
    %c0_i32_0 = arith.constant 0 : i32
    %c0_i32_1 = arith.constant 0 : i32
    return %c0_i32, %c0_i32_0 : i32, i32
  }
  func.func @transform_4(%arg0: i32) -> (i32, i32) {
    %c0_i32 = arith.constant 0 : i32
    %c0_i32_0 = arith.constant 0 : i32
    %c0_i32_1 = arith.constant 0 : i32
    return %c0_i32, %c0_i32_0 : i32, i32
  }
  func.func @transform_5(%arg0: i32) -> (i32, i32, i32) {
    %c0_i32 = arith.constant 0 : i32
    %c0_i32_0 = arith.constant 0 : i32
    %c0_i32_1 = arith.constant 0 : i32
    %c0_i32_2 = arith.constant 0 : i32
    return %c0_i32, %c0_i32_0, %c0_i32_1 : i32, i32, i32
  }
  func.func @transform_6(%arg0: i32) -> (i32, i32, i32) {
    %c0_i32 = arith.constant 0 : i32
    %c0_i32_0 = arith.constant 0 : i32
    %c0_i32_1 = arith.constant 0 : i32
    return %arg0, %c0_i32, %c0_i32_0 : i32, i32, i32
  }
}

</mosaic_0001>

<llo_original>
// kernel: tpu_custom_call.1
$region0: #{tpu_custom_call.1}
  #allocation0 [shape = 'u32[]', space=smem, size = 0x4, offset = 0x4, fixed_abs, tag = 'smem constant byte address 0x4 - core index']
  #allocation1 [shape = 'u32[144,128]{1,0:T(1,128)}', space=vmem, size = 0x12000, scoped, tag = 'internal scratch']
  #allocation2 [shape = 'f32[1,18,18,32]{3,2,1,0:T(8,128)}', space=vmem, size = 0x36000, scoped, tag = 'scratch operand']
  %s0 = inlined_call_operand.vmem [shape: f32[2,256,4], index: 0, kind: input, shape index: {}]
  %s1 = inlined_call_operand.vmem [shape: f32[1,4], index: 1, kind: input, shape index: {}]
  %s2 = inlined_call_operand.vmem [shape: f32[1,4], index: 2, kind: input, shape index: {}]
  %s3 = inlined_call_operand.vmem [shape: bf16[4,32], index: 3, kind: input, shape index: {}]
  %s4 = inlined_call_operand.vmem [shape: f32[1,32], index: 4, kind: input, shape index: {}]
  %s5 = inlined_call_operand.vmem [shape: bf16[9,32,8], index: 5, kind: input, shape index: {}]
  %s6 = inlined_call_operand.vmem [shape: f32[2,256,12], index: 6, kind: output, shape index: {}]
  %s7 = sld [smem:[#allocation0]]
  $region57: #{tpu_custom_call.1} parent=0
    _
  %s9 = ssub.s32 1, %s7
  %s10 = scalar_select 0, %s9, %s7
  loop: start=0, step=1, limit=4
  $region2: #{tpu_custom_call.1} parent=0 // loop_pre_header
    _
  $region3: #{tpu_custom_call.1} parent=0 // loop_header
    %s12 = sphi 0, %s16
    %p13 = scmp.ge.s32.totalorder %s12, 4
    %s22 = sphi 0, %s24
    %s25 = sphi 0, %s22
    %s26 = sphi 0, %s25
    %s42 = sphi 0, %s26
    %s46 = sphi 0, %s46
    %s48 = sphi 0, %s46
    %s49 = sphi 0, %s48
    %s63 = sphi 0, %s49
    %s67 = sphi 0, %s67
    %s69 = sphi 0, %s67
    %s70 = sphi 0, %s69
    %s84 = sphi 0, %s70
    %s88 = sphi 0, %s88
    %s90 = sphi 0, %s88
    %s91 = sphi 0, %s90
    %s105 = sphi 0, %s91
    %s109 = sphi 0, %s109
    %s111 = sphi 0, %s109
    %s112 = sphi 0, %s111
    %s126 = sphi 0, %s112
    %s130 = sphi 0, %s130
    %s132 = sphi 0, %s130
    %s133 = sphi 0, %s132
    %s147 = sphi 0, %s133
    %s153 = sphi 0, %s155
    %s156 = sphi 0, %s153
    %s157 = sphi 0, %s156
    %s173 = sphi 0, %s157
  $region4: #{tpu_custom_call.1} parent=0 // loop_header_branch
    %15 = sbr.rel (%p13) target = $region8
  $region5: #{tpu_custom_call.1} parent=0 // loop_body
    %s17 = ssub.s32 %s12, 1
    %s18 = ssub.s32 %s12, 2
    %s19 = sadd.s32 %s12, 1
    %s20 = ssub.s32 %s12, %s19
    %p21 = scmp.eq.s32.totalorder %s20, 0
    %s23 = sadd.s32 %s22, 1
    %s24 = scalar_select %p21, %s22, %s23
    %p27 = pneg %p21
    %p28 = scmp.eq.s32.totalorder %s12, 1
    %p29 = por %p27, %p28
    %p30 = scmp.ne.s32.totalorder %s22, %s25
    %p31 = scmp.eq.s32.totalorder %s12, 0
    %p32 = por %p30, %p31
    %p33 = scmp.ne.s32.totalorder %s22, %s25
    %p34 = scmp.eq.s32.totalorder %s17, 1
    %p35 = por %p33, %p34
    %p36 = scmp.ne.s32.totalorder %s25, %s26
    %p37 = scmp.eq.s32.totalorder %s17, 0
    %p38 = por %p36, %p37
    %p39 = scmp.ne.s32.totalorder %s25, %s26
    %p40 = scmp.eq.s32.totalorder %s18, 1
    %p41 = por %p39, %p40
    %p43 = scmp.ne.s32.totalorder %s26, %s42
    %p44 = scmp.eq.s32.totalorder %s18, 0
    %p45 = por %p43, %p44
    %s47 = sadd.s32 %s46, 1
    %p50 = scmp.eq.s32.totalorder %s12, 1
    %p51 = scmp.ne.s32.totalorder %s46, %s48
    %p52 = scmp.eq.s32.totalorder %s12, 0
    %p53 = por %p51, %p52
    %p54 = scmp.ne.s32.totalorder %s46, %s48
    %p55 = scmp.eq.s32.totalorder %s17, 1
    %p56 = por %p54, %p55
    %p57 = scmp.ne.s32.totalorder %s48, %s49
    %p58 = scmp.eq.s32.totalorder %s17, 0
    %p59 = por %p57, %p58
    %p60 = scmp.ne.s32.totalorder %s48, %s49
    %p61 = scmp.eq.s32.totalorder %s18, 1
    %p62 = por %p60, %p61
    %p64 = scmp.ne.s32.totalorder %s49, %s63
    %p65 = scmp.eq.s32.totalorder %s18, 0
    %p66 = por %p64, %p65
    %s68 = sadd.s32 %s67, 1
    %p71 = scmp.eq.s32.totalorder %s12, 1
    %p72 = scmp.ne.s32.totalorder %s67, %s69
    %p73 = scmp.eq.s32.totalorder %s12, 0
    %p74 = por %p72, %p73
    %p75 = scmp.ne.s32.totalorder %s67, %s69
    %p76 = scmp.eq.s32.totalorder %s17, 1
    %p77 = por %p75, %p76
    %p78 = scmp.ne.s32.totalorder %s69, %s70
    %p79 = scmp.eq.s32.totalorder %s17, 0
    %p80 = por %p78, %p79
    %p81 = scmp.ne.s32.totalorder %s69, %s70
    %p82 = scmp.eq.s32.totalorder %s18, 1
    %p83 = por %p81, %p82
    %p85 = scmp.ne.s32.totalorder %s70, %s84
    %p86 = scmp.eq.s32.totalorder %s18, 0
    %p87 = por %p85, %p86
    %s89 = sadd.s32 %s88, 1
    %p92 = scmp.eq.s32.totalorder %s12, 1
    %p93 = scmp.ne.s32.totalorder %s88, %s90
    %p94 = scmp.eq.s32.totalorder %s12, 0
    %p95 = por %p93, %p94
    %p96 = scmp.ne.s32.totalorder %s88, %s90
    %p97 = scmp.eq.s32.totalorder %s17, 1
    %p98 = por %p96, %p97
    %p99 = scmp.ne.s32.totalorder %s90, %s91
    %p100 = scmp.eq.s32.totalorder %s17, 0
    %p101 = por %p99, %p100
    %p102 = scmp.ne.s32.totalorder %s90, %s91
    %p103 = scmp.eq.s32.totalorder %s18, 1
    %p104 = por %p102, %p103
    %p106 = scmp.ne.s32.totalorder %s91, %s105
    %p107 = scmp.eq.s32.totalorder %s18, 0
    %p108 = por %p106, %p107
    %s110 = sadd.s32 %s109, 1
    %p113 = scmp.eq.s32.totalorder %s12, 1
    %p114 = scmp.ne.s32.totalorder %s109, %s111
    %p115 = scmp.eq.s32.totalorder %s12, 0
    %p116 = por %p114, %p115
    %p117 = scmp.ne.s32.totalorder %s109, %s111
    %p118 = scmp.eq.s32.totalorder %s17, 1
    %p119 = por %p117, %p118
    %p120 = scmp.ne.s32.totalorder %s111, %s112
    %p121 = scmp.eq.s32.totalorder %s17, 0
    %p122 = por %p120, %p121
    %p123 = scmp.ne.s32.totalorder %s111, %s112
    %p124 = scmp.eq.s32.totalorder %s18, 1
    %p125 = por %p123, %p124
    %p127 = scmp.ne.s32.totalorder %s112, %s126
    %p128 = scmp.eq.s32.totalorder %s18, 0
    %p129 = por %p127, %p128
    %s131 = sadd.s32 %s130, 1
    %p134 = scmp.eq.s32.totalorder %s12, 1
    %p135 = scmp.ne.s32.totalorder %s130, %s132
    %p136 = scmp.eq.s32.totalorder %s12, 0
    %p137 = por %p135, %p136
    %p138 = scmp.ne.s32.totalorder %s130, %s132
    %p139 = scmp.eq.s32.totalorder %s17, 1
    %p140 = por %p138, %p139
    %p141 = scmp.ne.s32.totalorder %s132, %s133
    %p142 = scmp.eq.s32.totalorder %s17, 0
    %p143 = por %p141, %p142
    %p144 = scmp.ne.s32.totalorder %s132, %s133
    %p145 = scmp.eq.s32.totalorder %s18, 1
    %p146 = por %p144, %p145
    %p148 = scmp.ne.s32.totalorder %s133, %s147
    %p149 = scmp.eq.s32.totalorder %s18, 0
    %p150 = por %p148, %p149
    %s151 = ssub.s32 %s12, %s19
    %p152 = scmp.eq.s32.totalorder %s151, 0
    %s154 = sadd.s32 %s153, 1
    %s155 = scalar_select %p152, %s153, %s154
    %p158 = pneg %p152
    %p159 = scmp.eq.s32.totalorder %s12, 1
    %p160 = por %p158, %p159
    %p161 = scmp.ne.s32.totalorder %s153, %s156
    %p162 = scmp.eq.s32.totalorder %s12, 0
    %p163 = por %p161, %p162
    %p164 = scmp.ne.s32.totalorder %s153, %s156
    %p165 = scmp.eq.s32.totalorder %s17, 1
    %p166 = por %p164, %p165
    %p167 = scmp.ne.s32.totalorder %s156, %s157
    %p168 = scmp.eq.s32.totalorder %s17, 0
    %p169 = por %p167, %p168
    %p170 = scmp.ne.s32.totalorder %s156, %s157
    %p171 = scmp.eq.s32.totalorder %s18, 1
    %p172 = por %p170, %p171
    %p174 = scmp.ne.s32.totalorder %s157, %s173
    %p175 = scmp.eq.s32.totalorder %s18, 0
    %p176 = por %p174, %p175
    %p177 = scmp.le.s32.totalorder 1, %s12
    %p178 = scmp.lt.s32.totalorder %s12, 3
    %p179 = pnand %p177, %p178
    %p180 = pneg %p179
    // Predicated region
    $region9: #{tpu_custom_call.1} parent=5 // pred_check
      _
    $region10: #{tpu_custom_call.1} parent=5 // pred_check_branch
      %182 = sbr.rel (%p179) target = $region12
    $region11: #{tpu_custom_call.1} parent=5 // pred_region
      %s183 = ssub.s32 %s12, 1
      // Predicated region
      $region13: #{tpu_custom_call.1} parent=11 // pred_check
        %p184 = pneg %p59
      $region14: #{tpu_custom_call.1} parent=11 // pred_check_branch
        %186 = sbr.rel (%p184) target = $region16
      $region15: #{tpu_custom_call.1} parent=11 // pred_region
        _
      $region16: #{tpu_custom_call.1} parent=11 // pred_fallthru
        _
      // Predicated region
      $region17: #{tpu_custom_call.1} parent=11 // pred_check
        %p187 = pneg %p80
      $region18: #{tpu_custom_call.1} parent=11 // pred_check_branch
        %189 = sbr.rel (%p187) target = $region20
      $region19: #{tpu_custom_call.1} parent=11 // pred_region
        _
      $region20: #{tpu_custom_call.1} parent=11 // pred_fallthru
        _
      // Predicated region
      $region21: #{tpu_custom_call.1} parent=11 // pred_check
        %p190 = pneg %p101
      $region22: #{tpu_custom_call.1} parent=11 // pred_check_branch
        %192 = sbr.rel (%p190) target = $region24
      $region23: #{tpu_custom_call.1} parent=11 // pred_region
        _
      $region24: #{tpu_custom_call.1} parent=11 // pred_fallthru
        _
      // Predicated region
      $region25: #{tpu_custom_call.1} parent=11 // pred_check
        %p193 = pneg %p122
      $region26: #{tpu_custom_call.1} parent=11 // pred_check_branch
        %195 = sbr.rel (%p193) target = $region28
      $region27: #{tpu_custom_call.1} parent=11 // pred_region
        _
      $region28: #{tpu_custom_call.1} parent=11 // pred_fallthru
        _
      // Predicated region
      $region29: #{tpu_custom_call.1} parent=11 // pred_check
        %p196 = pneg %p143
      $region30: #{tpu_custom_call.1} parent=11 // pred_check_branch
        %198 = sbr.rel (%p196) target = $region32
      $region31: #{tpu_custom_call.1} parent=11 // pred_region
        _
      $region32: #{tpu_custom_call.1} parent=11 // pred_fallthru
        _
    $region12: #{tpu_custom_call.1} parent=5 // pred_fallthru
      _
    %p199 = scmp.lt.s32.totalorder %s12, 2
    // Predicated region
    $region33: #{tpu_custom_call.1} parent=5 // pred_check
      %p200 = pneg %p199
    $region34: #{tpu_custom_call.1} parent=5 // pred_check_branch
      %202 = sbr.rel (%p200) target = $region36
    $region35: #{tpu_custom_call.1} parent=5 // pred_region
      // Predicated region
      $region37: #{tpu_custom_call.1} parent=35 // pred_check
        %p203 = pneg %p32
      $region38: #{tpu_custom_call.1} parent=35 // pred_check_branch
        %205 = sbr.rel (%p203) target = $region40
      $region39: #{tpu_custom_call.1} parent=35 // pred_region
        %p206 = scmp.lt.s32.totalorder %s12, 1
        %s207 = scalar_select %p206, %s12, 1
        %s208 = smul.addr %s207, 32
        %s209 = smul.addr %s208, 8
        %s210 = scalar_lea.vmem %s0, %s209
      $region40: #{tpu_custom_call.1} parent=35 // pred_fallthru
        _
    $region36: #{tpu_custom_call.1} parent=5 // pred_fallthru
      _
    %p211 = scmp.le.s32.totalorder 1, %s12
    %p212 = scmp.lt.s32.totalorder %s12, 3
    %p213 = pnand %p211, %p212
    %p214 = pneg %p213
    // Predicated region
    $region41: #{tpu_custom_call.1} parent=5 // pred_check
      _
    $region42: #{tpu_custom_call.1} parent=5 // pred_check_branch
      %216 = sbr.rel (%p213) target = $region44
    $region43: #{tpu_custom_call.1} parent=5 // pred_region
      %s217 = ssub.s32 %s12, 1
      %p218 = scmp.lt.s32.totalorder %s17, 1
      %s219 = scalar_select %p218, %s17, 1
      %s220 = smul.addr %s219, 32
      %s221 = smul.addr %s220, 8
      %s222 = scalar_lea.vmem %s0, %s221
      %p223 = pneg %p38
      %p224 = pneg %p35
      %p225 = pneg %p59
      %p226 = pneg %p56
      %p227 = pneg %p80
      %p228 = pneg %p77
      %p229 = pneg %p101
      %p230 = pneg %p98
      %p231 = pneg %p122
      %p232 = pneg %p119
      %p233 = pneg %p143
      %p234 = pneg %p140
      %p235 = pneg %p169
      %p236 = pneg %p166
      %p237 = scmp.lt.s32.totalorder %s17, 1
      %s238 = scalar_select %p237, %s17, 1
      %s239 = smul.addr %s238, 32
      %s240 = smul.addr %s239, 8
      %s241 = scalar_lea.vmem %s6, %s240
      %p242 = scmp.lt.s32.totalorder %s17, 1
      %s243 = scalar_select %p242, %s17, 1
      %s244 = smul.addr %s243, 32
      %s245 = smul.addr %s244, 8
      %s246 = scalar_lea.vmem %s0, %s245
      %p247 = scmp.lt.s32.totalorder %s17, 1
      %s248 = scalar_select %p247, %s17, 1
      %s249 = smul.addr %s248, 32
      %s250 = smul.addr %s249, 8
      %s251 = scalar_lea.vmem %s6, %s250
      %v253 = vld [vmem:[%s246] sm:$0xff]
      %v254 = vld [vmem:[%s246 + $0x8] sm:$0xff]
      %v255 = vld [vmem:[%s246 + $0x10] sm:$0xff]
      %v256 = vld [vmem:[%s246 + $0x18] sm:$0xff]
      %v257 = vld [vmem:[%s246 + $0x20] sm:$0xff]
      %v258 = vld [vmem:[%s246 + $0x28] sm:$0xff]
      %v259 = vld [vmem:[%s246 + $0x30] sm:$0xff]
      %v260 = vld [vmem:[%s246 + $0x38] sm:$0xff]
      %v261 = vld [vmem:[%s246 + $0x40] sm:$0xff]
      %v262 = vld [vmem:[%s246 + $0x48] sm:$0xff]
      %v263 = vld [vmem:[%s246 + $0x50] sm:$0xff]
      %v264 = vld [vmem:[%s246 + $0x58] sm:$0xff]
      %v265 = vld [vmem:[%s246 + $0x60] sm:$0xff]
      %v266 = vld [vmem:[%s246 + $0x68] sm:$0xff]
      %v267 = vld [vmem:[%s246 + $0x70] sm:$0xff]
      %v268 = vld [vmem:[%s246 + $0x78] sm:$0xff]
      %v269 = vld [vmem:[%s246 + $0x80] sm:$0xff]
      %v270 = vld [vmem:[%s246 + $0x88] sm:$0xff]
      %v271 = vld [vmem:[%s246 + $0x90] sm:$0xff]
      %v272 = vld [vmem:[%s246 + $0x98] sm:$0xff]
      %v273 = vld [vmem:[%s246 + $0xa0] sm:$0xff]
      %v274 = vld [vmem:[%s246 + $0xa8] sm:$0xff]
      %v275 = vld [vmem:[%s246 + $0xb0] sm:$0xff]
      %v276 = vld [vmem:[%s246 + $0xb8] sm:$0xff]
      %v277 = vld [vmem:[%s246 + $0xc0] sm:$0xff]
      %v278 = vld [vmem:[%s246 + $0xc8] sm:$0xff]
      %v279 = vld [vmem:[%s246 + $0xd0] sm:$0xff]
      %v280 = vld [vmem:[%s246 + $0xd8] sm:$0xff]
      %v281 = vld [vmem:[%s246 + $0xe0] sm:$0xff]
      %v282 = vld [vmem:[%s246 + $0xe8] sm:$0xff]
      %v283 = vld [vmem:[%s246 + $0xf0] sm:$0xff]
      %v284 = vld [vmem:[%s246 + $0xf8] sm:$0xff]
      %v285 = vld [vmem:[%s1] sm:$0x1]
      %v287 = vlaneseq
      %v288 = vshrl.u32 %v287, 7
      %v289 = vsub.s32 0, %v288
      %v290 = vrot.slane %v285, %v289
      %v292 = vmul.f32 %v253, %v290
      %v293 = vmul.f32 %v254, %v290
      %v294 = vmul.f32 %v255, %v290
      %v295 = vmul.f32 %v256, %v290
      %v296 = vmul.f32 %v257, %v290
      %v297 = vmul.f32 %v258, %v290
      %v298 = vmul.f32 %v259, %v290
      %v299 = vmul.f32 %v260, %v290
      %v300 = vmul.f32 %v261, %v290
      %v301 = vmul.f32 %v262, %v290
      %v302 = vmul.f32 %v263, %v290
      %v303 = vmul.f32 %v264, %v290
      %v304 = vmul.f32 %v265, %v290
      %v305 = vmul.f32 %v266, %v290
      %v306 = vmul.f32 %v267, %v290
      %v307 = vmul.f32 %v268, %v290
      %v308 = vmul.f32 %v269, %v290
      %v309 = vmul.f32 %v270, %v290
      %v310 = vmul.f32 %v271, %v290
      %v311 = vmul.f32 %v272, %v290
      %v312 = vmul.f32 %v273, %v290
      %v313 = vmul.f32 %v274, %v290
      %v314 = vmul.f32 %v275, %v290
      %v315 = vmul.f32 %v276, %v290
      %v316 = vmul.f32 %v277, %v290
      %v317 = vmul.f32 %v278, %v290
      %v318 = vmul.f32 %v279, %v290
      %v319 = vmul.f32 %v280, %v290
      %v320 = vmul.f32 %v281, %v290
      %v321 = vmul.f32 %v282, %v290
      %v322 = vmul.f32 %v283, %v290
      %v323 = vmul.f32 %v284, %v290
      %v324 = vld [vmem:[%s2] sm:$0x1]
      %v326 = vlaneseq
      %v327 = vshrl.u32 %v326, 7
      %v328 = vsub.s32 0, %v327
      %v329 = vrot.slane %v324, %v328
      %v331 = vadd.f32 %v292, %v329
      %v332 = vadd.f32 %v293, %v329
      %v333 = vadd.f32 %v294, %v329
      %v334 = vadd.f32 %v295, %v329
      %v335 = vadd.f32 %v296, %v329
      %v336 = vadd.f32 %v297, %v329
      %v337 = vadd.f32 %v298, %v329
      %v338 = vadd.f32 %v299, %v329
      %v339 = vadd.f32 %v300, %v329
      %v340 = vadd.f32 %v301, %v329
      %v341 = vadd.f32 %v302, %v329
      %v342 = vadd.f32 %v303, %v329
      %v343 = vadd.f32 %v304, %v329
      %v344 = vadd.f32 %v305, %v329
      %v345 = vadd.f32 %v306, %v329
      %v346 = vadd.f32 %v307, %v329
      %v347 = vadd.f32 %v308, %v329
      %v348 = vadd.f32 %v309, %v329
      %v349 = vadd.f32 %v310, %v329
      %v350 = vadd.f32 %v311, %v329
      %v351 = vadd.f32 %v312, %v329
      %v352 = vadd.f32 %v313, %v329
      %v353 = vadd.f32 %v314, %v329
      %v354 = vadd.f32 %v315, %v329
      %v355 = vadd.f32 %v316, %v329
      %v356 = vadd.f32 %v317, %v329
      %v357 = vadd.f32 %v318, %v329
      %v358 = vadd.f32 %v319, %v329
      %v359 = vadd.f32 %v320, %v329
      %v360 = vadd.f32 %v321, %v329
      %v361 = vadd.f32 %v322, %v329
      %v362 = vadd.f32 %v323, %v329
      %v363 = vmax.f32 %v331, 0.0
      %v364 = vmax.f32 %v332, 0.0
      %v365 = vmax.f32 %v333, 0.0
      %v366 = vmax.f32 %v334, 0.0
      %v367 = vmax.f32 %v335, 0.0
      %v368 = vmax.f32 %v336, 0.0
      %v369 = vmax.f32 %v337, 0.0
      %v370 = vmax.f32 %v338, 0.0
      %v371 = vmax.f32 %v339, 0.0
      %v372 = vmax.f32 %v340, 0.0
      %v373 = vmax.f32 %v341, 0.0
      %v374 = vmax.f32 %v342, 0.0
      %v375 = vmax.f32 %v343, 0.0
      %v376 = vmax.f32 %v344, 0.0
      %v377 = vmax.f32 %v345, 0.0
      %v378 = vmax.f32 %v346, 0.0
      %v379 = vmax.f32 %v347, 0.0
      %v380 = vmax.f32 %v348, 0.0
      %v381 = vmax.f32 %v349, 0.0
      %v382 = vmax.f32 %v350, 0.0
      %v383 = vmax.f32 %v351, 0.0
      %v384 = vmax.f32 %v352, 0.0
      %v385 = vmax.f32 %v353, 0.0
      %v386 = vmax.f32 %v354, 0.0
      %v387 = vmax.f32 %v355, 0.0
      %v388 = vmax.f32 %v356, 0.0
      %v389 = vmax.f32 %v357, 0.0
      %v390 = vmax.f32 %v358, 0.0
      %v391 = vmax.f32 %v359, 0.0
      %v392 = vmax.f32 %v360, 0.0
      %v393 = vmax.f32 %v361, 0.0
      %v394 = vmax.f32 %v362, 0.0
      %v395 = vpack.c.bf16 %v364, %v363
      %v396 = vpack.c.bf16 %v366, %v365
      %v397 = vpack.c.bf16 %v368, %v367
      %v398 = vpack.c.bf16 %v370, %v369
      %v399 = vpack.c.bf16 %v372, %v371
      %v400 = vpack.c.bf16 %v374, %v373
      %v401 = vpack.c.bf16 %v376, %v375
      %v402 = vpack.c.bf16 %v378, %v377
      %v403 = vpack.c.bf16 %v380, %v379
      %v404 = vpack.c.bf16 %v382, %v381
      %v405 = vpack.c.bf16 %v384, %v383
      %v406 = vpack.c.bf16 %v386, %v385
      %v407 = vpack.c.bf16 %v388, %v387
      %v408 = vpack.c.bf16 %v390, %v389
      %v409 = vpack.c.bf16 %v392, %v391
      %v410 = vpack.c.bf16 %v394, %v393
      %v411 = vld [vmem:[%s3] sm:$0x3]
      %v412 = vld [vmem:[%s4] sm:$0x1]
      %v414 = vlaneseq
      %v415 = vshrl.u32 %v414, 7
      %v416 = vsub.s32 0, %v415
      %v417 = vrot.slane %v412, %v416
      %vm419 = vcmask 31744
      %v421 = vsel %vm419, %v395, 0
      %v424 = vsel %vm419, %v396, 0
      %v427 = vsel %vm419, %v397, 0
      %v430 = vsel %vm419, %v398, 0
      %v433 = vsel %vm419, %v399, 0
      %v436 = vsel %vm419, %v400, 0
      %v439 = vsel %vm419, %v401, 0
      %v442 = vsel %vm419, %v402, 0
      %v445 = vsel %vm419, %v403, 0
      %v448 = vsel %vm419, %v404, 0
      %v451 = vsel %vm419, %v405, 0
      %v454 = vsel %vm419, %v406, 0
      %v457 = vsel %vm419, %v407, 0
      %v460 = vsel %vm419, %v408, 0
      %v463 = vsel %vm419, %v409, 0
      %v466 = vsel %vm419, %v410, 0
      %vm468 = vcmask 1041408
      %v470 = vsel %vm468, %v411, 0
      %472 = vmatprep.subr.bf16.mxu0 0
      %473 = vmatpush1.bf16.msra.mxu0 0
      %474 = vmatprep.subr.bf16.mxu0 0
      %475 = vmatpush1.bf16.msra.mxu0 0
      %476 = vmatprep.subr.bf16.mxu0 0
      %477 = vmatpush1.bf16.msra.mxu0 0
      %478 = vmatprep.subr.bf16.mxu0 0
      %479 = vmatpush1.bf16.msra.mxu0 0
      %480 = vmatprep.subr.bf16.mxu0 0
      %481 = vmatpush1.bf16.msra.mxu0 0
      %482 = vmatprep.subr.bf16.mxu0 0
      %483 = vmatpush1.bf16.msra.mxu0 0
      %484 = vmatprep.subr.bf16.mxu0 0
      %485 = vmatpush1.bf16.msra.mxu0 0
      %486 = vmatprep.subr.bf16.mxu0 0
      %487 = vmatpush1.bf16.msra.mxu0 %v470
      %488 = vmatprep.subr.bf16.mxu0 0
      %489 = vmatpush2.bf16.msra.mxu0 0
      %490 = vmatprep.subr.bf16.mxu0 0
      %491 = vmatpush2.bf16.msra.mxu0 0
      %492 = vmatprep.subr.bf16.mxu0 0
      %493 = vmatpush2.bf16.msra.mxu0 0
      %494 = vmatprep.subr.bf16.mxu0 0
      %495 = vmatpush2.bf16.msra.mxu0 0
      %496 = vmatprep.subr.bf16.mxu0 0
      %497 = vmatpush2.bf16.msra.mxu0 0
      %498 = vmatprep.subr.bf16.mxu0 0
      %499 = vmatpush2.bf16.msra.mxu0 0
      %500 = vmatprep.subr.bf16.mxu0 0
      %501 = vmatpush2.bf16.msra.mxu0 0
      %502 = vmatprep.subr.bf16.mxu0 0
      %503 = vmatpush2.bf16.msra.mxu0 0
      %504 = vmatprep.mubr.bf16.mxu0 0
      %505 = vmatmul.mubr.bf16.gmra.mxu0 %v421
      %v506 = vpop.f32.mrf.mxu0
      %v507 = vadd.f32 %v417, %v506
      %v508 = vpop.f32.mrf.mxu0
      %v509 = vpop.f32.mrf.mxu0
      %v510 = vadd.f32 %v417, %v509
      %v511 = vpop.f32.mrf.mxu0
      %512 = vmatprep.mubr.bf16.mxu0 0
      %513 = vmatmul.mubr.bf16.gmra.mxu0 %v424
      %v514 = vpop.f32.mrf.mxu0
      %v515 = vadd.f32 %v417, %v514
      %v516 = vpop.f32.mrf.mxu0
      %v517 = vpop.f32.mrf.mxu0
      %v518 = vadd.f32 %v417, %v517
      %v519 = vpop.f32.mrf.mxu0
      %520 = vmatprep.mubr.bf16.mxu0 0
      %521 = vmatmul.mubr.bf16.gmra.mxu0 %v427
      %v522 = vpop.f32.mrf.mxu0
      %v523 = vadd.f32 %v417, %v522
      %v524 = vpop.f32.mrf.mxu0
      %v525 = vpop.f32.mrf.mxu0
      %v526 = vadd.f32 %v417, %v525
      %v527 = vpop.f32.mrf.mxu0
      %528 = vmatprep.mubr.bf16.mxu0 0
      %529 = vmatmul.mubr.bf16.gmra.mxu0 %v430
      %v530 = vpop.f32.mrf.mxu0
      %v531 = vadd.f32 %v417, %v530
      %v532 = vpop.f32.mrf.mxu0
      %v533 = vpop.f32.mrf.mxu0
      %v534 = vadd.f32 %v417, %v533
      %v535 = vpop.f32.mrf.mxu0
      %536 = vmatprep.mubr.bf16.mxu0 0
      %537 = vmatmul.mubr.bf16.gmra.mxu0 %v433
      %v538 = vpop.f32.mrf.mxu0
      %v539 = vadd.f32 %v417, %v538
      %v540 = vpop.f32.mrf.mxu0
      %v541 = vpop.f32.mrf.mxu0
      %v542 = vadd.f32 %v417, %v541
      %v543 = vpop.f32.mrf.mxu0
      %544 = vmatprep.mubr.bf16.mxu0 0
      %545 = vmatmul.mubr.bf16.gmra.mxu0 %v436
      %v546 = vpop.f32.mrf.mxu0
      %v547 = vadd.f32 %v417, %v546
      %v548 = vpop.f32.mrf.mxu0
      %v549 = vpop.f32.mrf.mxu0
      %v550 = vadd.f32 %v417, %v549
      %v551 = vpop.f32.mrf.mxu0
      %552 = vmatprep.mubr.bf16.mxu0 0
      %553 = vmatmul.mubr.bf16.gmra.mxu0 %v439
      %v554 = vpop.f32.mrf.mxu0
      %v555 = vadd.f32 %v417, %v554
      %v556 = vpop.f32.mrf.mxu0
      %v557 = vpop.f32.mrf.mxu0
      %v558 = vadd.f32 %v417, %v557
      %v559 = vpop.f32.mrf.mxu0
      %560 = vmatprep.mubr.bf16.mxu0 0
      %561 = vmatmul.mubr.bf16.gmra.mxu0 %v442
      %v562 = vpop.f32.mrf.mxu0
      %v563 = vadd.f32 %v417, %v562
      %v564 = vpop.f32.mrf.mxu0
      %v565 = vpop.f32.mrf.mxu0
      %v566 = vadd.f32 %v417, %v565
      %v567 = vpop.f32.mrf.mxu0
      %568 = vmatprep.mubr.bf16.mxu0 0
      %569 = vmatmul.mubr.bf16.gmra.mxu0 %v445
      %v570 = vpop.f32.mrf.mxu0
      %v571 = vadd.f32 %v417, %v570
      %v572 = vpop.f32.mrf.mxu0
      %v573 = vpop.f32.mrf.mxu0
      %v574 = vadd.f32 %v417, %v573
      %v575 = vpop.f32.mrf.mxu0
      %576 = vmatprep.mubr.bf16.mxu0 0
      %577 = vmatmul.mubr.bf16.gmra.mxu0 %v448
      %v578 = vpop.f32.mrf.mxu0
      %v579 = vadd.f32 %v417, %v578
      %v580 = vpop.f32.mrf.mxu0
      %v581 = vpop.f32.mrf.mxu0
      %v582 = vadd.f32 %v417, %v581
      %v583 = vpop.f32.mrf.mxu0
      %584 = vmatprep.mubr.bf16.mxu0 0
      %585 = vmatmul.mubr.bf16.gmra.mxu0 %v451
      %v586 = vpop.f32.mrf.mxu0
      %v587 = vadd.f32 %v417, %v586
      %v588 = vpop.f32.mrf.mxu0
      %v589 = vpop.f32.mrf.mxu0
      %v590 = vadd.f32 %v417, %v589
      %v591 = vpop.f32.mrf.mxu0
      %592 = vmatprep.mubr.bf16.mxu0 0
      %593 = vmatmul.mubr.bf16.gmra.mxu0 %v454
      %v594 = vpop.f32.mrf.mxu0
      %v595 = vadd.f32 %v417, %v594
      %v596 = vpop.f32.mrf.mxu0
      %v597 = vpop.f32.mrf.mxu0
      %v598 = vadd.f32 %v417, %v597
      %v599 = vpop.f32.mrf.mxu0
      %600 = vmatprep.mubr.bf16.mxu0 0
      %601 = vmatmul.mubr.bf16.gmra.mxu0 %v457
      %v602 = vpop.f32.mrf.mxu0
      %v603 = vadd.f32 %v417, %v602
      %v604 = vpop.f32.mrf.mxu0
      %v605 = vpop.f32.mrf.mxu0
      %v606 = vadd.f32 %v417, %v605
      %v607 = vpop.f32.mrf.mxu0
      %608 = vmatprep.mubr.bf16.mxu0 0
      %609 = vmatmul.mubr.bf16.gmra.mxu0 %v460
      %v610 = vpop.f32.mrf.mxu0
      %v611 = vadd.f32 %v417, %v610
      %v612 = vpop.f32.mrf.mxu0
      %v613 = vpop.f32.mrf.mxu0
      %v614 = vadd.f32 %v417, %v613
      %v615 = vpop.f32.mrf.mxu0
      %616 = vmatprep.mubr.bf16.mxu0 0
      %617 = vmatmul.mubr.bf16.gmra.mxu0 %v463
      %v618 = vpop.f32.mrf.mxu0
      %v619 = vadd.f32 %v417, %v618
      %v620 = vpop.f32.mrf.mxu0
      %v621 = vpop.f32.mrf.mxu0
      %v622 = vadd.f32 %v417, %v621
      %v623 = vpop.f32.mrf.mxu0
      %624 = vmatprep.mubr.bf16.mxu0 0
      %625 = vmatmul.mubr.bf16.gmra.mxu0 %v466
      %v626 = vpop.f32.mrf.mxu0
      %v627 = vadd.f32 %v417, %v626
      %v628 = vpop.f32.mrf.mxu0
      %v629 = vpop.f32.mrf.mxu0
      %v630 = vadd.f32 %v417, %v629
      %v631 = vpop.f32.mrf.mxu0
      %632 = vdwg.mxu0
      %v633 = vmax.f32 %v507, 0.0
      %v634 = vmax.f32 %v510, 0.0
      %v635 = vmax.f32 %v515, 0.0
      %v636 = vmax.f32 %v518, 0.0
      %v637 = vmax.f32 %v523, 0.0
      %v638 = vmax.f32 %v526, 0.0
      %v639 = vmax.f32 %v531, 0.0
      %v640 = vmax.f32 %v534, 0.0
      %v641 = vmax.f32 %v539, 0.0
      %v642 = vmax.f32 %v542, 0.0
      %v643 = vmax.f32 %v547, 0.0
      %v644 = vmax.f32 %v550, 0.0
      %v645 = vmax.f32 %v555, 0.0
      %v646 = vmax.f32 %v558, 0.0
      %v647 = vmax.f32 %v563, 0.0
      %v648 = vmax.f32 %v566, 0.0
      %v649 = vmax.f32 %v571, 0.0
      %v650 = vmax.f32 %v574, 0.0
      %v651 = vmax.f32 %v579, 0.0
      %v652 = vmax.f32 %v582, 0.0
      %v653 = vmax.f32 %v587, 0.0
      %v654 = vmax.f32 %v590, 0.0
      %v655 = vmax.f32 %v595, 0.0
      %v656 = vmax.f32 %v598, 0.0
      %v657 = vmax.f32 %v603, 0.0
      %v658 = vmax.f32 %v606, 0.0
      %v659 = vmax.f32 %v611, 0.0
      %v660 = vmax.f32 %v614, 0.0
      %v661 = vmax.f32 %v619, 0.0
      %v662 = vmax.f32 %v622, 0.0
      %v663 = vmax.f32 %v627, 0.0
      %v664 = vmax.f32 %v630, 0.0
      %665 = vst.msk [vmem:[%s251] sm:$0xff] %vm419, %v253
      %666 = vst.msk [vmem:[%s251 + $0x8] sm:$0xff] %vm419, %v254
      %667 = vst.msk [vmem:[%s251 + $0x10] sm:$0xff] %vm419, %v255
      %668 = vst.msk [vmem:[%s251 + $0x18] sm:$0xff] %vm419, %v256
      %669 = vst.msk [vmem:[%s251 + $0x20] sm:$0xff] %vm419, %v257
      %670 = vst.msk [vmem:[%s251 + $0x28] sm:$0xff] %vm419, %v258
      %671 = vst.msk [vmem:[%s251 + $0x30] sm:$0xff] %vm419, %v259
      %672 = vst.msk [vmem:[%s251 + $0x38] sm:$0xff] %vm419, %v260
      %673 = vst.msk [vmem:[%s251 + $0x40] sm:$0xff] %vm419, %v261
      %674 = vst.msk [vmem:[%s251 + $0x48] sm:$0xff] %vm419, %v262
      %675 = vst.msk [vmem:[%s251 + $0x50] sm:$0xff] %vm419, %v263
      %676 = vst.msk [vmem:[%s251 + $0x58] sm:$0xff] %vm419, %v264
      %677 = vst.msk [vmem:[%s251 + $0x60] sm:$0xff] %vm419, %v265
      %678 = vst.msk [vmem:[%s251 + $0x68] sm:$0xff] %vm419, %v266
      %679 = vst.msk [vmem:[%s251 + $0x70] sm:$0xff] %vm419, %v267
      %680 = vst.msk [vmem:[%s251 + $0x78] sm:$0xff] %vm419, %v268
      %681 = vst.msk [vmem:[%s251 + $0x80] sm:$0xff] %vm419, %v269
      %682 = vst.msk [vmem:[%s251 + $0x88] sm:$0xff] %vm419, %v270
      %683 = vst.msk [vmem:[%s251 + $0x90] sm:$0xff] %vm419, %v271
      %684 = vst.msk [vmem:[%s251 + $0x98] sm:$0xff] %vm419, %v272
      %685 = vst.msk [vmem:[%s251 + $0xa0] sm:$0xff] %vm419, %v273
      %686 = vst.msk [vmem:[%s251 + $0xa8] sm:$0xff] %vm419, %v274
      %687 = vst.msk [vmem:[%s251 + $0xb0] sm:$0xff] %vm419, %v275
      %688 = vst.msk [vmem:[%s251 + $0xb8] sm:$0xff] %vm419, %v276
      %689 = vst.msk [vmem:[%s251 + $0xc0] sm:$0xff] %vm419, %v277
      %690 = vst.msk [vmem:[%s251 + $0xc8] sm:$0xff] %vm419, %v278
      %691 = vst.msk [vmem:[%s251 + $0xd0] sm:$0xff] %vm419, %v279
      %692 = vst.msk [vmem:[%s251 + $0xd8] sm:$0xff] %vm419, %v280
      %693 = vst.msk [vmem:[%s251 + $0xe0] sm:$0xff] %vm419, %v281
      %694 = vst.msk [vmem:[%s251 + $0xe8] sm:$0xff] %vm419, %v282
      %695 = vst.msk [vmem:[%s251 + $0xf0] sm:$0xff] %vm419, %v283
      %696 = vst.msk [vmem:[%s251 + $0xf8] sm:$0xff] %vm419, %v284
      %vm697 = vcmask 261120
      %698 = vst.msk [vmem:[#allocation2] sm:$0xff] %vm697, 0.0
      %699 = vst.msk [vmem:[#allocation2 + $0x8] sm:$0xff] %vm697, 0.0
      %vm700 = vcmask 254976
      %701 = vst.msk [vmem:[#allocation2 + $0x10] sm:$0x3] %vm700, 0.0
      %s702 = scalar_lea.vmem [#allocation2], 408
      %703 = vst.msk [vmem:[%s702] sm:$0xff] %vm697, 0.0
      %704 = vst.msk [vmem:[%s702 + $0x8] sm:$0xff] %vm697, 0.0
      %705 = vst.msk [vmem:[%s702 + $0x10] sm:$0x3] %vm700, 0.0
      %s706 = scalar_lea.vmem [#allocation2], 24
      %vm707 = vcmask 253952
      %708 = vst.msk [vmem:[%s706] sm:$0x1] %vm707, 0.0
      %709 = vst.msk [vmem:[%s706 + $0x18] sm:$0x1] %vm707, 0.0
      %710 = vst.msk [vmem:[%s706 + $0x30] sm:$0x1] %vm707, 0.0
      %711 = vst.msk [vmem:[%s706 + $0x48] sm:$0x1] %vm707, 0.0
      %712 = vst.msk [vmem:[%s706 + $0x60] sm:$0x1] %vm707, 0.0
      %713 = vst.msk [vmem:[%s706 + $0x78] sm:$0x1] %vm707, 0.0
      %714 = vst.msk [vmem:[%s706 + $0x90] sm:$0x1] %vm707, 0.0
      %715 = vst.msk [vmem:[%s706 + $0xa8] sm:$0x1] %vm707, 0.0
      %716 = vst.msk [vmem:[%s706 + $0xc0] sm:$0x1] %vm707, 0.0
      %717 = vst.msk [vmem:[%s706 + $0xd8] sm:$0x1] %vm707, 0.0
      %718 = vst.msk [vmem:[%s706 + $0xf0] sm:$0x1] %vm707, 0.0
      %719 = vst.msk [vmem:[%s706 + $0x108] sm:$0x1] %vm707, 0.0
      %720 = vst.msk [vmem:[%s706 + $0x120] sm:$0x1] %vm707, 0.0
      %721 = vst.msk [vmem:[%s706 + $0x138] sm:$0x1] %vm707, 0.0
      %722 = vst.msk [vmem:[%s706 + $0x150] sm:$0x1] %vm707, 0.0
      %723 = vst.msk [vmem:[%s706 + $0x168] sm:$0x1] %vm707, 0.0
      %724 = vst.msk [vmem:[%s706 + $0x11] sm:$0x1] %vm707, 0.0
      %725 = vst.msk [vmem:[%s706 + $0x29] sm:$0x1] %vm707, 0.0
      %726 = vst.msk [vmem:[%s706 + $0x41] sm:$0x1] %vm707, 0.0
      %727 = vst.msk [vmem:[%s706 + $0x59] sm:$0x1] %vm707, 0.0
      %728 = vst.msk [vmem:[%s706 + $0x71] sm:$0x1] %vm707, 0.0
      %729 = vst.msk [vmem:[%s706 + $0x89] sm:$0x1] %vm707, 0.0
      %730 = vst.msk [vmem:[%s706 + $0xa1] sm:$0x1] %vm707, 0.0
      %731 = vst.msk [vmem:[%s706 + $0xb9] sm:$0x1] %vm707, 0.0
      %732 = vst.msk [vmem:[%s706 + $0xd1] sm:$0x1] %vm707, 0.0
      %733 = vst.msk [vmem:[%s706 + $0xe9] sm:$0x1] %vm707, 0.0
      %734 = vst.msk [vmem:[%s706 + $0x101] sm:$0x1] %vm707, 0.0
      %735 = vst.msk [vmem:[%s706 + $0x119] sm:$0x1] %vm707, 0.0
      %736 = vst.msk [vmem:[%s706 + $0x131] sm:$0x1] %vm707, 0.0
      %737 = vst.msk [vmem:[%s706 + $0x149] sm:$0x1] %vm707, 0.0
      %738 = vst.msk [vmem:[%s706 + $0x161] sm:$0x1] %vm707, 0.0
      %739 = vst.msk [vmem:[%s706 + $0x179] sm:$0x1] %vm707, 0.0
      %740 = vst.msk [vmem:[%s706 + $0x1] sm:$0xff] %vm697, %v633
      %741 = vst.msk [vmem:[%s706 + $0x9] sm:$0xff] %vm697, %v634
      %742 = vst.msk [vmem:[%s706 + $0x19] sm:$0xff] %vm697, %v635
      %743 = vst.msk [vmem:[%s706 + $0x21] sm:$0xff] %vm697, %v636
      %744 = vst.msk [vmem:[%s706 + $0x31] sm:$0xff] %vm697, %v637
      %745 = vst.msk [vmem:[%s706 + $0x39] sm:$0xff] %vm697, %v638
      %746 = vst.msk [vmem:[%s706 + $0x49] sm:$0xff] %vm697, %v639
      %747 = vst.msk [vmem:[%s706 + $0x51] sm:$0xff] %vm697, %v640
      %748 = vst.msk [vmem:[%s706 + $0x61] sm:$0xff] %vm697, %v641
      %749 = vst.msk [vmem:[%s706 + $0x69] sm:$0xff] %vm697, %v642
      %750 = vst.msk [vmem:[%s706 + $0x79] sm:$0xff] %vm697, %v643
      %751 = vst.msk [vmem:[%s706 + $0x81] sm:$0xff] %vm697, %v644
      %752 = vst.msk [vmem:[%s706 + $0x91] sm:$0xff] %vm697, %v645
      %753 = vst.msk [vmem:[%s706 + $0x99] sm:$0xff] %vm697, %v646
      %754 = vst.msk [vmem:[%s706 + $0xa9] sm:$0xff] %vm697, %v647
      %755 = vst.msk [vmem:[%s706 + $0xb1] sm:$0xff] %vm697, %v648
      %756 = vst.msk [vmem:[%s706 + $0xc1] sm:$0xff] %vm697, %v649
      %757 = vst.msk [vmem:[%s706 + $0xc9] sm:$0xff] %vm697, %v650
      %758 = vst.msk [vmem:[%s706 + $0xd9] sm:$0xff] %vm697, %v651
      %759 = vst.msk [vmem:[%s706 + $0xe1] sm:$0xff] %vm697, %v652
      %760 = vst.msk [vmem:[%s706 + $0xf1] sm:$0xff] %vm697, %v653
      %761 = vst.msk [vmem:[%s706 + $0xf9] sm:$0xff] %vm697, %v654
      %762 = vst.msk [vmem:[%s706 + $0x109] sm:$0xff] %vm697, %v655
      %763 = vst.msk [vmem:[%s706 + $0x111] sm:$0xff] %vm697, %v656
      %764 = vst.msk [vmem:[%s706 + $0x121] sm:$0xff] %vm697, %v657
      %765 = vst.msk [vmem:[%s706 + $0x129] sm:$0xff] %vm697, %v658
      %766 = vst.msk [vmem:[%s706 + $0x139] sm:$0xff] %vm697, %v659
      %767 = vst.msk [vmem:[%s706 + $0x141] sm:$0xff] %vm697, %v660
      %768 = vst.msk [vmem:[%s706 + $0x151] sm:$0xff] %vm697, %v661
      %769 = vst.msk [vmem:[%s706 + $0x159] sm:$0xff] %vm697, %v662
      %770 = vst.msk [vmem:[%s706 + $0x169] sm:$0xff] %vm697, %v663
      %771 = vst.msk [vmem:[%s706 + $0x171] sm:$0xff] %vm697, %v664
      %v772 = vld [vmem:[#allocation2] sm:$0xff]
      %v773 = vld [vmem:[#allocation2 + $0x8] sm:$0xff]
      %v774 = vld [vmem:[#allocation2 + $0x18] sm:$0xff]
      %v775 = vld [vmem:[#allocation2 + $0x20] sm:$0xff]
      %v776 = vld [vmem:[#allocation2 + $0x30] sm:$0xff]
      %v777 = vld [vmem:[#allocation2 + $0x38] sm:$0xff]
      %v778 = vld [vmem:[#allocation2 + $0x48] sm:$0xff]
      %v779 = vld [vmem:[#allocation2 + $0x50] sm:$0xff]
      %v780 = vld [vmem:[#allocation2 + $0x60] sm:$0xff]
      %v781 = vld [vmem:[#allocation2 + $0x68] sm:$0xff]
      %v782 = vld [vmem:[#allocation2 + $0x78] sm:$0xff]
      %v783 = vld [vmem:[#allocation2 + $0x80] sm:$0xff]
      %v784 = vld [vmem:[#allocation2 + $0x90] sm:$0xff]
      %v785 = vld [vmem:[#allocation2 + $0x98] sm:$0xff]
      %v786 = vld [vmem:[#allocation2 + $0xa8] sm:$0xff]
      %v787 = vld [vmem:[#allocation2 + $0xb0] sm:$0xff]
      %v788 = vld [vmem:[#allocation2 + $0xc0] sm:$0xff]
      %v789 = vld [vmem:[#allocation2 + $0xc8] sm:$0xff]
      %v790 = vld [vmem:[#allocation2 + $0xd8] sm:$0xff]
      %v791 = vld [vmem:[#allocation2 + $0xe0] sm:$0xff]
      %v792 = vld [vmem:[#allocation2 + $0xf0] sm:$0xff]
      %v793 = vld [vmem:[#allocation2 + $0xf8] sm:$0xff]
      %v794 = vld [vmem:[#allocation2 + $0x108] sm:$0xff]
      %v795 = vld [vmem:[#allocation2 + $0x110] sm:$0xff]
      %v796 = vld [vmem:[#allocation2 + $0x120] sm:$0xff]
      %v797 = vld [vmem:[#allocation2 + $0x128] sm:$0xff]
      %v798 = vld [vmem:[#allocation2 + $0x138] sm:$0xff]
      %v799 = vld [vmem:[#allocation2 + $0x140] sm:$0xff]
      %v800 = vld [vmem:[#allocation2 + $0x150] sm:$0xff]
      %v801 = vld [vmem:[#allocation2 + $0x158] sm:$0xff]
      %v802 = vld [vmem:[#allocation2 + $0x168] sm:$0xff]
      %v803 = vld [vmem:[#allocation2 + $0x170] sm:$0xff]
      %v804 = vpack.c.bf16 %v773, %v772
      %v805 = vpack.c.bf16 %v775, %v774
      %v806 = vpack.c.bf16 %v777, %v776
      %v807 = vpack.c.bf16 %v779, %v778
      %v808 = vpack.c.bf16 %v781, %v780
      %v809 = vpack.c.bf16 %v783, %v782
      %v810 = vpack.c.bf16 %v785, %v784
      %v811 = vpack.c.bf16 %v787, %v786
      %v812 = vpack.c.bf16 %v789, %v788
      %v813 = vpack.c.bf16 %v791, %v790
      %v814 = vpack.c.bf16 %v793, %v792
      %v815 = vpack.c.bf16 %v795, %v794
      %v816 = vpack.c.bf16 %v797, %v796
      %v817 = vpack.c.bf16 %v799, %v798
      %v818 = vpack.c.bf16 %v801, %v800
      %v819 = vpack.c.bf16 %v803, %v802
      %v820 = vld [vmem:[%s5] sm:$0xf]
      %v821 = vld [vmem:[%s5 + $0x4] sm:$0xf]
      %v822 = vld [vmem:[%s5 + $0x8] sm:$0xf]
      %v823 = vld [vmem:[%s5 + $0xc] sm:$0xf]
      %v824 = vld [vmem:[#allocation2 + $0x1] sm:$0xff]
      %v825 = vld [vmem:[#allocation2 + $0x9] sm:$0xff]
      %v826 = vld [vmem:[#allocation2 + $0x19] sm:$0xff]
      %v827 = vld [vmem:[#allocation2 + $0x21] sm:$0xff]
      %v828 = vld [vmem:[#allocation2 + $0x31] sm:$0xff]
      %v829 = vld [vmem:[#allocation2 + $0x39] sm:$0xff]
      %v830 = vld [vmem:[#allocation2 + $0x49] sm:$0xff]
      %v831 = vld [vmem:[#allocation2 + $0x51] sm:$0xff]
      %v832 = vld [vmem:[#allocation2 + $0x61] sm:$0xff]
      %v833 = vld [vmem:[#allocation2 + $0x69] sm:$0xff]
      %v834 = vld [vmem:[#allocation2 + $0x79] sm:$0xff]
      %v835 = vld [vmem:[#allocation2 + $0x81] sm:$0xff]
      %v836 = vld [vmem:[#allocation2 + $0x91] sm:$0xff]
      %v837 = vld [vmem:[#allocation2 + $0x99] sm:$0xff]
      %v838 = vld [vmem:[#allocation2 + $0xa9] sm:$0xff]
      %v839 = vld [vmem:[#allocation2 + $0xb1] sm:$0xff]
      %v840 = vld [vmem:[#allocation2 + $0xc1] sm:$0xff]
      %v841 = vld [vmem:[#allocation2 + $0xc9] sm:$0xff]
      %v842 = vld [vmem:[#allocation2 + $0xd9] sm:$0xff]
      %v843 = vld [vmem:[#allocation2 + $0xe1] sm:$0xff]
      %v844 = vld [vmem:[#allocation2 + $0xf1] sm:$0xff]
      %v845 = vld [vmem:[#allocation2 + $0xf9] sm:$0xff]
      %v846 = vld [vmem:[#allocation2 + $0x109] sm:$0xff]
      %v847 = vld [vmem:[#allocation2 + $0x111] sm:$0xff]
      %v848 = vld [vmem:[#allocation2 + $0x121] sm:$0xff]
      %v849 = vld [vmem:[#allocation2 + $0x129] sm:$0xff]
      %v850 = vld [vmem:[#allocation2 + $0x139] sm:$0xff]
      %v851 = vld [vmem:[#allocation2 + $0x141] sm:$0xff]
      %v852 = vld [vmem:[#allocation2 + $0x151] sm:$0xff]
      %v853 = vld [vmem:[#allocation2 + $0x159] sm:$0xff]
      %v854 = vld [vmem:[#allocation2 + $0x169] sm:$0xff]
      %v855 = vld [vmem:[#allocation2 + $0x171] sm:$0xff]
      %v856 = vpack.c.bf16 %v825, %v824
      %v857 = vpack.c.bf16 %v827, %v826
      %v858 = vpack.c.bf16 %v829, %v828
      %v859 = vpack.c.bf16 %v831, %v830
      %v860 = vpack.c.bf16 %v833, %v832
      %v861 = vpack.c.bf16 %v835, %v834
      %v862 = vpack.c.bf16 %v837, %v836
      %v863 = vpack.c.bf16 %v839, %v838
      %v864 = vpack.c.bf16 %v841, %v840
      %v865 = vpack.c.bf16 %v843, %v842
      %v866 = vpack.c.bf16 %v845, %v844
      %v867 = vpack.c.bf16 %v847, %v846
      %v868 = vpack.c.bf16 %v849, %v848
      %v869 = vpack.c.bf16 %v851, %v850
      %v870 = vpack.c.bf16 %v853, %v852
      %v871 = vpack.c.bf16 %v855, %v854
      %s872 = scalar_lea.vmem %s5, 16
      %v873 = vld [vmem:[%s872] sm:$0xf]
      %v874 = vld [vmem:[%s872 + $0x4] sm:$0xf]
      %v875 = vld [vmem:[%s872 + $0x8] sm:$0xf]
      %v876 = vld [vmem:[%s872 + $0xc] sm:$0xf]
      %v881 = vunpack.c.l.b16 %v873
      %v882 = vunpack.c.l.b16 %v874
      %v883 = vunpack.c.l.b16 %v875
      %v884 = vunpack.c.l.b16 %v876
      %v885 = vpack.c.b16 %v882, %v881
      %v886 = vpack.c.b16 %v884, %v883
      %v890 = vsel %vm697, %v856, 0
      %v893 = vsel %vm697, %v857, 0
      %v896 = vsel %vm697, %v858, 0
      %v899 = vsel %vm697, %v859, 0
      %v902 = vsel %vm697, %v860, 0
      %v905 = vsel %vm697, %v861, 0
      %v908 = vsel %vm697, %v862, 0
      %v911 = vsel %vm697, %v863, 0
      %v914 = vsel %vm697, %v864, 0
      %v917 = vsel %vm697, %v865, 0
      %v920 = vsel %vm697, %v866, 0
      %v923 = vsel %vm697, %v867, 0
      %v926 = vsel %vm697, %v868, 0
      %v929 = vsel %vm697, %v869, 0
      %v932 = vsel %vm697, %v870, 0
      %v935 = vsel %vm697, %v871, 0
      %937 = vmatprep.subr.bf16.mxu0 0
      %938 = vmatpush1.bf16.msra.mxu0 0
      %939 = vmatprep.subr.bf16.mxu0 0
      %940 = vmatpush1.bf16.msra.mxu0 0
      %941 = vmatprep.subr.bf16.mxu0 0
      %942 = vmatpush1.bf16.msra.mxu0 0
      %943 = vmatprep.subr.bf16.mxu0 0
      %944 = vmatpush1.bf16.msra.mxu0 0
      %945 = vmatprep.subr.bf16.mxu0 0
      %946 = vmatpush1.bf16.msra.mxu0 0
      %947 = vmatprep.subr.bf16.mxu0 0
      %948 = vmatpush1.bf16.msra.mxu0 0
      %949 = vmatprep.subr.bf16.mxu0 0
      %950 = vmatpush1.bf16.msra.mxu0 %v886
      %951 = vmatprep.subr.bf16.mxu0 0
      %952 = vmatpush1.bf16.msra.mxu0 %v885
      %953 = vmatprep.subr.bf16.mxu0 0
      %954 = vmatpush2.bf16.msra.mxu0 0
      %955 = vmatprep.subr.bf16.mxu0 0
      %956 = vmatpush2.bf16.msra.mxu0 0
      %957 = vmatprep.subr.bf16.mxu0 0
      %958 = vmatpush2.bf16.msra.mxu0 0
      %959 = vmatprep.subr.bf16.mxu0 0
      %960 = vmatpush2.bf16.msra.mxu0 0
      %961 = vmatprep.subr.bf16.mxu0 0
      %962 = vmatpush2.bf16.msra.mxu0 0
      %963 = vmatprep.subr.bf16.mxu0 0
      %964 = vmatpush2.bf16.msra.mxu0 0
      %965 = vmatprep.subr.bf16.mxu0 0
      %966 = vmatpush2.bf16.msra.mxu0 0
      %967 = vmatprep.subr.bf16.mxu0 0
      %968 = vmatpush2.bf16.msra.mxu0 0
      %969 = vmatprep.mubr.bf16.mxu0 0
      %970 = vmatmul.mubr.bf16.gmra.mxu0 %v890
      %v971 = vpop.f32.mrf.mxu0
      %v972 = vadd.f32 0.0, %v971
      %v973 = vpop.f32.mrf.mxu0
      %v974 = vpop.f32.mrf.mxu0
      %v975 = vadd.f32 0.0, %v974
      %v976 = vpop.f32.mrf.mxu0
      %977 = vmatprep.mubr.bf16.mxu0 0
      %978 = vmatmul.mubr.bf16.gmra.mxu0 %v893
      %v979 = vpop.f32.mrf.mxu0
      %v980 = vadd.f32 0.0, %v979
      %v981 = vpop.f32.mrf.mxu0
      %v982 = vpop.f32.mrf.mxu0
      %v983 = vadd.f32 0.0, %v982
      %v984 = vpop.f32.mrf.mxu0
      %985 = vmatprep.mubr.bf16.mxu0 0
      %986 = vmatmul.mubr.bf16.gmra.mxu0 %v896
      %v987 = vpop.f32.mrf.mxu0
      %v988 = vadd.f32 0.0, %v987
      %v989 = vpop.f32.mrf.mxu0
      %v990 = vpop.f32.mrf.mxu0
      %v991 = vadd.f32 0.0, %v990
      %v992 = vpop.f32.mrf.mxu0
      %993 = vmatprep.mubr.bf16.mxu0 0
      %994 = vmatmul.mubr.bf16.gmra.mxu0 %v899
      %v995 = vpop.f32.mrf.mxu0
      %v996 = vadd.f32 0.0, %v995
      %v997 = vpop.f32.mrf.mxu0
      %v998 = vpop.f32.mrf.mxu0
      %v999 = vadd.f32 0.0, %v998
      %v1000 = vpop.f32.mrf.mxu0
      %1001 = vmatprep.mubr.bf16.mxu0 0
      %1002 = vmatmul.mubr.bf16.gmra.mxu0 %v902
      %v1003 = vpop.f32.mrf.mxu0
      %v1004 = vadd.f32 0.0, %v1003
      %v1005 = vpop.f32.mrf.mxu0
      %v1006 = vpop.f32.mrf.mxu0
      %v1007 = vadd.f32 0.0, %v1006
      %v1008 = vpop.f32.mrf.mxu0
      %1009 = vmatprep.mubr.bf16.mxu0 0
      %1010 = vmatmul.mubr.bf16.gmra.mxu0 %v905
      %v1011 = vpop.f32.mrf.mxu0
      %v1012 = vadd.f32 0.0, %v1011
      %v1013 = vpop.f32.mrf.mxu0
      %v1014 = vpop.f32.mrf.mxu0
      %v1015 = vadd.f32 0.0, %v1014
      %v1016 = vpop.f32.mrf.mxu0
      %1017 = vmatprep.mubr.bf16.mxu0 0
      %1018 = vmatmul.mubr.bf16.gmra.mxu0 %v908
      %v1019 = vpop.f32.mrf.mxu0
      %v1020 = vadd.f32 0.0, %v1019
      %v1021 = vpop.f32.mrf.mxu0
      %v1022 = vpop.f32.mrf.mxu0
      %v1023 = vadd.f32 0.0, %v1022
      %v1024 = vpop.f32.mrf.mxu0
      %1025 = vmatprep.mubr.bf16.mxu0 0
      %1026 = vmatmul.mubr.bf16.gmra.mxu0 %v911
      %v1027 = vpop.f32.mrf.mxu0
      %v1028 = vadd.f32 0.0, %v1027
      %v1029 = vpop.f32.mrf.mxu0
      %v1030 = vpop.f32.mrf.mxu0
      %v1031 = vadd.f32 0.0, %v1030
      %v1032 = vpop.f32.mrf.mxu0
      %1033 = vmatprep.mubr.bf16.mxu0 0
      %1034 = vmatmul.mubr.bf16.gmra.mxu0 %v914
      %v1035 = vpop.f32.mrf.mxu0
      %v1036 = vadd.f32 0.0, %v1035
      %v1037 = vpop.f32.mrf.mxu0
      %v1038 = vpop.f32.mrf.mxu0
      %v1039 = vadd.f32 0.0, %v1038
      %v1040 = vpop.f32.mrf.mxu0
      %1041 = vmatprep.mubr.bf16.mxu0 0
      %1042 = vmatmul.mubr.bf16.gmra.mxu0 %v917
      %v1043 = vpop.f32.mrf.mxu0
      %v1044 = vadd.f32 0.0, %v1043
      %v1045 = vpop.f32.mrf.mxu0
      %v1046 = vpop.f32.mrf.mxu0
      %v1047 = vadd.f32 0.0, %v1046
      %v1048 = vpop.f32.mrf.mxu0
      %1049 = vmatprep.mubr.bf16.mxu0 0
      %1050 = vmatmul.mubr.bf16.gmra.mxu0 %v920
      %v1051 = vpop.f32.mrf.mxu0
      %v1052 = vadd.f32 0.0, %v1051
      %v1053 = vpop.f32.mrf.mxu0
      %v1054 = vpop.f32.mrf.mxu0
      %v1055 = vadd.f32 0.0, %v1054
      %v1056 = vpop.f32.mrf.mxu0
      %1057 = vmatprep.mubr.bf16.mxu0 0
      %1058 = vmatmul.mubr.bf16.gmra.mxu0 %v923
      %v1059 = vpop.f32.mrf.mxu0
      %v1060 = vadd.f32 0.0, %v1059
      %v1061 = vpop.f32.mrf.mxu0
      %v1062 = vpop.f32.mrf.mxu0
      %v1063 = vadd.f32 0.0, %v1062
      %v1064 = vpop.f32.mrf.mxu0
      %1065 = vmatprep.mubr.bf16.mxu0 0
      %1066 = vmatmul.mubr.bf16.gmra.mxu0 %v926
      %v1067 = vpop.f32.mrf.mxu0
      %v1068 = vadd.f32 0.0, %v1067
      %v1069 = vpop.f32.mrf.mxu0
      %v1070 = vpop.f32.mrf.mxu0
      %v1071 = vadd.f32 0.0, %v1070
      %v1072 = vpop.f32.mrf.mxu0
      %1073 = vmatprep.mubr.bf16.mxu0 0
      %1074 = vmatmul.mubr.bf16.gmra.mxu0 %v929
      %v1075 = vpop.f32.mrf.mxu0
      %v1076 = vadd.f32 0.0, %v1075
      %v1077 = vpop.f32.mrf.mxu0
      %v1078 = vpop.f32.mrf.mxu0
      %v1079 = vadd.f32 0.0, %v1078
      %v1080 = vpop.f32.mrf.mxu0
      %1081 = vmatprep.mubr.bf16.mxu0 0
      %1082 = vmatmul.mubr.bf16.gmra.mxu0 %v932
      %v1083 = vpop.f32.mrf.mxu0
      %v1084 = vadd.f32 0.0, %v1083
      %v1085 = vpop.f32.mrf.mxu0
      %v1086 = vpop.f32.mrf.mxu0
      %v1087 = vadd.f32 0.0, %v1086
      %v1088 = vpop.f32.mrf.mxu0
      %1089 = vmatprep.mubr.bf16.mxu0 0
      %1090 = vmatmul.mubr.bf16.gmra.mxu0 %v935
      %v1091 = vpop.f32.mrf.mxu0
      %v1092 = vadd.f32 0.0, %v1091
      %v1093 = vpop.f32.mrf.mxu0
      %v1094 = vpop.f32.mrf.mxu0
      %v1095 = vadd.f32 0.0, %v1094
      %v1096 = vpop.f32.mrf.mxu0
      %1097 = vdwg.mxu0
      %v1102 = vunpack.c.l.b16 %v820
      %v1103 = vunpack.c.l.b16 %v821
      %v1104 = vunpack.c.l.b16 %v822
      %v1105 = vunpack.c.l.b16 %v823
      %v1106 = vpack.c.b16 %v1103, %v1102
      %v1107 = vpack.c.b16 %v1105, %v1104
      %v1111 = vsel %vm697, %v804, 0
      %v1114 = vsel %vm697, %v805, 0
      %v1117 = vsel %vm697, %v806, 0
      %v1120 = vsel %vm697, %v807, 0
      %v1123 = vsel %vm697, %v808, 0
      %v1126 = vsel %vm697, %v809, 0
      %v1129 = vsel %vm697, %v810, 0
      %v1132 = vsel %vm697, %v811, 0
      %v1135 = vsel %vm697, %v812, 0
      %v1138 = vsel %vm697, %v813, 0
      %v1141 = vsel %vm697, %v814, 0
      %v1144 = vsel %vm697, %v815, 0
      %v1147 = vsel %vm697, %v816, 0
      %v1150 = vsel %vm697, %v817, 0
      %v1153 = vsel %vm697, %v818, 0
      %v1156 = vsel %vm697, %v819, 0
      %1158 = vmatprep.subr.bf16.mxu0 0
      %1159 = vmatpush1.bf16.msra.mxu0 0
      %1160 = vmatprep.subr.bf16.mxu0 0
      %1161 = vmatpush1.bf16.msra.mxu0 0
      %1162 = vmatprep.subr.bf16.mxu0 0
      %1163 = vmatpush1.bf16.msra.mxu0 0
      %1164 = vmatprep.subr.bf16.mxu0 0
      %1165 = vmatpush1.bf16.msra.mxu0 0
      %1166 = vmatprep.subr.bf16.mxu0 0
      %1167 = vmatpush1.bf16.msra.mxu0 0
      %1168 = vmatprep.subr.bf16.mxu0 0
      %1169 = vmatpush1.bf16.msra.mxu0 0
      %1170 = vmatprep.subr.bf16.mxu0 0
      %1171 = vmatpush1.bf16.msra.mxu0 %v1107
      %1172 = vmatprep.subr.bf16.mxu0 0
      %1173 = vmatpush1.bf16.msra.mxu0 %v1106
      %1174 = vmatprep.subr.bf16.mxu0 0
      %1175 = vmatpush2.bf16.msra.mxu0 0
      %1176 = vmatprep.subr.bf16.mxu0 0
      %1177 = vmatpush2.bf16.msra.mxu0 0
      %1178 = vmatprep.subr.bf16.mxu0 0
      %1179 = vmatpush2.bf16.msra.mxu0 0
      %1180 = vmatprep.subr.bf16.mxu0 0
      %1181 = vmatpush2.bf16.msra.mxu0 0
      %1182 = vmatprep.subr.bf16.mxu0 0
      %1183 = vmatpush2.bf16.msra.mxu0 0
      %1184 = vmatprep.subr.bf16.mxu0 0
      %1185 = vmatpush2.bf16.msra.mxu0 0
      %1186 = vmatprep.subr.bf16.mxu0 0
      %1187 = vmatpush2.bf16.msra.mxu0 0
      %1188 = vmatprep.subr.bf16.mxu0 0
      %1189 = vmatpush2.bf16.msra.mxu0 0
      %1190 = vmatprep.mubr.bf16.mxu0 0
      %1191 = vmatmul.mubr.bf16.gmra.mxu0 %v1111
      %v1192 = vpop.f32.mrf.mxu0
      %v1193 = vadd.f32 %v972, %v1192
      %v1194 = vpop.f32.mrf.mxu0
      %v1195 = vpop.f32.mrf.mxu0
      %v1196 = vadd.f32 %v975, %v1195
      %v1197 = vpop.f32.mrf.mxu0
      %1198 = vmatprep.mubr.bf16.mxu0 0
      %1199 = vmatmul.mubr.bf16.gmra.mxu0 %v1114
      %v1200 = vpop.f32.mrf.mxu0
      %v1201 = vadd.f32 %v980, %v1200
      %v1202 = vpop.f32.mrf.mxu0
      %v1203 = vpop.f32.mrf.mxu0
      %v1204 = vadd.f32 %v983, %v1203
      %v1205 = vpop.f32.mrf.mxu0
      %1206 = vmatprep.mubr.bf16.mxu0 0
      %1207 = vmatmul.mubr.bf16.gmra.mxu0 %v1117
      %v1208 = vpop.f32.mrf.mxu0
      %v1209 = vadd.f32 %v988, %v1208
      %v1210 = vpop.f32.mrf.mxu0
      %v1211 = vpop.f32.mrf.mxu0
      %v1212 = vadd.f32 %v991, %v1211
      %v1213 = vpop.f32.mrf.mxu0
      %1214 = vmatprep.mubr.bf16.mxu0 0
      %1215 = vmatmul.mubr.bf16.gmra.mxu0 %v1120
      %v1216 = vpop.f32.mrf.mxu0
      %v1217 = vadd.f32 %v996, %v1216
      %v1218 = vpop.f32.mrf.mxu0
      %v1219 = vpop.f32.mrf.mxu0
      %v1220 = vadd.f32 %v999, %v1219
      %v1221 = vpop.f32.mrf.mxu0
      %1222 = vmatprep.mubr.bf16.mxu0 0
      %1223 = vmatmul.mubr.bf16.gmra.mxu0 %v1123
      %v1224 = vpop.f32.mrf.mxu0
      %v1225 = vadd.f32 %v1004, %v1224
      %v1226 = vpop.f32.mrf.mxu0
      %v1227 = vpop.f32.mrf.mxu0
      %v1228 = vadd.f32 %v1007, %v1227
      %v1229 = vpop.f32.mrf.mxu0
      %1230 = vmatprep.mubr.bf16.mxu0 0
      %1231 = vmatmul.mubr.bf16.gmra.mxu0 %v1126
      %v1232 = vpop.f32.mrf.mxu0
      %v1233 = vadd.f32 %v1012, %v1232
      %v1234 = vpop.f32.mrf.mxu0
      %v1235 = vpop.f32.mrf.mxu0
      %v1236 = vadd.f32 %v1015, %v1235
      %v1237 = vpop.f32.mrf.mxu0
      %1238 = vmatprep.mubr.bf16.mxu0 0
      %1239 = vmatmul.mubr.bf16.gmra.mxu0 %v1129
      %v1240 = vpop.f32.mrf.mxu0
      %v1241 = vadd.f32 %v1020, %v1240
      %v1242 = vpop.f32.mrf.mxu0
      %v1243 = vpop.f32.mrf.mxu0
      %v1244 = vadd.f32 %v1023, %v1243
      %v1245 = vpop.f32.mrf.mxu0
      %1246 = vmatprep.mubr.bf16.mxu0 0
      %1247 = vmatmul.mubr.bf16.gmra.mxu0 %v1132
      %v1248 = vpop.f32.mrf.mxu0
      %v1249 = vadd.f32 %v1028, %v1248
      %v1250 = vpop.f32.mrf.mxu0
      %v1251 = vpop.f32.mrf.mxu0
      %v1252 = vadd.f32 %v1031, %v1251
      %v1253 = vpop.f32.mrf.mxu0
      %1254 = vmatprep.mubr.bf16.mxu0 0
      %1255 = vmatmul.mubr.bf16.gmra.mxu0 %v1135
      %v1256 = vpop.f32.mrf.mxu0
      %v1257 = vadd.f32 %v1036, %v1256
      %v1258 = vpop.f32.mrf.mxu0
      %v1259 = vpop.f32.mrf.mxu0
      %v1260 = vadd.f32 %v1039, %v1259
      %v1261 = vpop.f32.mrf.mxu0
      %1262 = vmatprep.mubr.bf16.mxu0 0
      %1263 = vmatmul.mubr.bf16.gmra.mxu0 %v1138
      %v1264 = vpop.f32.mrf.mxu0
      %v1265 = vadd.f32 %v1044, %v1264
      %v1266 = vpop.f32.mrf.mxu0
      %v1267 = vpop.f32.mrf.mxu0
      %v1268 = vadd.f32 %v1047, %v1267
      %v1269 = vpop.f32.mrf.mxu0
      %1270 = vmatprep.mubr.bf16.mxu0 0
      %1271 = vmatmul.mubr.bf16.gmra.mxu0 %v1141
      %v1272 = vpop.f32.mrf.mxu0
      %v1273 = vadd.f32 %v1052, %v1272
      %v1274 = vpop.f32.mrf.mxu0
      %v1275 = vpop.f32.mrf.mxu0
      %v1276 = vadd.f32 %v1055, %v1275
      %v1277 = vpop.f32.mrf.mxu0
      %1278 = vmatprep.mubr.bf16.mxu0 0
      %1279 = vmatmul.mubr.bf16.gmra.mxu0 %v1144
      %v1280 = vpop.f32.mrf.mxu0
      %v1281 = vadd.f32 %v1060, %v1280
      %v1282 = vpop.f32.mrf.mxu0
      %v1283 = vpop.f32.mrf.mxu0
      %v1284 = vadd.f32 %v1063, %v1283
      %v1285 = vpop.f32.mrf.mxu0
      %1286 = vmatprep.mubr.bf16.mxu0 0
      %1287 = vmatmul.mubr.bf16.gmra.mxu0 %v1147
      %v1288 = vpop.f32.mrf.mxu0
      %v1289 = vadd.f32 %v1068, %v1288
      %v1290 = vpop.f32.mrf.mxu0
      %v1291 = vpop.f32.mrf.mxu0
      %v1292 = vadd.f32 %v1071, %v1291
      %v1293 = vpop.f32.mrf.mxu0
      %1294 = vmatprep.mubr.bf16.mxu0 0
      %1295 = vmatmul.mubr.bf16.gmra.mxu0 %v1150
      %v1296 = vpop.f32.mrf.mxu0
      %v1297 = vadd.f32 %v1076, %v1296
      %v1298 = vpop.f32.mrf.mxu0
      %v1299 = vpop.f32.mrf.mxu0
      %v1300 = vadd.f32 %v1079, %v1299
      %v1301 = vpop.f32.mrf.mxu0
      %1302 = vmatprep.mubr.bf16.mxu0 0
      %1303 = vmatmul.mubr.bf16.gmra.mxu0 %v1153
      %v1304 = vpop.f32.mrf.mxu0
      %v1305 = vadd.f32 %v1084, %v1304
      %v1306 = vpop.f32.mrf.mxu0
      %v1307 = vpop.f32.mrf.mxu0
      %v1308 = vadd.f32 %v1087, %v1307
      %v1309 = vpop.f32.mrf.mxu0
      %1310 = vmatprep.mubr.bf16.mxu0 0
      %1311 = vmatmul.mubr.bf16.gmra.mxu0 %v1156
      %v1312 = vpop.f32.mrf.mxu0
      %v1313 = vadd.f32 %v1092, %v1312
      %v1314 = vpop.f32.mrf.mxu0
      %v1315 = vpop.f32.mrf.mxu0
      %v1316 = vadd.f32 %v1095, %v1315
      %v1317 = vpop.f32.mrf.mxu0
      %1318 = vdwg.mxu0
      %v1319 = vld [vmem:[#allocation2 + $0x2] sm:$0xff]
      %v1320 = vld [vmem:[#allocation2 + $0xa] sm:$0xff]
      %v1321 = vld [vmem:[#allocation2 + $0x1a] sm:$0xff]
      %v1322 = vld [vmem:[#allocation2 + $0x22] sm:$0xff]
      %v1323 = vld [vmem:[#allocation2 + $0x32] sm:$0xff]
      %v1324 = vld [vmem:[#allocation2 + $0x3a] sm:$0xff]
      %v1325 = vld [vmem:[#allocation2 + $0x4a] sm:$0xff]
      %v1326 = vld [vmem:[#allocation2 + $0x52] sm:$0xff]
      %v1327 = vld [vmem:[#allocation2 + $0x62] sm:$0xff]
      %v1328 = vld [vmem:[#allocation2 + $0x6a] sm:$0xff]
      %v1329 = vld [vmem:[#allocation2 + $0x7a] sm:$0xff]
      %v1330 = vld [vmem:[#allocation2 + $0x82] sm:$0xff]
      %v1331 = vld [vmem:[#allocation2 + $0x92] sm:$0xff]
      %v1332 = vld [vmem:[#allocation2 + $0x9a] sm:$0xff]
      %v1333 = vld [vmem:[#allocation2 + $0xaa] sm:$0xff]
      %v1334 = vld [vmem:[#allocation2 + $0xb2] sm:$0xff]
      %v1335 = vld [vmem:[#allocation2 + $0xc2] sm:$0xff]
      %v1336 = vld [vmem:[#allocation2 + $0xca] sm:$0xff]
      %v1337 = vld [vmem:[#allocation2 + $0xda] sm:$0xff]
      %v1338 = vld [vmem:[#allocation2 + $0xe2] sm:$0xff]
      %v1339 = vld [vmem:[#allocation2 + $0xf2] sm:$0xff]
      %v1340 = vld [vmem:[#allocation2 + $0xfa] sm:$0xff]
      %v1341 = vld [vmem:[#allocation2 + $0x10a] sm:$0xff]
      %v1342 = vld [vmem:[#allocation2 + $0x112] sm:$0xff]
      %v1343 = vld [vmem:[#allocation2 + $0x122] sm:$0xff]
      %v1344 = vld [vmem:[#allocation2 + $0x12a] sm:$0xff]
      %v1345 = vld [vmem:[#allocation2 + $0x13a] sm:$0xff]
      %v1346 = vld [vmem:[#allocation2 + $0x142] sm:$0xff]
      %v1347 = vld [vmem:[#allocation2 + $0x152] sm:$0xff]
      %v1348 = vld [vmem:[#allocation2 + $0x15a] sm:$0xff]
      %v1349 = vld [vmem:[#allocation2 + $0x16a] sm:$0xff]
      %v1350 = vld [vmem:[#allocation2 + $0x172] sm:$0xff]
      %v1351 = vpack.c.bf16 %v1320, %v1319
      %v1352 = vpack.c.bf16 %v1322, %v1321
      %v1353 = vpack.c.bf16 %v1324, %v1323
      %v1354 = vpack.c.bf16 %v1326, %v1325
      %v1355 = vpack.c.bf16 %v1328, %v1327
      %v1356 = vpack.c.bf16 %v1330, %v1329
      %v1357 = vpack.c.bf16 %v1332, %v1331
      %v1358 = vpack.c.bf16 %v1334, %v1333
      %v1359 = vpack.c.bf16 %v1336, %v1335
      %v1360 = vpack.c.bf16 %v1338, %v1337
      %v1361 = vpack.c.bf16 %v1340, %v1339
      %v1362 = vpack.c.bf16 %v1342, %v1341
      %v1363 = vpack.c.bf16 %v1344, %v1343
      %v1364 = vpack.c.bf16 %v1346, %v1345
      %v1365 = vpack.c.bf16 %v1348, %v1347
      %v1366 = vpack.c.bf16 %v1350, %v1349
      %s1367 = scalar_lea.vmem %s5, 32
      %v1368 = vld [vmem:[%s1367] sm:$0xf]
      %v1369 = vld [vmem:[%s1367 + $0x4] sm:$0xf]
      %v1370 = vld [vmem:[%s1367 + $0x8] sm:$0xf]
      %v1371 = vld [vmem:[%s1367 + $0xc] sm:$0xf]
      %v1376 = vunpack.c.l.b16 %v1368
      %v1377 = vunpack.c.l.b16 %v1369
      %v1378 = vunpack.c.l.b16 %v1370
      %v1379 = vunpack.c.l.b16 %v1371
      %v1380 = vpack.c.b16 %v1377, %v1376
      %v1381 = vpack.c.b16 %v1379, %v1378
      %v1385 = vsel %vm697, %v1351, 0
      %v1388 = vsel %vm697, %v1352, 0
      %v1391 = vsel %vm697, %v1353, 0
      %v1394 = vsel %vm697, %v1354, 0
      %v1397 = vsel %vm697, %v1355, 0
      %v1400 = vsel %vm697, %v1356, 0
      %v1403 = vsel %vm697, %v1357, 0
      %v1406 = vsel %vm697, %v1358, 0
      %v1409 = vsel %vm697, %v1359, 0
      %v1412 = vsel %vm697, %v1360, 0
      %v1415 = vsel %vm697, %v1361, 0
      %v1418 = vsel %vm697, %v1362, 0
      %v1421 = vsel %vm697, %v1363, 0
      %v1424 = vsel %vm697, %v1364, 0
      %v1427 = vsel %vm697, %v1365, 0
      %v1430 = vsel %vm697, %v1366, 0
      %1432 = vmatprep.subr.bf16.mxu0 0
      %1433 = vmatpush1.bf16.msra.mxu0 0
      %1434 = vmatprep.subr.bf16.mxu0 0
      %1435 = vmatpush1.bf16.msra.mxu0 0
      %1436 = vmatprep.subr.bf16.mxu0 0
      %1437 = vmatpush1.bf16.msra.mxu0 0
      %1438 = vmatprep.subr.bf16.mxu0 0
      %1439 = vmatpush1.bf16.msra.mxu0 0
      %1440 = vmatprep.subr.bf16.mxu0 0
      %1441 = vmatpush1.bf16.msra.mxu0 0
      %1442 = vmatprep.subr.bf16.mxu0 0
      %1443 = vmatpush1.bf16.msra.mxu0 0
      %1444 = vmatprep.subr.bf16.mxu0 0
      %1445 = vmatpush1.bf16.msra.mxu0 %v1381
      %1446 = vmatprep.subr.bf16.mxu0 0
      %1447 = vmatpush1.bf16.msra.mxu0 %v1380
      %1448 = vmatprep.subr.bf16.mxu0 0
      %1449 = vmatpush2.bf16.msra.mxu0 0
      %1450 = vmatprep.subr.bf16.mxu0 0
      %1451 = vmatpush2.bf16.msra.mxu0 0
      %1452 = vmatprep.subr.bf16.mxu0 0
      %1453 = vmatpush2.bf16.msra.mxu0 0
      %1454 = vmatprep.subr.bf16.mxu0 0
      %1455 = vmatpush2.bf16.msra.mxu0 0
      %1456 = vmatprep.subr.bf16.mxu0 0
      %1457 = vmatpush2.bf16.msra.mxu0 0
      %1458 = vmatprep.subr.bf16.mxu0 0
      %1459 = vmatpush2.bf16.msra.mxu0 0
      %1460 = vmatprep.subr.bf16.mxu0 0
      %1461 = vmatpush2.bf16.msra.mxu0 0
      %1462 = vmatprep.subr.bf16.mxu0 0
      %1463 = vmatpush2.bf16.msra.mxu0 0
      %1464 = vmatprep.mubr.bf16.mxu0 0
      %1465 = vmatmul.mubr.bf16.gmra.mxu0 %v1385
      %v1466 = vpop.f32.mrf.mxu0
      %v1467 = vadd.f32 0.0, %v1466
      %v1468 = vpop.f32.mrf.mxu0
      %v1469 = vpop.f32.mrf.mxu0
      %v1470 = vadd.f32 0.0, %v1469
      %v1471 = vpop.f32.mrf.mxu0
      %1472 = vmatprep.mubr.bf16.mxu0 0
      %1473 = vmatmul.mubr.bf16.gmra.mxu0 %v1388
      %v1474 = vpop.f32.mrf.mxu0
      %v1475 = vadd.f32 0.0, %v1474
      %v1476 = vpop.f32.mrf.mxu0
      %v1477 = vpop.f32.mrf.mxu0
      %v1478 = vadd.f32 0.0, %v1477
      %v1479 = vpop.f32.mrf.mxu0
      %1480 = vmatprep.mubr.bf16.mxu0 0
      %1481 = vmatmul.mubr.bf16.gmra.mxu0 %v1391
      %v1482 = vpop.f32.mrf.mxu0
      %v1483 = vadd.f32 0.0, %v1482
      %v1484 = vpop.f32.mrf.mxu0
      %v1485 = vpop.f32.mrf.mxu0
      %v1486 = vadd.f32 0.0, %v1485
      %v1487 = vpop.f32.mrf.mxu0
      %1488 = vmatprep.mubr.bf16.mxu0 0
      %1489 = vmatmul.mubr.bf16.gmra.mxu0 %v1394
      %v1490 = vpop.f32.mrf.mxu0
      %v1491 = vadd.f32 0.0, %v1490
      %v1492 = vpop.f32.mrf.mxu0
      %v1493 = vpop.f32.mrf.mxu0
      %v1494 = vadd.f32 0.0, %v1493
      %v1495 = vpop.f32.mrf.mxu0
      %1496 = vmatprep.mubr.bf16.mxu0 0
      %1497 = vmatmul.mubr.bf16.gmra.mxu0 %v1397
      %v1498 = vpop.f32.mrf.mxu0
      %v1499 = vadd.f32 0.0, %v1498
      %v1500 = vpop.f32.mrf.mxu0
      %v1501 = vpop.f32.mrf.mxu0
      %v1502 = vadd.f32 0.0, %v1501
      %v1503 = vpop.f32.mrf.mxu0
      %1504 = vmatprep.mubr.bf16.mxu0 0
      %1505 = vmatmul.mubr.bf16.gmra.mxu0 %v1400
      %v1506 = vpop.f32.mrf.mxu0
      %v1507 = vadd.f32 0.0, %v1506
      %v1508 = vpop.f32.mrf.mxu0
      %v1509 = vpop.f32.mrf.mxu0
      %v1510 = vadd.f32 0.0, %v1509
      %v1511 = vpop.f32.mrf.mxu0
      %1512 = vmatprep.mubr.bf16.mxu0 0
      %1513 = vmatmul.mubr.bf16.gmra.mxu0 %v1403
      %v1514 = vpop.f32.mrf.mxu0
      %v1515 = vadd.f32 0.0, %v1514
      %v1516 = vpop.f32.mrf.mxu0
      %v1517 = vpop.f32.mrf.mxu0
      %v1518 = vadd.f32 0.0, %v1517
      %v1519 = vpop.f32.mrf.mxu0
      %1520 = vmatprep.mubr.bf16.mxu0 0
      %1521 = vmatmul.mubr.bf16.gmra.mxu0 %v1406
      %v1522 = vpop.f32.mrf.mxu0
      %v1523 = vadd.f32 0.0, %v1522
      %v1524 = vpop.f32.mrf.mxu0
      %v1525 = vpop.f32.mrf.mxu0
      %v1526 = vadd.f32 0.0, %v1525
      %v1527 = vpop.f32.mrf.mxu0
      %1528 = vmatprep.mubr.bf16.mxu0 0
      %1529 = vmatmul.mubr.bf16.gmra.mxu0 %v1409
      %v1530 = vpop.f32.mrf.mxu0
      %v1531 = vadd.f32 0.0, %v1530
      %v1532 = vpop.f32.mrf.mxu0
      %v1533 = vpop.f32.mrf.mxu0
      %v1534 = vadd.f32 0.0, %v1533
      %v1535 = vpop.f32.mrf.mxu0
      %1536 = vmatprep.mubr.bf16.mxu0 0
      %1537 = vmatmul.mubr.bf16.gmra.mxu0 %v1412
      %v1538 = vpop.f32.mrf.mxu0
      %v1539 = vadd.f32 0.0, %v1538
      %v1540 = vpop.f32.mrf.mxu0
      %v1541 = vpop.f32.mrf.mxu0
      %v1542 = vadd.f32 0.0, %v1541
      %v1543 = vpop.f32.mrf.mxu0
      %1544 = vmatprep.mubr.bf16.mxu0 0
      %1545 = vmatmul.mubr.bf16.gmra.mxu0 %v1415
      %v1546 = vpop.f32.mrf.mxu0
      %v1547 = vadd.f32 0.0, %v1546
      %v1548 = vpop.f32.mrf.mxu0
      %v1549 = vpop.f32.mrf.mxu0
      %v1550 = vadd.f32 0.0, %v1549
      %v1551 = vpop.f32.mrf.mxu0
      %1552 = vmatprep.mubr.bf16.mxu0 0
      %1553 = vmatmul.mubr.bf16.gmra.mxu0 %v1418
      %v1554 = vpop.f32.mrf.mxu0
      %v1555 = vadd.f32 0.0, %v1554
      %v1556 = vpop.f32.mrf.mxu0
      %v1557 = vpop.f32.mrf.mxu0
      %v1558 = vadd.f32 0.0, %v1557
      %v1559 = vpop.f32.mrf.mxu0
      %1560 = vmatprep.mubr.bf16.mxu0 0
      %1561 = vmatmul.mubr.bf16.gmra.mxu0 %v1421
      %v1562 = vpop.f32.mrf.mxu0
      %v1563 = vadd.f32 0.0, %v1562
      %v1564 = vpop.f32.mrf.mxu0
      %v1565 = vpop.f32.mrf.mxu0
      %v1566 = vadd.f32 0.0, %v1565
      %v1567 = vpop.f32.mrf.mxu0
      %1568 = vmatprep.mubr.bf16.mxu0 0
      %1569 = vmatmul.mubr.bf16.gmra.mxu0 %v1424
      %v1570 = vpop.f32.mrf.mxu0
      %v1571 = vadd.f32 0.0, %v1570
      %v1572 = vpop.f32.mrf.mxu0
      %v1573 = vpop.f32.mrf.mxu0
      %v1574 = vadd.f32 0.0, %v1573
      %v1575 = vpop.f32.mrf.mxu0
      %1576 = vmatprep.mubr.bf16.mxu0 0
      %1577 = vmatmul.mubr.bf16.gmra.mxu0 %v1427
      %v1578 = vpop.f32.mrf.mxu0
      %v1579 = vadd.f32 0.0, %v1578
      %v1580 = vpop.f32.mrf.mxu0
      %v1581 = vpop.f32.mrf.mxu0
      %v1582 = vadd.f32 0.0, %v1581
      %v1583 = vpop.f32.mrf.mxu0
      %1584 = vmatprep.mubr.bf16.mxu0 0
      %1585 = vmatmul.mubr.bf16.gmra.mxu0 %v1430
      %v1586 = vpop.f32.mrf.mxu0
      %v1587 = vadd.f32 0.0, %v1586
      %v1588 = vpop.f32.mrf.mxu0
      %v1589 = vpop.f32.mrf.mxu0
      %v1590 = vadd.f32 0.0, %v1589
      %v1591 = vpop.f32.mrf.mxu0
      %1592 = vdwg.mxu0
      %v1593 = vadd.f32 %v1193, %v1467
      %v1594 = vadd.f32 %v1196, %v1470
      %v1595 = vadd.f32 %v1201, %v1475
      %v1596 = vadd.f32 %v1204, %v1478
      %v1597 = vadd.f32 %v1209, %v1483
      %v1598 = vadd.f32 %v1212, %v1486
      %v1599 = vadd.f32 %v1217, %v1491
      %v1600 = vadd.f32 %v1220, %v1494
      %v1601 = vadd.f32 %v1225, %v1499
      %v1602 = vadd.f32 %v1228, %v1502
      %v1603 = vadd.f32 %v1233, %v1507
      %v1604 = vadd.f32 %v1236, %v1510
      %v1605 = vadd.f32 %v1241, %v1515
      %v1606 = vadd.f32 %v1244, %v1518
      %v1607 = vadd.f32 %v1249, %v1523
      %v1608 = vadd.f32 %v1252, %v1526
      %v1609 = vadd.f32 %v1257, %v1531
      %v1610 = vadd.f32 %v1260, %v1534
      %v1611 = vadd.f32 %v1265, %v1539
      %v1612 = vadd.f32 %v1268, %v1542
      %v1613 = vadd.f32 %v1273, %v1547
      %v1614 = vadd.f32 %v1276, %v1550
      %v1615 = vadd.f32 %v1281, %v1555
      %v1616 = vadd.f32 %v1284, %v1558
      %v1617 = vadd.f32 %v1289, %v1563
      %v1618 = vadd.f32 %v1292, %v1566
      %v1619 = vadd.f32 %v1297, %v1571
      %v1620 = vadd.f32 %v1300, %v1574
      %v1621 = vadd.f32 %v1305, %v1579
      %v1622 = vadd.f32 %v1308, %v1582
      %v1623 = vadd.f32 %v1313, %v1587
      %v1624 = vadd.f32 %v1316, %v1590
      %v1625 = vld [vmem:[%s706] sm:$0xff]
      %v1626 = vld [vmem:[%s706 + $0x8] sm:$0xff]
      %v1627 = vld [vmem:[%s706 + $0x18] sm:$0xff]
      %v1628 = vld [vmem:[%s706 + $0x20] sm:$0xff]
      %v1629 = vld [vmem:[%s706 + $0x30] sm:$0xff]
      %v1630 = vld [vmem:[%s706 + $0x38] sm:$0xff]
      %v1631 = vld [vmem:[%s706 + $0x48] sm:$0xff]
      %v1632 = vld [vmem:[%s706 + $0x50] sm:$0xff]
      %v1633 = vld [vmem:[%s706 + $0x60] sm:$0xff]
      %v1634 = vld [vmem:[%s706 + $0x68] sm:$0xff]
      %v1635 = vld [vmem:[%s706 + $0x78] sm:$0xff]
      %v1636 = vld [vmem:[%s706 + $0x80] sm:$0xff]
      %v1637 = vld [vmem:[%s706 + $0x90] sm:$0xff]
      %v1638 = vld [vmem:[%s706 + $0x98] sm:$0xff]
      %v1639 = vld [vmem:[%s706 + $0xa8] sm:$0xff]
      %v1640 = vld [vmem:[%s706 + $0xb0] sm:$0xff]
      %v1641 = vld [vmem:[%s706 + $0xc0] sm:$0xff]
      %v1642 = vld [vmem:[%s706 + $0xc8] sm:$0xff]
      %v1643 = vld [vmem:[%s706 + $0xd8] sm:$0xff]
      %v1644 = vld [vmem:[%s706 + $0xe0] sm:$0xff]
      %v1645 = vld [vmem:[%s706 + $0xf0] sm:$0xff]
      %v1646 = vld [vmem:[%s706 + $0xf8] sm:$0xff]
      %v1647 = vld [vmem:[%s706 + $0x108] sm:$0xff]
      %v1648 = vld [vmem:[%s706 + $0x110] sm:$0xff]
      %v1649 = vld [vmem:[%s706 + $0x120] sm:$0xff]
      %v1650 = vld [vmem:[%s706 + $0x128] sm:$0xff]
      %v1651 = vld [vmem:[%s706 + $0x138] sm:$0xff]
      %v1652 = vld [vmem:[%s706 + $0x140] sm:$0xff]
      %v1653 = vld [vmem:[%s706 + $0x150] sm:$0xff]
      %v1654 = vld [vmem:[%s706 + $0x158] sm:$0xff]
      %v1655 = vld [vmem:[%s706 + $0x168] sm:$0xff]
      %v1656 = vld [vmem:[%s706 + $0x170] sm:$0xff]
      %v1657 = vpack.c.bf16 %v1626, %v1625
      %v1658 = vpack.c.bf16 %v1628, %v1627
      %v1659 = vpack.c.bf16 %v1630, %v1629
      %v1660 = vpack.c.bf16 %v1632, %v1631
      %v1661 = vpack.c.bf16 %v1634, %v1633
      %v1662 = vpack.c.bf16 %v1636, %v1635
      %v1663 = vpack.c.bf16 %v1638, %v1637
      %v1664 = vpack.c.bf16 %v1640, %v1639
      %v1665 = vpack.c.bf16 %v1642, %v1641
      %v1666 = vpack.c.bf16 %v1644, %v1643
      %v1667 = vpack.c.bf16 %v1646, %v1645
      %v1668 = vpack.c.bf16 %v1648, %v1647
      %v1669 = vpack.c.bf16 %v1650, %v1649
      %v1670 = vpack.c.bf16 %v1652, %v1651
      %v1671 = vpack.c.bf16 %v1654, %v1653
      %v1672 = vpack.c.bf16 %v1656, %v1655
      %s1673 = scalar_lea.vmem %s5, 48
      %v1674 = vld [vmem:[%s1673] sm:$0xf]
      %v1675 = vld [vmem:[%s1673 + $0x4] sm:$0xf]
      %v1676 = vld [vmem:[%s1673 + $0x8] sm:$0xf]
      %v1677 = vld [vmem:[%s1673 + $0xc] sm:$0xf]
      %v1682 = vunpack.c.l.b16 %v1674
      %v1683 = vunpack.c.l.b16 %v1675
      %v1684 = vunpack.c.l.b16 %v1676
      %v1685 = vunpack.c.l.b16 %v1677
      %v1686 = vpack.c.b16 %v1683, %v1682
      %v1687 = vpack.c.b16 %v1685, %v1684
      %v1691 = vsel %vm697, %v1657, 0
      %v1694 = vsel %vm697, %v1658, 0
      %v1697 = vsel %vm697, %v1659, 0
      %v1700 = vsel %vm697, %v1660, 0
      %v1703 = vsel %vm697, %v1661, 0
      %v1706 = vsel %vm697, %v1662, 0
      %v1709 = vsel %vm697, %v1663, 0
      %v1712 = vsel %vm697, %v1664, 0
      %v1715 = vsel %vm697, %v1665, 0
      %v1718 = vsel %vm697, %v1666, 0
      %v1721 = vsel %vm697, %v1667, 0
      %v1724 = vsel %vm697, %v1668, 0
      %v1727 = vsel %vm697, %v1669, 0
      %v1730 = vsel %vm697, %v1670, 0
      %v1733 = vsel %vm697, %v1671, 0
      %v1736 = vsel %vm697, %v1672, 0
      %1738 = vmatprep.subr.bf16.mxu0 0
      %1739 = vmatpush1.bf16.msra.mxu0 0
      %1740 = vmatprep.subr.bf16.mxu0 0
      %1741 = vmatpush1.bf16.msra.mxu0 0
      %1742 = vmatprep.subr.bf16.mxu0 0
      %1743 = vmatpush1.bf16.msra.mxu0 0
      %1744 = vmatprep.subr.bf16.mxu0 0
      %1745 = vmatpush1.bf16.msra.mxu0 0
      %1746 = vmatprep.subr.bf16.mxu0 0
      %1747 = vmatpush1.bf16.msra.mxu0 0
      %1748 = vmatprep.subr.bf16.mxu0 0
      %1749 = vmatpush1.bf16.msra.mxu0 0
      %1750 = vmatprep.subr.bf16.mxu0 0
      %1751 = vmatpush1.bf16.msra.mxu0 %v1687
      %1752 = vmatprep.subr.bf16.mxu0 0
      %1753 = vmatpush1.bf16.msra.mxu0 %v1686
      %1754 = vmatprep.subr.bf16.mxu0 0
      %1755 = vmatpush2.bf16.msra.mxu0 0
      %1756 = vmatprep.subr.bf16.mxu0 0
      %1757 = vmatpush2.bf16.msra.mxu0 0
      %1758 = vmatprep.subr.bf16.mxu0 0
      %1759 = vmatpush2.bf16.msra.mxu0 0
      %1760 = vmatprep.subr.bf16.mxu0 0
      %1761 = vmatpush2.bf16.msra.mxu0 0
      %1762 = vmatprep.subr.bf16.mxu0 0
      %1763 = vmatpush2.bf16.msra.mxu0 0
      %1764 = vmatprep.subr.bf16.mxu0 0
      %1765 = vmatpush2.bf16.msra.mxu0 0
      %1766 = vmatprep.subr.bf16.mxu0 0
      %1767 = vmatpush2.bf16.msra.mxu0 0
      %1768 = vmatprep.subr.bf16.mxu0 0
      %1769 = vmatpush2.bf16.msra.mxu0 0
      %1770 = vmatprep.mubr.bf16.mxu0 0
      %1771 = vmatmul.mubr.bf16.gmra.mxu0 %v1691
      %v1772 = vpop.f32.mrf.mxu0
      %v1773 = vadd.f32 0.0, %v1772
      %v1774 = vpop.f32.mrf.mxu0
      %v1775 = vpop.f32.mrf.mxu0
      %v1776 = vadd.f32 0.0, %v1775
      %v1777 = vpop.f32.mrf.mxu0
      %1778 = vmatprep.mubr.bf16.mxu0 0
      %1779 = vmatmul.mubr.bf16.gmra.mxu0 %v1694
      %v1780 = vpop.f32.mrf.mxu0
      %v1781 = vadd.f32 0.0, %v1780
      %v1782 = vpop.f32.mrf.mxu0
      %v1783 = vpop.f32.mrf.mxu0
      %v1784 = vadd.f32 0.0, %v1783
      %v1785 = vpop.f32.mrf.mxu0
      %1786 = vmatprep.mubr.bf16.mxu0 0
      %1787 = vmatmul.mubr.bf16.gmra.mxu0 %v1697
      %v1788 = vpop.f32.mrf.mxu0
      %v1789 = vadd.f32 0.0, %v1788
      %v1790 = vpop.f32.mrf.mxu0
      %v1791 = vpop.f32.mrf.mxu0
      %v1792 = vadd.f32 0.0, %v1791
      %v1793 = vpop.f32.mrf.mxu0
      %1794 = vmatprep.mubr.bf16.mxu0 0
      %1795 = vmatmul.mubr.bf16.gmra.mxu0 %v1700
      %v1796 = vpop.f32.mrf.mxu0
      %v1797 = vadd.f32 0.0, %v1796
      %v1798 = vpop.f32.mrf.mxu0
      %v1799 = vpop.f32.mrf.mxu0
      %v1800 = vadd.f32 0.0, %v1799
      %v1801 = vpop.f32.mrf.mxu0
      %1802 = vmatprep.mubr.bf16.mxu0 0
      %1803 = vmatmul.mubr.bf16.gmra.mxu0 %v1703
      %v1804 = vpop.f32.mrf.mxu0
      %v1805 = vadd.f32 0.0, %v1804
      %v1806 = vpop.f32.mrf.mxu0
      %v1807 = vpop.f32.mrf.mxu0
      %v1808 = vadd.f32 0.0, %v1807
      %v1809 = vpop.f32.mrf.mxu0
      %1810 = vmatprep.mubr.bf16.mxu0 0
      %1811 = vmatmul.mubr.bf16.gmra.mxu0 %v1706
      %v1812 = vpop.f32.mrf.mxu0
      %v1813 = vadd.f32 0.0, %v1812
      %v1814 = vpop.f32.mrf.mxu0
      %v1815 = vpop.f32.mrf.mxu0
      %v1816 = vadd.f32 0.0, %v1815
      %v1817 = vpop.f32.mrf.mxu0
      %1818 = vmatprep.mubr.bf16.mxu0 0
      %1819 = vmatmul.mubr.bf16.gmra.mxu0 %v1709
      %v1820 = vpop.f32.mrf.mxu0
      %v1821 = vadd.f32 0.0, %v1820
      %v1822 = vpop.f32.mrf.mxu0
      %v1823 = vpop.f32.mrf.mxu0
      %v1824 = vadd.f32 0.0, %v1823
      %v1825 = vpop.f32.mrf.mxu0
      %1826 = vmatprep.mubr.bf16.mxu0 0
      %1827 = vmatmul.mubr.bf16.gmra.mxu0 %v1712
      %v1828 = vpop.f32.mrf.mxu0
      %v1829 = vadd.f32 0.0, %v1828
      %v1830 = vpop.f32.mrf.mxu0
      %v1831 = vpop.f32.mrf.mxu0
      %v1832 = vadd.f32 0.0, %v1831
      %v1833 = vpop.f32.mrf.mxu0
      %1834 = vmatprep.mubr.bf16.mxu0 0
      %1835 = vmatmul.mubr.bf16.gmra.mxu0 %v1715
      %v1836 = vpop.f32.mrf.mxu0
      %v1837 = vadd.f32 0.0, %v1836
      %v1838 = vpop.f32.mrf.mxu0
      %v1839 = vpop.f32.mrf.mxu0
      %v1840 = vadd.f32 0.0, %v1839
      %v1841 = vpop.f32.mrf.mxu0
      %1842 = vmatprep.mubr.bf16.mxu0 0
      %1843 = vmatmul.mubr.bf16.gmra.mxu0 %v1718
      %v1844 = vpop.f32.mrf.mxu0
      %v1845 = vadd.f32 0.0, %v1844
      %v1846 = vpop.f32.mrf.mxu0
      %v1847 = vpop.f32.mrf.mxu0
      %v1848 = vadd.f32 0.0, %v1847
      %v1849 = vpop.f32.mrf.mxu0
      %1850 = vmatprep.mubr.bf16.mxu0 0
      %1851 = vmatmul.mubr.bf16.gmra.mxu0 %v1721
      %v1852 = vpop.f32.mrf.mxu0
      %v1853 = vadd.f32 0.0, %v1852
      %v1854 = vpop.f32.mrf.mxu0
      %v1855 = vpop.f32.mrf.mxu0
      %v1856 = vadd.f32 0.0, %v1855
      %v1857 = vpop.f32.mrf.mxu0
      %1858 = vmatprep.mubr.bf16.mxu0 0
      %1859 = vmatmul.mubr.bf16.gmra.mxu0 %v1724
      %v1860 = vpop.f32.mrf.mxu0
      %v1861 = vadd.f32 0.0, %v1860
      %v1862 = vpop.f32.mrf.mxu0
      %v1863 = vpop.f32.mrf.mxu0
      %v1864 = vadd.f32 0.0, %v1863
      %v1865 = vpop.f32.mrf.mxu0
      %1866 = vmatprep.mubr.bf16.mxu0 0
      %1867 = vmatmul.mubr.bf16.gmra.mxu0 %v1727
      %v1868 = vpop.f32.mrf.mxu0
      %v1869 = vadd.f32 0.0, %v1868
      %v1870 = vpop.f32.mrf.mxu0
      %v1871 = vpop.f32.mrf.mxu0
      %v1872 = vadd.f32 0.0, %v1871
      %v1873 = vpop.f32.mrf.mxu0
      %1874 = vmatprep.mubr.bf16.mxu0 0
      %1875 = vmatmul.mubr.bf16.gmra.mxu0 %v1730
      %v1876 = vpop.f32.mrf.mxu0
      %v1877 = vadd.f32 0.0, %v1876
      %v1878 = vpop.f32.mrf.mxu0
      %v1879 = vpop.f32.mrf.mxu0
      %v1880 = vadd.f32 0.0, %v1879
      %v1881 = vpop.f32.mrf.mxu0
      %1882 = vmatprep.mubr.bf16.mxu0 0
      %1883 = vmatmul.mubr.bf16.gmra.mxu0 %v1733
      %v1884 = vpop.f32.mrf.mxu0
      %v1885 = vadd.f32 0.0, %v1884
      %v1886 = vpop.f32.mrf.mxu0
      %v1887 = vpop.f32.mrf.mxu0
      %v1888 = vadd.f32 0.0, %v1887
      %v1889 = vpop.f32.mrf.mxu0
      %1890 = vmatprep.mubr.bf16.mxu0 0
      %1891 = vmatmul.mubr.bf16.gmra.mxu0 %v1736
      %v1892 = vpop.f32.mrf.mxu0
      %v1893 = vadd.f32 0.0, %v1892
      %v1894 = vpop.f32.mrf.mxu0
      %v1895 = vpop.f32.mrf.mxu0
      %v1896 = vadd.f32 0.0, %v1895
      %v1897 = vpop.f32.mrf.mxu0
      %1898 = vdwg.mxu0
      %v1899 = vadd.f32 %v1593, %v1773
      %v1900 = vadd.f32 %v1594, %v1776
      %v1901 = vadd.f32 %v1595, %v1781
      %v1902 = vadd.f32 %v1596, %v1784
      %v1903 = vadd.f32 %v1597, %v1789
      %v1904 = vadd.f32 %v1598, %v1792
      %v1905 = vadd.f32 %v1599, %v1797
      %v1906 = vadd.f32 %v1600, %v1800
      %v1907 = vadd.f32 %v1601, %v1805
      %v1908 = vadd.f32 %v1602, %v1808
      %v1909 = vadd.f32 %v1603, %v1813
      %v1910 = vadd.f32 %v1604, %v1816
      %v1911 = vadd.f32 %v1605, %v1821
      %v1912 = vadd.f32 %v1606, %v1824
      %v1913 = vadd.f32 %v1607, %v1829
      %v1914 = vadd.f32 %v1608, %v1832
      %v1915 = vadd.f32 %v1609, %v1837
      %v1916 = vadd.f32 %v1610, %v1840
      %v1917 = vadd.f32 %v1611, %v1845
      %v1918 = vadd.f32 %v1612, %v1848
      %v1919 = vadd.f32 %v1613, %v1853
      %v1920 = vadd.f32 %v1614, %v1856
      %v1921 = vadd.f32 %v1615, %v1861
      %v1922 = vadd.f32 %v1616, %v1864
      %v1923 = vadd.f32 %v1617, %v1869
      %v1924 = vadd.f32 %v1618, %v1872
      %v1925 = vadd.f32 %v1619, %v1877
      %v1926 = vadd.f32 %v1620, %v1880
      %v1927 = vadd.f32 %v1621, %v1885
      %v1928 = vadd.f32 %v1622, %v1888
      %v1929 = vadd.f32 %v1623, %v1893
      %v1930 = vadd.f32 %v1624, %v1896
      %v1931 = vld [vmem:[%s706 + $0x1] sm:$0xff]
      %v1932 = vld [vmem:[%s706 + $0x9] sm:$0xff]
      %v1933 = vld [vmem:[%s706 + $0x19] sm:$0xff]
      %v1934 = vld [vmem:[%s706 + $0x21] sm:$0xff]
      %v1935 = vld [vmem:[%s706 + $0x31] sm:$0xff]
      %v1936 = vld [vmem:[%s706 + $0x39] sm:$0xff]
      %v1937 = vld [vmem:[%s706 + $0x49] sm:$0xff]
      %v1938 = vld [vmem:[%s706 + $0x51] sm:$0xff]
      %v1939 = vld [vmem:[%s706 + $0x61] sm:$0xff]
      %v1940 = vld [vmem:[%s706 + $0x69] sm:$0xff]
      %v1941 = vld [vmem:[%s706 + $0x79] sm:$0xff]
      %v1942 = vld [vmem:[%s706 + $0x81] sm:$0xff]
      %v1943 = vld [vmem:[%s706 + $0x91] sm:$0xff]
      %v1944 = vld [vmem:[%s706 + $0x99] sm:$0xff]
      %v1945 = vld [vmem:[%s706 + $0xa9] sm:$0xff]
      %v1946 = vld [vmem:[%s706 + $0xb1] sm:$0xff]
      %v1947 = vld [vmem:[%s706 + $0xc1] sm:$0xff]
      %v1948 = vld [vmem:[%s706 + $0xc9] sm:$0xff]
      %v1949 = vld [vmem:[%s706 + $0xd9] sm:$0xff]
      %v1950 = vld [vmem:[%s706 + $0xe1] sm:$0xff]
      %v1951 = vld [vmem:[%s706 + $0xf1] sm:$0xff]
      %v1952 = vld [vmem:[%s706 + $0xf9] sm:$0xff]
      %v1953 = vld [vmem:[%s706 + $0x109] sm:$0xff]
      %v1954 = vld [vmem:[%s706 + $0x111] sm:$0xff]
      %v1955 = vld [vmem:[%s706 + $0x121] sm:$0xff]
      %v1956 = vld [vmem:[%s706 + $0x129] sm:$0xff]
      %v1957 = vld [vmem:[%s706 + $0x139] sm:$0xff]
      %v1958 = vld [vmem:[%s706 + $0x141] sm:$0xff]
      %v1959 = vld [vmem:[%s706 + $0x151] sm:$0xff]
      %v1960 = vld [vmem:[%s706 + $0x159] sm:$0xff]
      %v1961 = vld [vmem:[%s706 + $0x169] sm:$0xff]
      %v1962 = vld [vmem:[%s706 + $0x171] sm:$0xff]
      %v1963 = vpack.c.bf16 %v1932, %v1931
      %v1964 = vpack.c.bf16 %v1934, %v1933
      %v1965 = vpack.c.bf16 %v1936, %v1935
      %v1966 = vpack.c.bf16 %v1938, %v1937
      %v1967 = vpack.c.bf16 %v1940, %v1939
      %v1968 = vpack.c.bf16 %v1942, %v1941
      %v1969 = vpack.c.bf16 %v1944, %v1943
      %v1970 = vpack.c.bf16 %v1946, %v1945
      %v1971 = vpack.c.bf16 %v1948, %v1947
      %v1972 = vpack.c.bf16 %v1950, %v1949
      %v1973 = vpack.c.bf16 %v1952, %v1951
      %v1974 = vpack.c.bf16 %v1954, %v1953
      %v1975 = vpack.c.bf16 %v1956, %v1955
      %v1976 = vpack.c.bf16 %v1958, %v1957
      %v1977 = vpack.c.bf16 %v1960, %v1959
      %v1978 = vpack.c.bf16 %v1962, %v1961
      %s1979 = scalar_lea.vmem %s5, 64
      %v1980 = vld [vmem:[%s1979] sm:$0xf]
      %v1981 = vld [vmem:[%s1979 + $0x4] sm:$0xf]
      %v1982 = vld [vmem:[%s1979 + $0x8] sm:$0xf]
      %v1983 = vld [vmem:[%s1979 + $0xc] sm:$0xf]
      %v1988 = vunpack.c.l.b16 %v1980
      %v1989 = vunpack.c.l.b16 %v1981
      %v1990 = vunpack.c.l.b16 %v1982
      %v1991 = vunpack.c.l.b16 %v1983
      %v1992 = vpack.c.b16 %v1989, %v1988
      %v1993 = vpack.c.b16 %v1991, %v1990
      %v1997 = vsel %vm697, %v1963, 0
      %v2000 = vsel %vm697, %v1964, 0
      %v2003 = vsel %vm697, %v1965, 0
      %v2006 = vsel %vm697, %v1966, 0
      %v2009 = vsel %vm697, %v1967, 0
      %v2012 = vsel %vm697, %v1968, 0
      %v2015 = vsel %vm697, %v1969, 0
      %v2018 = vsel %vm697, %v1970, 0
      %v2021 = vsel %vm697, %v1971, 0
      %v2024 = vsel %vm697, %v1972, 0
      %v2027 = vsel %vm697, %v1973, 0
      %v2030 = vsel %vm697, %v1974, 0
      %v2033 = vsel %vm697, %v1975, 0
      %v2036 = vsel %vm697, %v1976, 0
      %v2039 = vsel %vm697, %v1977, 0
      %v2042 = vsel %vm697, %v1978, 0
      %2044 = vmatprep.subr.bf16.mxu0 0
      %2045 = vmatpush1.bf16.msra.mxu0 0
      %2046 = vmatprep.subr.bf16.mxu0 0
      %2047 = vmatpush1.bf16.msra.mxu0 0
      %2048 = vmatprep.subr.bf16.mxu0 0
      %2049 = vmatpush1.bf16.msra.mxu0 0
      %2050 = vmatprep.subr.bf16.mxu0 0
      %2051 = vmatpush1.bf16.msra.mxu0 0
      %2052 = vmatprep.subr.bf16.mxu0 0
      %2053 = vmatpush1.bf16.msra.mxu0 0
      %2054 = vmatprep.subr.bf16.mxu0 0
      %2055 = vmatpush1.bf16.msra.mxu0 0
      %2056 = vmatprep.subr.bf16.mxu0 0
      %2057 = vmatpush1.bf16.msra.mxu0 %v1993
      %2058 = vmatprep.subr.bf16.mxu0 0
      %2059 = vmatpush1.bf16.msra.mxu0 %v1992
      %2060 = vmatprep.subr.bf16.mxu0 0
      %2061 = vmatpush2.bf16.msra.mxu0 0
      %2062 = vmatprep.subr.bf16.mxu0 0
      %2063 = vmatpush2.bf16.msra.mxu0 0
      %2064 = vmatprep.subr.bf16.mxu0 0
      %2065 = vmatpush2.bf16.msra.mxu0 0
      %2066 = vmatprep.subr.bf16.mxu0 0
      %2067 = vmatpush2.bf16.msra.mxu0 0
      %2068 = vmatprep.subr.bf16.mxu0 0
      %2069 = vmatpush2.bf16.msra.mxu0 0
      %2070 = vmatprep.subr.bf16.mxu0 0
      %2071 = vmatpush2.bf16.msra.mxu0 0
      %2072 = vmatprep.subr.bf16.mxu0 0
      %2073 = vmatpush2.bf16.msra.mxu0 0
      %2074 = vmatprep.subr.bf16.mxu0 0
      %2075 = vmatpush2.bf16.msra.mxu0 0
      %2076 = vmatprep.mubr.bf16.mxu0 0
      %2077 = vmatmul.mubr.bf16.gmra.mxu0 %v1997
      %v2078 = vpop.f32.mrf.mxu0
      %v2079 = vadd.f32 0.0, %v2078
      %v2080 = vpop.f32.mrf.mxu0
      %v2081 = vpop.f32.mrf.mxu0
      %v2082 = vadd.f32 0.0, %v2081
      %v2083 = vpop.f32.mrf.mxu0
      %2084 = vmatprep.mubr.bf16.mxu0 0
      %2085 = vmatmul.mubr.bf16.gmra.mxu0 %v2000
      %v2086 = vpop.f32.mrf.mxu0
      %v2087 = vadd.f32 0.0, %v2086
      %v2088 = vpop.f32.mrf.mxu0
      %v2089 = vpop.f32.mrf.mxu0
      %v2090 = vadd.f32 0.0, %v2089
      %v2091 = vpop.f32.mrf.mxu0
      %2092 = vmatprep.mubr.bf16.mxu0 0
      %2093 = vmatmul.mubr.bf16.gmra.mxu0 %v2003
      %v2094 = vpop.f32.mrf.mxu0
      %v2095 = vadd.f32 0.0, %v2094
      %v2096 = vpop.f32.mrf.mxu0
      %v2097 = vpop.f32.mrf.mxu0
      %v2098 = vadd.f32 0.0, %v2097
      %v2099 = vpop.f32.mrf.mxu0
      %2100 = vmatprep.mubr.bf16.mxu0 0
      %2101 = vmatmul.mubr.bf16.gmra.mxu0 %v2006
      %v2102 = vpop.f32.mrf.mxu0
      %v2103 = vadd.f32 0.0, %v2102
      %v2104 = vpop.f32.mrf.mxu0
      %v2105 = vpop.f32.mrf.mxu0
      %v2106 = vadd.f32 0.0, %v2105
      %v2107 = vpop.f32.mrf.mxu0
      %2108 = vmatprep.mubr.bf16.mxu0 0
      %2109 = vmatmul.mubr.bf16.gmra.mxu0 %v2009
      %v2110 = vpop.f32.mrf.mxu0
      %v2111 = vadd.f32 0.0, %v2110
      %v2112 = vpop.f32.mrf.mxu0
      %v2113 = vpop.f32.mrf.mxu0
      %v2114 = vadd.f32 0.0, %v2113
      %v2115 = vpop.f32.mrf.mxu0
      %2116 = vmatprep.mubr.bf16.mxu0 0
      %2117 = vmatmul.mubr.bf16.gmra.mxu0 %v2012
      %v2118 = vpop.f32.mrf.mxu0
      %v2119 = vadd.f32 0.0, %v2118
      %v2120 = vpop.f32.mrf.mxu0
      %v2121 = vpop.f32.mrf.mxu0
      %v2122 = vadd.f32 0.0, %v2121
      %v2123 = vpop.f32.mrf.mxu0
      %2124 = vmatprep.mubr.bf16.mxu0 0
      %2125 = vmatmul.mubr.bf16.gmra.mxu0 %v2015
      %v2126 = vpop.f32.mrf.mxu0
      %v2127 = vadd.f32 0.0, %v2126
      %v2128 = vpop.f32.mrf.mxu0
      %v2129 = vpop.f32.mrf.mxu0
      %v2130 = vadd.f32 0.0, %v2129
      %v2131 = vpop.f32.mrf.mxu0
      %2132 = vmatprep.mubr.bf16.mxu0 0
      %2133 = vmatmul.mubr.bf16.gmra.mxu0 %v2018
      %v2134 = vpop.f32.mrf.mxu0
      %v2135 = vadd.f32 0.0, %v2134
      %v2136 = vpop.f32.mrf.mxu0
      %v2137 = vpop.f32.mrf.mxu0
      %v2138 = vadd.f32 0.0, %v2137
      %v2139 = vpop.f32.mrf.mxu0
      %2140 = vmatprep.mubr.bf16.mxu0 0
      %2141 = vmatmul.mubr.bf16.gmra.mxu0 %v2021
      %v2142 = vpop.f32.mrf.mxu0
      %v2143 = vadd.f32 0.0, %v2142
      %v2144 = vpop.f32.mrf.mxu0
      %v2145 = vpop.f32.mrf.mxu0
      %v2146 = vadd.f32 0.0, %v2145
      %v2147 = vpop.f32.mrf.mxu0
      %2148 = vmatprep.mubr.bf16.mxu0 0
      %2149 = vmatmul.mubr.bf16.gmra.mxu0 %v2024
      %v2150 = vpop.f32.mrf.mxu0
      %v2151 = vadd.f32 0.0, %v2150
      %v2152 = vpop.f32.mrf.mxu0
      %v2153 = vpop.f32.mrf.mxu0
      %v2154 = vadd.f32 0.0, %v2153
      %v2155 = vpop.f32.mrf.mxu0
      %2156 = vmatprep.mubr.bf16.mxu0 0
      %2157 = vmatmul.mubr.bf16.gmra.mxu0 %v2027
      %v2158 = vpop.f32.mrf.mxu0
      %v2159 = vadd.f32 0.0, %v2158
      %v2160 = vpop.f32.mrf.mxu0
      %v2161 = vpop.f32.mrf.mxu0
      %v2162 = vadd.f32 0.0, %v2161
      %v2163 = vpop.f32.mrf.mxu0
      %2164 = vmatprep.mubr.bf16.mxu0 0
      %2165 = vmatmul.mubr.bf16.gmra.mxu0 %v2030
      %v2166 = vpop.f32.mrf.mxu0
      %v2167 = vadd.f32 0.0, %v2166
      %v2168 = vpop.f32.mrf.mxu0
      %v2169 = vpop.f32.mrf.mxu0
      %v2170 = vadd.f32 0.0, %v2169
      %v2171 = vpop.f32.mrf.mxu0
      %2172 = vmatprep.mubr.bf16.mxu0 0
      %2173 = vmatmul.mubr.bf16.gmra.mxu0 %v2033
      %v2174 = vpop.f32.mrf.mxu0
      %v2175 = vadd.f32 0.0, %v2174
      %v2176 = vpop.f32.mrf.mxu0
      %v2177 = vpop.f32.mrf.mxu0
      %v2178 = vadd.f32 0.0, %v2177
      %v2179 = vpop.f32.mrf.mxu0
      %2180 = vmatprep.mubr.bf16.mxu0 0
      %2181 = vmatmul.mubr.bf16.gmra.mxu0 %v2036
      %v2182 = vpop.f32.mrf.mxu0
      %v2183 = vadd.f32 0.0, %v2182
      %v2184 = vpop.f32.mrf.mxu0
      %v2185 = vpop.f32.mrf.mxu0
      %v2186 = vadd.f32 0.0, %v2185
      %v2187 = vpop.f32.mrf.mxu0
      %2188 = vmatprep.mubr.bf16.mxu0 0
      %2189 = vmatmul.mubr.bf16.gmra.mxu0 %v2039
      %v2190 = vpop.f32.mrf.mxu0
      %v2191 = vadd.f32 0.0, %v2190
      %v2192 = vpop.f32.mrf.mxu0
      %v2193 = vpop.f32.mrf.mxu0
      %v2194 = vadd.f32 0.0, %v2193
      %v2195 = vpop.f32.mrf.mxu0
      %2196 = vmatprep.mubr.bf16.mxu0 0
      %2197 = vmatmul.mubr.bf16.gmra.mxu0 %v2042
      %v2198 = vpop.f32.mrf.mxu0
      %v2199 = vadd.f32 0.0, %v2198
      %v2200 = vpop.f32.mrf.mxu0
      %v2201 = vpop.f32.mrf.mxu0
      %v2202 = vadd.f32 0.0, %v2201
      %v2203 = vpop.f32.mrf.mxu0
      %2204 = vdwg.mxu0
      %v2205 = vadd.f32 %v1899, %v2079
      %v2206 = vadd.f32 %v1900, %v2082
      %v2207 = vadd.f32 %v1901, %v2087
      %v2208 = vadd.f32 %v1902, %v2090
      %v2209 = vadd.f32 %v1903, %v2095
      %v2210 = vadd.f32 %v1904, %v2098
      %v2211 = vadd.f32 %v1905, %v2103
      %v2212 = vadd.f32 %v1906, %v2106
      %v2213 = vadd.f32 %v1907, %v2111
      %v2214 = vadd.f32 %v1908, %v2114
      %v2215 = vadd.f32 %v1909, %v2119
      %v2216 = vadd.f32 %v1910, %v2122
      %v2217 = vadd.f32 %v1911, %v2127
      %v2218 = vadd.f32 %v1912, %v2130
      %v2219 = vadd.f32 %v1913, %v2135
      %v2220 = vadd.f32 %v1914, %v2138
      %v2221 = vadd.f32 %v1915, %v2143
      %v2222 = vadd.f32 %v1916, %v2146
      %v2223 = vadd.f32 %v1917, %v2151
      %v2224 = vadd.f32 %v1918, %v2154
      %v2225 = vadd.f32 %v1919, %v2159
      %v2226 = vadd.f32 %v1920, %v2162
      %v2227 = vadd.f32 %v1921, %v2167
      %v2228 = vadd.f32 %v1922, %v2170
      %v2229 = vadd.f32 %v1923, %v2175
      %v2230 = vadd.f32 %v1924, %v2178
      %v2231 = vadd.f32 %v1925, %v2183
      %v2232 = vadd.f32 %v1926, %v2186
      %v2233 = vadd.f32 %v1927, %v2191
      %v2234 = vadd.f32 %v1928, %v2194
      %v2235 = vadd.f32 %v1929, %v2199
      %v2236 = vadd.f32 %v1930, %v2202
      %v2237 = vld [vmem:[%s706 + $0x2] sm:$0xff]
      %v2238 = vld [vmem:[%s706 + $0xa] sm:$0xff]
      %v2239 = vld [vmem:[%s706 + $0x1a] sm:$0xff]
      %v2240 = vld [vmem:[%s706 + $0x22] sm:$0xff]
      %v2241 = vld [vmem:[%s706 + $0x32] sm:$0xff]
      %v2242 = vld [vmem:[%s706 + $0x3a] sm:$0xff]
      %v2243 = vld [vmem:[%s706 + $0x4a] sm:$0xff]
      %v2244 = vld [vmem:[%s706 + $0x52] sm:$0xff]
      %v2245 = vld [vmem:[%s706 + $0x62] sm:$0xff]
      %v2246 = vld [vmem:[%s706 + $0x6a] sm:$0xff]
      %v2247 = vld [vmem:[%s706 + $0x7a] sm:$0xff]
      %v2248 = vld [vmem:[%s706 + $0x82] sm:$0xff]
      %v2249 = vld [vmem:[%s706 + $0x92] sm:$0xff]
      %v2250 = vld [vmem:[%s706 + $0x9a] sm:$0xff]
      %v2251 = vld [vmem:[%s706 + $0xaa] sm:$0xff]
      %v2252 = vld [vmem:[%s706 + $0xb2] sm:$0xff]
      %v2253 = vld [vmem:[%s706 + $0xc2] sm:$0xff]
      %v2254 = vld [vmem:[%s706 + $0xca] sm:$0xff]
      %v2255 = vld [vmem:[%s706 + $0xda] sm:$0xff]
      %v2256 = vld [vmem:[%s706 + $0xe2] sm:$0xff]
      %v2257 = vld [vmem:[%s706 + $0xf2] sm:$0xff]
      %v2258 = vld [vmem:[%s706 + $0xfa] sm:$0xff]
      %v2259 = vld [vmem:[%s706 + $0x10a] sm:$0xff]
      %v2260 = vld [vmem:[%s706 + $0x112] sm:$0xff]
      %v2261 = vld [vmem:[%s706 + $0x122] sm:$0xff]
      %v2262 = vld [vmem:[%s706 + $0x12a] sm:$0xff]
      %v2263 = vld [vmem:[%s706 + $0x13a] sm:$0xff]
      %v2264 = vld [vmem:[%s706 + $0x142] sm:$0xff]
      %v2265 = vld [vmem:[%s706 + $0x152] sm:$0xff]
      %v2266 = vld [vmem:[%s706 + $0x15a] sm:$0xff]
      %v2267 = vld [vmem:[%s706 + $0x16a] sm:$0xff]
      %v2268 = vld [vmem:[%s706 + $0x172] sm:$0xff]
      %v2269 = vpack.c.bf16 %v2238, %v2237
      %v2270 = vpack.c.bf16 %v2240, %v2239
      %v2271 = vpack.c.bf16 %v2242, %v2241
      %v2272 = vpack.c.bf16 %v2244, %v2243
      %v2273 = vpack.c.bf16 %v2246, %v2245
      %v2274 = vpack.c.bf16 %v2248, %v2247
      %v2275 = vpack.c.bf16 %v2250, %v2249
      %v2276 = vpack.c.bf16 %v2252, %v2251
      %v2277 = vpack.c.bf16 %v2254, %v2253
      %v2278 = vpack.c.bf16 %v2256, %v2255
      %v2279 = vpack.c.bf16 %v2258, %v2257
      %v2280 = vpack.c.bf16 %v2260, %v2259
      %v2281 = vpack.c.bf16 %v2262, %v2261
      %v2282 = vpack.c.bf16 %v2264, %v2263
      %v2283 = vpack.c.bf16 %v2266, %v2265
      %v2284 = vpack.c.bf16 %v2268, %v2267
      %s2285 = scalar_lea.vmem %s5, 80
      %v2286 = vld [vmem:[%s2285] sm:$0xf]
      %v2287 = vld [vmem:[%s2285 + $0x4] sm:$0xf]
      %v2288 = vld [vmem:[%s2285 + $0x8] sm:$0xf]
      %v2289 = vld [vmem:[%s2285 + $0xc] sm:$0xf]
      %v2294 = vunpack.c.l.b16 %v2286
      %v2295 = vunpack.c.l.b16 %v2287
      %v2296 = vunpack.c.l.b16 %v2288
      %v2297 = vunpack.c.l.b16 %v2289
      %v2298 = vpack.c.b16 %v2295, %v2294
      %v2299 = vpack.c.b16 %v2297, %v2296
      %v2303 = vsel %vm697, %v2269, 0
      %v2306 = vsel %vm697, %v2270, 0
      %v2309 = vsel %vm697, %v2271, 0
      %v2312 = vsel %vm697, %v2272, 0
      %v2315 = vsel %vm697, %v2273, 0
      %v2318 = vsel %vm697, %v2274, 0
      %v2321 = vsel %vm697, %v2275, 0
      %v2324 = vsel %vm697, %v2276, 0
      %v2327 = vsel %vm697, %v2277, 0
      %v2330 = vsel %vm697, %v2278, 0
      %v2333 = vsel %vm697, %v2279, 0
      %v2336 = vsel %vm697, %v2280, 0
      %v2339 = vsel %vm697, %v2281, 0
      %v2342 = vsel %vm697, %v2282, 0
      %v2345 = vsel %vm697, %v2283, 0
      %v2348 = vsel %vm697, %v2284, 0
      %2350 = vmatprep.subr.bf16.mxu0 0
      %2351 = vmatpush1.bf16.msra.mxu0 0
      %2352 = vmatprep.subr.bf16.mxu0 0
      %2353 = vmatpush1.bf16.msra.mxu0 0
      %2354 = vmatprep.subr.bf16.mxu0 0
      %2355 = vmatpush1.bf16.msra.mxu0 0
      %2356 = vmatprep.subr.bf16.mxu0 0
      %2357 = vmatpush1.bf16.msra.mxu0 0
      %2358 = vmatprep.subr.bf16.mxu0 0
      %2359 = vmatpush1.bf16.msra.mxu0 0
      %2360 = vmatprep.subr.bf16.mxu0 0
      %2361 = vmatpush1.bf16.msra.mxu0 0
      %2362 = vmatprep.subr.bf16.mxu0 0
      %2363 = vmatpush1.bf16.msra.mxu0 %v2299
      %2364 = vmatprep.subr.bf16.mxu0 0
      %2365 = vmatpush1.bf16.msra.mxu0 %v2298
      %2366 = vmatprep.subr.bf16.mxu0 0
      %2367 = vmatpush2.bf16.msra.mxu0 0
      %2368 = vmatprep.subr.bf16.mxu0 0
      %2369 = vmatpush2.bf16.msra.mxu0 0
      %2370 = vmatprep.subr.bf16.mxu0 0
      %2371 = vmatpush2.bf16.msra.mxu0 0
      %2372 = vmatprep.subr.bf16.mxu0 0
      %2373 = vmatpush2.bf16.msra.mxu0 0
      %2374 = vmatprep.subr.bf16.mxu0 0
      %2375 = vmatpush2.bf16.msra.mxu0 0
      %2376 = vmatprep.subr.bf16.mxu0 0
      %2377 = vmatpush2.bf16.msra.mxu0 0
      %2378 = vmatprep.subr.bf16.mxu0 0
      %2379 = vmatpush2.bf16.msra.mxu0 0
      %2380 = vmatprep.subr.bf16.mxu0 0
      %2381 = vmatpush2.bf16.msra.mxu0 0
      %2382 = vmatprep.mubr.bf16.mxu0 0
      %2383 = vmatmul.mubr.bf16.gmra.mxu0 %v2303
      %v2384 = vpop.f32.mrf.mxu0
      %v2385 = vadd.f32 0.0, %v2384
      %v2386 = vpop.f32.mrf.mxu0
      %v2387 = vpop.f32.mrf.mxu0
      %v2388 = vadd.f32 0.0, %v2387
      %v2389 = vpop.f32.mrf.mxu0
      %2390 = vmatprep.mubr.bf16.mxu0 0
      %2391 = vmatmul.mubr.bf16.gmra.mxu0 %v2306
      %v2392 = vpop.f32.mrf.mxu0
      %v2393 = vadd.f32 0.0, %v2392
      %v2394 = vpop.f32.mrf.mxu0
      %v2395 = vpop.f32.mrf.mxu0
      %v2396 = vadd.f32 0.0, %v2395
      %v2397 = vpop.f32.mrf.mxu0
      %2398 = vmatprep.mubr.bf16.mxu0 0
      %2399 = vmatmul.mubr.bf16.gmra.mxu0 %v2309
      %v2400 = vpop.f32.mrf.mxu0
      %v2401 = vadd.f32 0.0, %v2400
      %v2402 = vpop.f32.mrf.mxu0
      %v2403 = vpop.f32.mrf.mxu0
      %v2404 = vadd.f32 0.0, %v2403
      %v2405 = vpop.f32.mrf.mxu0
      %2406 = vmatprep.mubr.bf16.mxu0 0
      %2407 = vmatmul.mubr.bf16.gmra.mxu0 %v2312
      %v2408 = vpop.f32.mrf.mxu0
      %v2409 = vadd.f32 0.0, %v2408
      %v2410 = vpop.f32.mrf.mxu0
      %v2411 = vpop.f32.mrf.mxu0
      %v2412 = vadd.f32 0.0, %v2411
      %v2413 = vpop.f32.mrf.mxu0
      %2414 = vmatprep.mubr.bf16.mxu0 0
      %2415 = vmatmul.mubr.bf16.gmra.mxu0 %v2315
      %v2416 = vpop.f32.mrf.mxu0
      %v2417 = vadd.f32 0.0, %v2416
      %v2418 = vpop.f32.mrf.mxu0
      %v2419 = vpop.f32.mrf.mxu0
      %v2420 = vadd.f32 0.0, %v2419
      %v2421 = vpop.f32.mrf.mxu0
      %2422 = vmatprep.mubr.bf16.mxu0 0
      %2423 = vmatmul.mubr.bf16.gmra.mxu0 %v2318
      %v2424 = vpop.f32.mrf.mxu0
      %v2425 = vadd.f32 0.0, %v2424
      %v2426 = vpop.f32.mrf.mxu0
      %v2427 = vpop.f32.mrf.mxu0
      %v2428 = vadd.f32 0.0, %v2427
      %v2429 = vpop.f32.mrf.mxu0
      %2430 = vmatprep.mubr.bf16.mxu0 0
      %2431 = vmatmul.mubr.bf16.gmra.mxu0 %v2321
      %v2432 = vpop.f32.mrf.mxu0
      %v2433 = vadd.f32 0.0, %v2432
      %v2434 = vpop.f32.mrf.mxu0
      %v2435 = vpop.f32.mrf.mxu0
      %v2436 = vadd.f32 0.0, %v2435
      %v2437 = vpop.f32.mrf.mxu0
      %2438 = vmatprep.mubr.bf16.mxu0 0
      %2439 = vmatmul.mubr.bf16.gmra.mxu0 %v2324
      %v2440 = vpop.f32.mrf.mxu0
      %v2441 = vadd.f32 0.0, %v2440
      %v2442 = vpop.f32.mrf.mxu0
      %v2443 = vpop.f32.mrf.mxu0
      %v2444 = vadd.f32 0.0, %v2443
      %v2445 = vpop.f32.mrf.mxu0
      %2446 = vmatprep.mubr.bf16.mxu0 0
      %2447 = vmatmul.mubr.bf16.gmra.mxu0 %v2327
      %v2448 = vpop.f32.mrf.mxu0
      %v2449 = vadd.f32 0.0, %v2448
      %v2450 = vpop.f32.mrf.mxu0
      %v2451 = vpop.f32.mrf.mxu0
      %v2452 = vadd.f32 0.0, %v2451
      %v2453 = vpop.f32.mrf.mxu0
      %2454 = vmatprep.mubr.bf16.mxu0 0
      %2455 = vmatmul.mubr.bf16.gmra.mxu0 %v2330
      %v2456 = vpop.f32.mrf.mxu0
      %v2457 = vadd.f32 0.0, %v2456
      %v2458 = vpop.f32.mrf.mxu0
      %v2459 = vpop.f32.mrf.mxu0
      %v2460 = vadd.f32 0.0, %v2459
      %v2461 = vpop.f32.mrf.mxu0
      %2462 = vmatprep.mubr.bf16.mxu0 0
      %2463 = vmatmul.mubr.bf16.gmra.mxu0 %v2333
      %v2464 = vpop.f32.mrf.mxu0
      %v2465 = vadd.f32 0.0, %v2464
      %v2466 = vpop.f32.mrf.mxu0
      %v2467 = vpop.f32.mrf.mxu0
      %v2468 = vadd.f32 0.0, %v2467
      %v2469 = vpop.f32.mrf.mxu0
      %2470 = vmatprep.mubr.bf16.mxu0 0
      %2471 = vmatmul.mubr.bf16.gmra.mxu0 %v2336
      %v2472 = vpop.f32.mrf.mxu0
      %v2473 = vadd.f32 0.0, %v2472
      %v2474 = vpop.f32.mrf.mxu0
      %v2475 = vpop.f32.mrf.mxu0
      %v2476 = vadd.f32 0.0, %v2475
      %v2477 = vpop.f32.mrf.mxu0
      %2478 = vmatprep.mubr.bf16.mxu0 0
      %2479 = vmatmul.mubr.bf16.gmra.mxu0 %v2339
      %v2480 = vpop.f32.mrf.mxu0
      %v2481 = vadd.f32 0.0, %v2480
      %v2482 = vpop.f32.mrf.mxu0
      %v2483 = vpop.f32.mrf.mxu0
      %v2484 = vadd.f32 0.0, %v2483
      %v2485 = vpop.f32.mrf.mxu0
      %2486 = vmatprep.mubr.bf16.mxu0 0
      %2487 = vmatmul.mubr.bf16.gmra.mxu0 %v2342
      %v2488 = vpop.f32.mrf.mxu0
      %v2489 = vadd.f32 0.0, %v2488
      %v2490 = vpop.f32.mrf.mxu0
      %v2491 = vpop.f32.mrf.mxu0
      %v2492 = vadd.f32 0.0, %v2491
      %v2493 = vpop.f32.mrf.mxu0
      %2494 = vmatprep.mubr.bf16.mxu0 0
      %2495 = vmatmul.mubr.bf16.gmra.mxu0 %v2345
      %v2496 = vpop.f32.mrf.mxu0
      %v2497 = vadd.f32 0.0, %v2496
      %v2498 = vpop.f32.mrf.mxu0
      %v2499 = vpop.f32.mrf.mxu0
      %v2500 = vadd.f32 0.0, %v2499
      %v2501 = vpop.f32.mrf.mxu0
      %2502 = vmatprep.mubr.bf16.mxu0 0
      %2503 = vmatmul.mubr.bf16.gmra.mxu0 %v2348
      %v2504 = vpop.f32.mrf.mxu0
      %v2505 = vadd.f32 0.0, %v2504
      %v2506 = vpop.f32.mrf.mxu0
      %v2507 = vpop.f32.mrf.mxu0
      %v2508 = vadd.f32 0.0, %v2507
      %v2509 = vpop.f32.mrf.mxu0
      %2510 = vdwg.mxu0
      %v2511 = vadd.f32 %v2205, %v2385
      %v2512 = vadd.f32 %v2206, %v2388
      %v2513 = vadd.f32 %v2207, %v2393
      %v2514 = vadd.f32 %v2208, %v2396
      %v2515 = vadd.f32 %v2209, %v2401
      %v2516 = vadd.f32 %v2210, %v2404
      %v2517 = vadd.f32 %v2211, %v2409
      %v2518 = vadd.f32 %v2212, %v2412
      %v2519 = vadd.f32 %v2213, %v2417
      %v2520 = vadd.f32 %v2214, %v2420
      %v2521 = vadd.f32 %v2215, %v2425
      %v2522 = vadd.f32 %v2216, %v2428
      %v2523 = vadd.f32 %v2217, %v2433
      %v2524 = vadd.f32 %v2218, %v2436
      %v2525 = vadd.f32 %v2219, %v2441
      %v2526 = vadd.f32 %v2220, %v2444
      %v2527 = vadd.f32 %v2221, %v2449
      %v2528 = vadd.f32 %v2222, %v2452
      %v2529 = vadd.f32 %v2223, %v2457
      %v2530 = vadd.f32 %v2224, %v2460
      %v2531 = vadd.f32 %v2225, %v2465
      %v2532 = vadd.f32 %v2226, %v2468
      %v2533 = vadd.f32 %v2227, %v2473
      %v2534 = vadd.f32 %v2228, %v2476
      %v2535 = vadd.f32 %v2229, %v2481
      %v2536 = vadd.f32 %v2230, %v2484
      %v2537 = vadd.f32 %v2231, %v2489
      %v2538 = vadd.f32 %v2232, %v2492
      %v2539 = vadd.f32 %v2233, %v2497
      %v2540 = vadd.f32 %v2234, %v2500
      %v2541 = vadd.f32 %v2235, %v2505
      %v2542 = vadd.f32 %v2236, %v2508
      %s2543 = scalar_lea.vmem [#allocation2], 48
      %v2544 = vld [vmem:[%s2543] sm:$0xff]
      %v2545 = vld [vmem:[%s2543 + $0x8] sm:$0xff]
      %v2546 = vld [vmem:[%s2543 + $0x18] sm:$0xff]
      %v2547 = vld [vmem:[%s2543 + $0x20] sm:$0xff]
      %v2548 = vld [vmem:[%s2543 + $0x30] sm:$0xff]
      %v2549 = vld [vmem:[%s2543 + $0x38] sm:$0xff]
      %v2550 = vld [vmem:[%s2543 + $0x48] sm:$0xff]
      %v2551 = vld [vmem:[%s2543 + $0x50] sm:$0xff]
      %v2552 = vld [vmem:[%s2543 + $0x60] sm:$0xff]
      %v2553 = vld [vmem:[%s2543 + $0x68] sm:$0xff]
      %v2554 = vld [vmem:[%s2543 + $0x78] sm:$0xff]
      %v2555 = vld [vmem:[%s2543 + $0x80] sm:$0xff]
      %v2556 = vld [vmem:[%s2543 + $0x90] sm:$0xff]
      %v2557 = vld [vmem:[%s2543 + $0x98] sm:$0xff]
      %v2558 = vld [vmem:[%s2543 + $0xa8] sm:$0xff]
      %v2559 = vld [vmem:[%s2543 + $0xb0] sm:$0xff]
      %v2560 = vld [vmem:[%s2543 + $0xc0] sm:$0xff]
      %v2561 = vld [vmem:[%s2543 + $0xc8] sm:$0xff]
      %v2562 = vld [vmem:[%s2543 + $0xd8] sm:$0xff]
      %v2563 = vld [vmem:[%s2543 + $0xe0] sm:$0xff]
      %v2564 = vld [vmem:[%s2543 + $0xf0] sm:$0xff]
      %v2565 = vld [vmem:[%s2543 + $0xf8] sm:$0xff]
      %v2566 = vld [vmem:[%s2543 + $0x108] sm:$0xff]
      %v2567 = vld [vmem:[%s2543 + $0x110] sm:$0xff]
      %v2568 = vld [vmem:[%s2543 + $0x120] sm:$0xff]
      %v2569 = vld [vmem:[%s2543 + $0x128] sm:$0xff]
      %v2570 = vld [vmem:[%s2543 + $0x138] sm:$0xff]
      %v2571 = vld [vmem:[%s2543 + $0x140] sm:$0xff]
      %v2572 = vld [vmem:[%s2543 + $0x150] sm:$0xff]
      %v2573 = vld [vmem:[%s2543 + $0x158] sm:$0xff]
      %v2574 = vld [vmem:[%s2543 + $0x168] sm:$0xff]
      %v2575 = vld [vmem:[%s2543 + $0x170] sm:$0xff]
      %v2576 = vpack.c.bf16 %v2545, %v2544
      %v2577 = vpack.c.bf16 %v2547, %v2546
      %v2578 = vpack.c.bf16 %v2549, %v2548
      %v2579 = vpack.c.bf16 %v2551, %v2550
      %v2580 = vpack.c.bf16 %v2553, %v2552
      %v2581 = vpack.c.bf16 %v2555, %v2554
      %v2582 = vpack.c.bf16 %v2557, %v2556
      %v2583 = vpack.c.bf16 %v2559, %v2558
      %v2584 = vpack.c.bf16 %v2561, %v2560
      %v2585 = vpack.c.bf16 %v2563, %v2562
      %v2586 = vpack.c.bf16 %v2565, %v2564
      %v2587 = vpack.c.bf16 %v2567, %v2566
      %v2588 = vpack.c.bf16 %v2569, %v2568
      %v2589 = vpack.c.bf16 %v2571, %v2570
      %v2590 = vpack.c.bf16 %v2573, %v2572
      %v2591 = vpack.c.bf16 %v2575, %v2574
      %s2592 = scalar_lea.vmem %s5, 96
      %v2593 = vld [vmem:[%s2592] sm:$0xf]
      %v2594 = vld [vmem:[%s2592 + $0x4] sm:$0xf]
      %v2595 = vld [vmem:[%s2592 + $0x8] sm:$0xf]
      %v2596 = vld [vmem:[%s2592 + $0xc] sm:$0xf]
      %v2601 = vunpack.c.l.b16 %v2593
      %v2602 = vunpack.c.l.b16 %v2594
      %v2603 = vunpack.c.l.b16 %v2595
      %v2604 = vunpack.c.l.b16 %v2596
      %v2605 = vpack.c.b16 %v2602, %v2601
      %v2606 = vpack.c.b16 %v2604, %v2603
      %v2610 = vsel %vm697, %v2576, 0
      %v2613 = vsel %vm697, %v2577, 0
      %v2616 = vsel %vm697, %v2578, 0
      %v2619 = vsel %vm697, %v2579, 0
      %v2622 = vsel %vm697, %v2580, 0
      %v2625 = vsel %vm697, %v2581, 0
      %v2628 = vsel %vm697, %v2582, 0
      %v2631 = vsel %vm697, %v2583, 0
      %v2634 = vsel %vm697, %v2584, 0
      %v2637 = vsel %vm697, %v2585, 0
      %v2640 = vsel %vm697, %v2586, 0
      %v2643 = vsel %vm697, %v2587, 0
      %v2646 = vsel %vm697, %v2588, 0
      %v2649 = vsel %vm697, %v2589, 0
      %v2652 = vsel %vm697, %v2590, 0
      %v2655 = vsel %vm697, %v2591, 0
      %2657 = vmatprep.subr.bf16.mxu0 0
      %2658 = vmatpush1.bf16.msra.mxu0 0
      %2659 = vmatprep.subr.bf16.mxu0 0
      %2660 = vmatpush1.bf16.msra.mxu0 0
      %2661 = vmatprep.subr.bf16.mxu0 0
      %2662 = vmatpush1.bf16.msra.mxu0 0
      %2663 = vmatprep.subr.bf16.mxu0 0
      %2664 = vmatpush1.bf16.msra.mxu0 0
      %2665 = vmatprep.subr.bf16.mxu0 0
      %2666 = vmatpush1.bf16.msra.mxu0 0
      %2667 = vmatprep.subr.bf16.mxu0 0
      %2668 = vmatpush1.bf16.msra.mxu0 0
      %2669 = vmatprep.subr.bf16.mxu0 0
      %2670 = vmatpush1.bf16.msra.mxu0 %v2606
      %2671 = vmatprep.subr.bf16.mxu0 0
      %2672 = vmatpush1.bf16.msra.mxu0 %v2605
      %2673 = vmatprep.subr.bf16.mxu0 0
      %2674 = vmatpush2.bf16.msra.mxu0 0
      %2675 = vmatprep.subr.bf16.mxu0 0
      %2676 = vmatpush2.bf16.msra.mxu0 0
      %2677 = vmatprep.subr.bf16.mxu0 0
      %2678 = vmatpush2.bf16.msra.mxu0 0
      %2679 = vmatprep.subr.bf16.mxu0 0
      %2680 = vmatpush2.bf16.msra.mxu0 0
      %2681 = vmatprep.subr.bf16.mxu0 0
      %2682 = vmatpush2.bf16.msra.mxu0 0
      %2683 = vmatprep.subr.bf16.mxu0 0
      %2684 = vmatpush2.bf16.msra.mxu0 0
      %2685 = vmatprep.subr.bf16.mxu0 0
      %2686 = vmatpush2.bf16.msra.mxu0 0
      %2687 = vmatprep.subr.bf16.mxu0 0
      %2688 = vmatpush2.bf16.msra.mxu0 0
      %2689 = vmatprep.mubr.bf16.mxu0 0
      %2690 = vmatmul.mubr.bf16.gmra.mxu0 %v2610
      %v2691 = vpop.f32.mrf.mxu0
      %v2692 = vadd.f32 0.0, %v2691
      %v2693 = vpop.f32.mrf.mxu0
      %v2694 = vpop.f32.mrf.mxu0
      %v2695 = vadd.f32 0.0, %v2694
      %v2696 = vpop.f32.mrf.mxu0
      %2697 = vmatprep.mubr.bf16.mxu0 0
      %2698 = vmatmul.mubr.bf16.gmra.mxu0 %v2613
      %v2699 = vpop.f32.mrf.mxu0
      %v2700 = vadd.f32 0.0, %v2699
      %v2701 = vpop.f32.mrf.mxu0
      %v2702 = vpop.f32.mrf.mxu0
      %v2703 = vadd.f32 0.0, %v2702
      %v2704 = vpop.f32.mrf.mxu0
      %2705 = vmatprep.mubr.bf16.mxu0 0
      %2706 = vmatmul.mubr.bf16.gmra.mxu0 %v2616
      %v2707 = vpop.f32.mrf.mxu0
      %v2708 = vadd.f32 0.0, %v2707
      %v2709 = vpop.f32.mrf.mxu0
      %v2710 = vpop.f32.mrf.mxu0
      %v2711 = vadd.f32 0.0, %v2710
      %v2712 = vpop.f32.mrf.mxu0
      %2713 = vmatprep.mubr.bf16.mxu0 0
      %2714 = vmatmul.mubr.bf16.gmra.mxu0 %v2619
      %v2715 = vpop.f32.mrf.mxu0
      %v2716 = vadd.f32 0.0, %v2715
      %v2717 = vpop.f32.mrf.mxu0
      %v2718 = vpop.f32.mrf.mxu0
      %v2719 = vadd.f32 0.0, %v2718
      %v2720 = vpop.f32.mrf.mxu0
      %2721 = vmatprep.mubr.bf16.mxu0 0
      %2722 = vmatmul.mubr.bf16.gmra.mxu0 %v2622
      %v2723 = vpop.f32.mrf.mxu0
      %v2724 = vadd.f32 0.0, %v2723
      %v2725 = vpop.f32.mrf.mxu0
      %v2726 = vpop.f32.mrf.mxu0
      %v2727 = vadd.f32 0.0, %v2726
      %v2728 = vpop.f32.mrf.mxu0
      %2729 = vmatprep.mubr.bf16.mxu0 0
      %2730 = vmatmul.mubr.bf16.gmra.mxu0 %v2625
      %v2731 = vpop.f32.mrf.mxu0
      %v2732 = vadd.f32 0.0, %v2731
      %v2733 = vpop.f32.mrf.mxu0
      %v2734 = vpop.f32.mrf.mxu0
      %v2735 = vadd.f32 0.0, %v2734
      %v2736 = vpop.f32.mrf.mxu0
      %2737 = vmatprep.mubr.bf16.mxu0 0
      %2738 = vmatmul.mubr.bf16.gmra.mxu0 %v2628
      %v2739 = vpop.f32.mrf.mxu0
      %v2740 = vadd.f32 0.0, %v2739
      %v2741 = vpop.f32.mrf.mxu0
      %v2742 = vpop.f32.mrf.mxu0
      %v2743 = vadd.f32 0.0, %v2742
      %v2744 = vpop.f32.mrf.mxu0
      %2745 = vmatprep.mubr.bf16.mxu0 0
      %2746 = vmatmul.mubr.bf16.gmra.mxu0 %v2631
      %v2747 = vpop.f32.mrf.mxu0
      %v2748 = vadd.f32 0.0, %v2747
      %v2749 = vpop.f32.mrf.mxu0
      %v2750 = vpop.f32.mrf.mxu0
      %v2751 = vadd.f32 0.0, %v2750
      %v2752 = vpop.f32.mrf.mxu0
      %2753 = vmatprep.mubr.bf16.mxu0 0
      %2754 = vmatmul.mubr.bf16.gmra.mxu0 %v2634
      %v2755 = vpop.f32.mrf.mxu0
      %v2756 = vadd.f32 0.0, %v2755
      %v2757 = vpop.f32.mrf.mxu0
      %v2758 = vpop.f32.mrf.mxu0
      %v2759 = vadd.f32 0.0, %v2758
      %v2760 = vpop.f32.mrf.mxu0
      %2761 = vmatprep.mubr.bf16.mxu0 0
      %2762 = vmatmul.mubr.bf16.gmra.mxu0 %v2637
      %v2763 = vpop.f32.mrf.mxu0
      %v2764 = vadd.f32 0.0, %v2763
      %v2765 = vpop.f32.mrf.mxu0
      %v2766 = vpop.f32.mrf.mxu0
      %v2767 = vadd.f32 0.0, %v2766
      %v2768 = vpop.f32.mrf.mxu0
      %2769 = vmatprep.mubr.bf16.mxu0 0
      %2770 = vmatmul.mubr.bf16.gmra.mxu0 %v2640
      %v2771 = vpop.f32.mrf.mxu0
      %v2772 = vadd.f32 0.0, %v2771
      %v2773 = vpop.f32.mrf.mxu0
      %v2774 = vpop.f32.mrf.mxu0
      %v2775 = vadd.f32 0.0, %v2774
      %v2776 = vpop.f32.mrf.mxu0
      %2777 = vmatprep.mubr.bf16.mxu0 0
      %2778 = vmatmul.mubr.bf16.gmra.mxu0 %v2643
      %v2779 = vpop.f32.mrf.mxu0
      %v2780 = vadd.f32 0.0, %v2779
      %v2781 = vpop.f32.mrf.mxu0
      %v2782 = vpop.f32.mrf.mxu0
      %v2783 = vadd.f32 0.0, %v2782
      %v2784 = vpop.f32.mrf.mxu0
      %2785 = vmatprep.mubr.bf16.mxu0 0
      %2786 = vmatmul.mubr.bf16.gmra.mxu0 %v2646
      %v2787 = vpop.f32.mrf.mxu0
      %v2788 = vadd.f32 0.0, %v2787
      %v2789 = vpop.f32.mrf.mxu0
      %v2790 = vpop.f32.mrf.mxu0
      %v2791 = vadd.f32 0.0, %v2790
      %v2792 = vpop.f32.mrf.mxu0
      %2793 = vmatprep.mubr.bf16.mxu0 0
      %2794 = vmatmul.mubr.bf16.gmra.mxu0 %v2649
      %v2795 = vpop.f32.mrf.mxu0
      %v2796 = vadd.f32 0.0, %v2795
      %v2797 = vpop.f32.mrf.mxu0
      %v2798 = vpop.f32.mrf.mxu0
      %v2799 = vadd.f32 0.0, %v2798
      %v2800 = vpop.f32.mrf.mxu0
      %2801 = vmatprep.mubr.bf16.mxu0 0
      %2802 = vmatmul.mubr.bf16.gmra.mxu0 %v2652
      %v2803 = vpop.f32.mrf.mxu0
      %v2804 = vadd.f32 0.0, %v2803
      %v2805 = vpop.f32.mrf.mxu0
      %v2806 = vpop.f32.mrf.mxu0
      %v2807 = vadd.f32 0.0, %v2806
      %v2808 = vpop.f32.mrf.mxu0
      %2809 = vmatprep.mubr.bf16.mxu0 0
      %2810 = vmatmul.mubr.bf16.gmra.mxu0 %v2655
      %v2811 = vpop.f32.mrf.mxu0
      %v2812 = vadd.f32 0.0, %v2811
      %v2813 = vpop.f32.mrf.mxu0
      %v2814 = vpop.f32.mrf.mxu0
      %v2815 = vadd.f32 0.0, %v2814
      %v2816 = vpop.f32.mrf.mxu0
      %2817 = vdwg.mxu0
      %v2818 = vadd.f32 %v2511, %v2692
      %v2819 = vadd.f32 %v2512, %v2695
      %v2820 = vadd.f32 %v2513, %v2700
      %v2821 = vadd.f32 %v2514, %v2703
      %v2822 = vadd.f32 %v2515, %v2708
      %v2823 = vadd.f32 %v2516, %v2711
      %v2824 = vadd.f32 %v2517, %v2716
      %v2825 = vadd.f32 %v2518, %v2719
      %v2826 = vadd.f32 %v2519, %v2724
      %v2827 = vadd.f32 %v2520, %v2727
      %v2828 = vadd.f32 %v2521, %v2732
      %v2829 = vadd.f32 %v2522, %v2735
      %v2830 = vadd.f32 %v2523, %v2740
      %v2831 = vadd.f32 %v2524, %v2743
      %v2832 = vadd.f32 %v2525, %v2748
      %v2833 = vadd.f32 %v2526, %v2751
      %v2834 = vadd.f32 %v2527, %v2756
      %v2835 = vadd.f32 %v2528, %v2759
      %v2836 = vadd.f32 %v2529, %v2764
      %v2837 = vadd.f32 %v2530, %v2767
      %v2838 = vadd.f32 %v2531, %v2772
      %v2839 = vadd.f32 %v2532, %v2775
      %v2840 = vadd.f32 %v2533, %v2780
      %v2841 = vadd.f32 %v2534, %v2783
      %v2842 = vadd.f32 %v2535, %v2788
      %v2843 = vadd.f32 %v2536, %v2791
      %v2844 = vadd.f32 %v2537, %v2796
      %v2845 = vadd.f32 %v2538, %v2799
      %v2846 = vadd.f32 %v2539, %v2804
      %v2847 = vadd.f32 %v2540, %v2807
      %v2848 = vadd.f32 %v2541, %v2812
      %v2849 = vadd.f32 %v2542, %v2815
      %v2850 = vld [vmem:[%s2543 + $0x1] sm:$0xff]
      %v2851 = vld [vmem:[%s2543 + $0x9] sm:$0xff]
      %v2852 = vld [vmem:[%s2543 + $0x19] sm:$0xff]
      %v2853 = vld [vmem:[%s2543 + $0x21] sm:$0xff]
      %v2854 = vld [vmem:[%s2543 + $0x31] sm:$0xff]
      %v2855 = vld [vmem:[%s2543 + $0x39] sm:$0xff]
      %v2856 = vld [vmem:[%s2543 + $0x49] sm:$0xff]
      %v2857 = vld [vmem:[%s2543 + $0x51] sm:$0xff]
      %v2858 = vld [vmem:[%s2543 + $0x61] sm:$0xff]
      %v2859 = vld [vmem:[%s2543 + $0x69] sm:$0xff]
      %v2860 = vld [vmem:[%s2543 + $0x79] sm:$0xff]
      %v2861 = vld [vmem:[%s2543 + $0x81] sm:$0xff]
      %v2862 = vld [vmem:[%s2543 + $0x91] sm:$0xff]
      %v2863 = vld [vmem:[%s2543 + $0x99] sm:$0xff]
      %v2864 = vld [vmem:[%s2543 + $0xa9] sm:$0xff]
      %v2865 = vld [vmem:[%s2543 + $0xb1] sm:$0xff]
      %v2866 = vld [vmem:[%s2543 + $0xc1] sm:$0xff]
      %v2867 = vld [vmem:[%s2543 + $0xc9] sm:$0xff]
      %v2868 = vld [vmem:[%s2543 + $0xd9] sm:$0xff]
      %v2869 = vld [vmem:[%s2543 + $0xe1] sm:$0xff]
      %v2870 = vld [vmem:[%s2543 + $0xf1] sm:$0xff]
      %v2871 = vld [vmem:[%s2543 + $0xf9] sm:$0xff]
      %v2872 = vld [vmem:[%s2543 + $0x109] sm:$0xff]
      %v2873 = vld [vmem:[%s2543 + $0x111] sm:$0xff]
      %v2874 = vld [vmem:[%s2543 + $0x121] sm:$0xff]
      %v2875 = vld [vmem:[%s2543 + $0x129] sm:$0xff]
      %v2876 = vld [vmem:[%s2543 + $0x139] sm:$0xff]
      %v2877 = vld [vmem:[%s2543 + $0x141] sm:$0xff]
      %v2878 = vld [vmem:[%s2543 + $0x151] sm:$0xff]
      %v2879 = vld [vmem:[%s2543 + $0x159] sm:$0xff]
      %v2880 = vld [vmem:[%s2543 + $0x169] sm:$0xff]
      %v2881 = vld [vmem:[%s2543 + $0x171] sm:$0xff]
      %v2882 = vpack.c.bf16 %v2851, %v2850
      %v2883 = vpack.c.bf16 %v2853, %v2852
      %v2884 = vpack.c.bf16 %v2855, %v2854
      %v2885 = vpack.c.bf16 %v2857, %v2856
      %v2886 = vpack.c.bf16 %v2859, %v2858
      %v2887 = vpack.c.bf16 %v2861, %v2860
      %v2888 = vpack.c.bf16 %v2863, %v2862
      %v2889 = vpack.c.bf16 %v2865, %v2864
      %v2890 = vpack.c.bf16 %v2867, %v2866
      %v2891 = vpack.c.bf16 %v2869, %v2868
      %v2892 = vpack.c.bf16 %v2871, %v2870
      %v2893 = vpack.c.bf16 %v2873, %v2872
      %v2894 = vpack.c.bf16 %v2875, %v2874
      %v2895 = vpack.c.bf16 %v2877, %v2876
      %v2896 = vpack.c.bf16 %v2879, %v2878
      %v2897 = vpack.c.bf16 %v2881, %v2880
      %s2898 = scalar_lea.vmem %s5, 112
      %v2899 = vld [vmem:[%s2898] sm:$0xf]
      %v2900 = vld [vmem:[%s2898 + $0x4] sm:$0xf]
      %v2901 = vld [vmem:[%s2898 + $0x8] sm:$0xf]
      %v2902 = vld [vmem:[%s2898 + $0xc] sm:$0xf]
      %v2907 = vunpack.c.l.b16 %v2899
      %v2908 = vunpack.c.l.b16 %v2900
      %v2909 = vunpack.c.l.b16 %v2901
      %v2910 = vunpack.c.l.b16 %v2902
      %v2911 = vpack.c.b16 %v2908, %v2907
      %v2912 = vpack.c.b16 %v2910, %v2909
      %v2916 = vsel %vm697, %v2882, 0
      %v2919 = vsel %vm697, %v2883, 0
      %v2922 = vsel %vm697, %v2884, 0
      %v2925 = vsel %vm697, %v2885, 0
      %v2928 = vsel %vm697, %v2886, 0
      %v2931 = vsel %vm697, %v2887, 0
      %v2934 = vsel %vm697, %v2888, 0
      %v2937 = vsel %vm697, %v2889, 0
      %v2940 = vsel %vm697, %v2890, 0
      %v2943 = vsel %vm697, %v2891, 0
      %v2946 = vsel %vm697, %v2892, 0
      %v2949 = vsel %vm697, %v2893, 0
      %v2952 = vsel %vm697, %v2894, 0
      %v2955 = vsel %vm697, %v2895, 0
      %v2958 = vsel %vm697, %v2896, 0
      %v2961 = vsel %vm697, %v2897, 0
      %2963 = vmatprep.subr.bf16.mxu0 0
      %2964 = vmatpush1.bf16.msra.mxu0 0
      %2965 = vmatprep.subr.bf16.mxu0 0
      %2966 = vmatpush1.bf16.msra.mxu0 0
      %2967 = vmatprep.subr.bf16.mxu0 0
      %2968 = vmatpush1.bf16.msra.mxu0 0
      %2969 = vmatprep.subr.bf16.mxu0 0
      %2970 = vmatpush1.bf16.msra.mxu0 0
      %2971 = vmatprep.subr.bf16.mxu0 0
      %2972 = vmatpush1.bf16.msra.mxu0 0
      %2973 = vmatprep.subr.bf16.mxu0 0
      %2974 = vmatpush1.bf16.msra.mxu0 0
      %2975 = vmatprep.subr.bf16.mxu0 0
      %2976 = vmatpush1.bf16.msra.mxu0 %v2912
      %2977 = vmatprep.subr.bf16.mxu0 0
      %2978 = vmatpush1.bf16.msra.mxu0 %v2911
      %2979 = vmatprep.subr.bf16.mxu0 0
      %2980 = vmatpush2.bf16.msra.mxu0 0
      %2981 = vmatprep.subr.bf16.mxu0 0
      %2982 = vmatpush2.bf16.msra.mxu0 0
      %2983 = vmatprep.subr.bf16.mxu0 0
      %2984 = vmatpush2.bf16.msra.mxu0 0
      %2985 = vmatprep.subr.bf16.mxu0 0
      %2986 = vmatpush2.bf16.msra.mxu0 0
      %2987 = vmatprep.subr.bf16.mxu0 0
      %2988 = vmatpush2.bf16.msra.mxu0 0
      %2989 = vmatprep.subr.bf16.mxu0 0
      %2990 = vmatpush2.bf16.msra.mxu0 0
      %2991 = vmatprep.subr.bf16.mxu0 0
      %2992 = vmatpush2.bf16.msra.mxu0 0
      %2993 = vmatprep.subr.bf16.mxu0 0
      %2994 = vmatpush2.bf16.msra.mxu0 0
      %2995 = vmatprep.mubr.bf16.mxu0 0
      %2996 = vmatmul.mubr.bf16.gmra.mxu0 %v2916
      %v2997 = vpop.f32.mrf.mxu0
      %v2998 = vadd.f32 0.0, %v2997
      %v2999 = vpop.f32.mrf.mxu0
      %v3000 = vpop.f32.mrf.mxu0
      %v3001 = vadd.f32 0.0, %v3000
      %v3002 = vpop.f32.mrf.mxu0
      %3003 = vmatprep.mubr.bf16.mxu0 0
      %3004 = vmatmul.mubr.bf16.gmra.mxu0 %v2919
      %v3005 = vpop.f32.mrf.mxu0
      %v3006 = vadd.f32 0.0, %v3005
      %v3007 = vpop.f32.mrf.mxu0
      %v3008 = vpop.f32.mrf.mxu0
      %v3009 = vadd.f32 0.0, %v3008
      %v3010 = vpop.f32.mrf.mxu0
      %3011 = vmatprep.mubr.bf16.mxu0 0
      %3012 = vmatmul.mubr.bf16.gmra.mxu0 %v2922
      %v3013 = vpop.f32.mrf.mxu0
      %v3014 = vadd.f32 0.0, %v3013
      %v3015 = vpop.f32.mrf.mxu0
      %v3016 = vpop.f32.mrf.mxu0
      %v3017 = vadd.f32 0.0, %v3016
      %v3018 = vpop.f32.mrf.mxu0
      %3019 = vmatprep.mubr.bf16.mxu0 0
      %3020 = vmatmul.mubr.bf16.gmra.mxu0 %v2925
      %v3021 = vpop.f32.mrf.mxu0
      %v3022 = vadd.f32 0.0, %v3021
      %v3023 = vpop.f32.mrf.mxu0
      %v3024 = vpop.f32.mrf.mxu0
      %v3025 = vadd.f32 0.0, %v3024
      %v3026 = vpop.f32.mrf.mxu0
      %3027 = vmatprep.mubr.bf16.mxu0 0
      %3028 = vmatmul.mubr.bf16.gmra.mxu0 %v2928
      %v3029 = vpop.f32.mrf.mxu0
      %v3030 = vadd.f32 0.0, %v3029
      %v3031 = vpop.f32.mrf.mxu0
      %v3032 = vpop.f32.mrf.mxu0
      %v3033 = vadd.f32 0.0, %v3032
      %v3034 = vpop.f32.mrf.mxu0
      %3035 = vmatprep.mubr.bf16.mxu0 0
      %3036 = vmatmul.mubr.bf16.gmra.mxu0 %v2931
      %v3037 = vpop.f32.mrf.mxu0
      %v3038 = vadd.f32 0.0, %v3037
      %v3039 = vpop.f32.mrf.mxu0
      %v3040 = vpop.f32.mrf.mxu0
      %v3041 = vadd.f32 0.0, %v3040
      %v3042 = vpop.f32.mrf.mxu0
      %3043 = vmatprep.mubr.bf16.mxu0 0
      %3044 = vmatmul.mubr.bf16.gmra.mxu0 %v2934
      %v3045 = vpop.f32.mrf.mxu0
      %v3046 = vadd.f32 0.0, %v3045
      %v3047 = vpop.f32.mrf.mxu0
      %v3048 = vpop.f32.mrf.mxu0
      %v3049 = vadd.f32 0.0, %v3048
      %v3050 = vpop.f32.mrf.mxu0
      %3051 = vmatprep.mubr.bf16.mxu0 0
      %3052 = vmatmul.mubr.bf16.gmra.mxu0 %v2937
      %v3053 = vpop.f32.mrf.mxu0
      %v3054 = vadd.f32 0.0, %v3053
      %v3055 = vpop.f32.mrf.mxu0
      %v3056 = vpop.f32.mrf.mxu0
      %v3057 = vadd.f32 0.0, %v3056
      %v3058 = vpop.f32.mrf.mxu0
      %3059 = vmatprep.mubr.bf16.mxu0 0
      %3060 = vmatmul.mubr.bf16.gmra.mxu0 %v2940
      %v3061 = vpop.f32.mrf.mxu0
      %v3062 = vadd.f32 0.0, %v3061
      %v3063 = vpop.f32.mrf.mxu0
      %v3064 = vpop.f32.mrf.mxu0
      %v3065 = vadd.f32 0.0, %v3064
      %v3066 = vpop.f32.mrf.mxu0
      %3067 = vmatprep.mubr.bf16.mxu0 0
      %3068 = vmatmul.mubr.bf16.gmra.mxu0 %v2943
      %v3069 = vpop.f32.mrf.mxu0
      %v3070 = vadd.f32 0.0, %v3069
      %v3071 = vpop.f32.mrf.mxu0
      %v3072 = vpop.f32.mrf.mxu0
      %v3073 = vadd.f32 0.0, %v3072
      %v3074 = vpop.f32.mrf.mxu0
      %3075 = vmatprep.mubr.bf16.mxu0 0
      %3076 = vmatmul.mubr.bf16.gmra.mxu0 %v2946
      %v3077 = vpop.f32.mrf.mxu0
      %v3078 = vadd.f32 0.0, %v3077
      %v3079 = vpop.f32.mrf.mxu0
      %v3080 = vpop.f32.mrf.mxu0
      %v3081 = vadd.f32 0.0, %v3080
      %v3082 = vpop.f32.mrf.mxu0
      %3083 = vmatprep.mubr.bf16.mxu0 0
      %3084 = vmatmul.mubr.bf16.gmra.mxu0 %v2949
      %v3085 = vpop.f32.mrf.mxu0
      %v3086 = vadd.f32 0.0, %v3085
      %v3087 = vpop.f32.mrf.mxu0
      %v3088 = vpop.f32.mrf.mxu0
      %v3089 = vadd.f32 0.0, %v3088
      %v3090 = vpop.f32.mrf.mxu0
      %3091 = vmatprep.mubr.bf16.mxu0 0
      %3092 = vmatmul.mubr.bf16.gmra.mxu0 %v2952
      %v3093 = vpop.f32.mrf.mxu0
      %v3094 = vadd.f32 0.0, %v3093
      %v3095 = vpop.f32.mrf.mxu0
      %v3096 = vpop.f32.mrf.mxu0
      %v3097 = vadd.f32 0.0, %v3096
      %v3098 = vpop.f32.mrf.mxu0
      %3099 = vmatprep.mubr.bf16.mxu0 0
      %3100 = vmatmul.mubr.bf16.gmra.mxu0 %v2955
      %v3101 = vpop.f32.mrf.mxu0
      %v3102 = vadd.f32 0.0, %v3101
      %v3103 = vpop.f32.mrf.mxu0
      %v3104 = vpop.f32.mrf.mxu0
      %v3105 = vadd.f32 0.0, %v3104
      %v3106 = vpop.f32.mrf.mxu0
      %3107 = vmatprep.mubr.bf16.mxu0 0
      %3108 = vmatmul.mubr.bf16.gmra.mxu0 %v2958
      %v3109 = vpop.f32.mrf.mxu0
      %v3110 = vadd.f32 0.0, %v3109
      %v3111 = vpop.f32.mrf.mxu0
      %v3112 = vpop.f32.mrf.mxu0
      %v3113 = vadd.f32 0.0, %v3112
      %v3114 = vpop.f32.mrf.mxu0
      %3115 = vmatprep.mubr.bf16.mxu0 0
      %3116 = vmatmul.mubr.bf16.gmra.mxu0 %v2961
      %v3117 = vpop.f32.mrf.mxu0
      %v3118 = vadd.f32 0.0, %v3117
      %v3119 = vpop.f32.mrf.mxu0
      %v3120 = vpop.f32.mrf.mxu0
      %v3121 = vadd.f32 0.0, %v3120
      %v3122 = vpop.f32.mrf.mxu0
      %3123 = vdwg.mxu0
      %v3124 = vadd.f32 %v2818, %v2998
      %v3125 = vadd.f32 %v2819, %v3001
      %v3126 = vadd.f32 %v2820, %v3006
      %v3127 = vadd.f32 %v2821, %v3009
      %v3128 = vadd.f32 %v2822, %v3014
      %v3129 = vadd.f32 %v2823, %v3017
      %v3130 = vadd.f32 %v2824, %v3022
      %v3131 = vadd.f32 %v2825, %v3025
      %v3132 = vadd.f32 %v2826, %v3030
      %v3133 = vadd.f32 %v2827, %v3033
      %v3134 = vadd.f32 %v2828, %v3038
      %v3135 = vadd.f32 %v2829, %v3041
      %v3136 = vadd.f32 %v2830, %v3046
      %v3137 = vadd.f32 %v2831, %v3049
      %v3138 = vadd.f32 %v2832, %v3054
      %v3139 = vadd.f32 %v2833, %v3057
      %v3140 = vadd.f32 %v2834, %v3062
      %v3141 = vadd.f32 %v2835, %v3065
      %v3142 = vadd.f32 %v2836, %v3070
      %v3143 = vadd.f32 %v2837, %v3073
      %v3144 = vadd.f32 %v2838, %v3078
      %v3145 = vadd.f32 %v2839, %v3081
      %v3146 = vadd.f32 %v2840, %v3086
      %v3147 = vadd.f32 %v2841, %v3089
      %v3148 = vadd.f32 %v2842, %v3094
      %v3149 = vadd.f32 %v2843, %v3097
      %v3150 = vadd.f32 %v2844, %v3102
      %v3151 = vadd.f32 %v2845, %v3105
      %v3152 = vadd.f32 %v2846, %v3110
      %v3153 = vadd.f32 %v2847, %v3113
      %v3154 = vadd.f32 %v2848, %v3118
      %v3155 = vadd.f32 %v2849, %v3121
      %v3156 = vld [vmem:[%s2543 + $0x2] sm:$0xff]
      %v3157 = vld [vmem:[%s2543 + $0xa] sm:$0xff]
      %v3158 = vld [vmem:[%s2543 + $0x1a] sm:$0xff]
      %v3159 = vld [vmem:[%s2543 + $0x22] sm:$0xff]
      %v3160 = vld [vmem:[%s2543 + $0x32] sm:$0xff]
      %v3161 = vld [vmem:[%s2543 + $0x3a] sm:$0xff]
      %v3162 = vld [vmem:[%s2543 + $0x4a] sm:$0xff]
      %v3163 = vld [vmem:[%s2543 + $0x52] sm:$0xff]
      %v3164 = vld [vmem:[%s2543 + $0x62] sm:$0xff]
      %v3165 = vld [vmem:[%s2543 + $0x6a] sm:$0xff]
      %v3166 = vld [vmem:[%s2543 + $0x7a] sm:$0xff]
      %v3167 = vld [vmem:[%s2543 + $0x82] sm:$0xff]
      %v3168 = vld [vmem:[%s2543 + $0x92] sm:$0xff]
      %v3169 = vld [vmem:[%s2543 + $0x9a] sm:$0xff]
      %v3170 = vld [vmem:[%s2543 + $0xaa] sm:$0xff]
      %v3171 = vld [vmem:[%s2543 + $0xb2] sm:$0xff]
      %v3172 = vld [vmem:[%s2543 + $0xc2] sm:$0xff]
      %v3173 = vld [vmem:[%s2543 + $0xca] sm:$0xff]
      %v3174 = vld [vmem:[%s2543 + $0xda] sm:$0xff]
      %v3175 = vld [vmem:[%s2543 + $0xe2] sm:$0xff]
      %v3176 = vld [vmem:[%s2543 + $0xf2] sm:$0xff]
      %v3177 = vld [vmem:[%s2543 + $0xfa] sm:$0xff]
      %v3178 = vld [vmem:[%s2543 + $0x10a] sm:$0xff]
      %v3179 = vld [vmem:[%s2543 + $0x112] sm:$0xff]
      %v3180 = vld [vmem:[%s2543 + $0x122] sm:$0xff]
      %v3181 = vld [vmem:[%s2543 + $0x12a] sm:$0xff]
      %v3182 = vld [vmem:[%s2543 + $0x13a] sm:$0xff]
      %v3183 = vld [vmem:[%s2543 + $0x142] sm:$0xff]
      %v3184 = vld [vmem:[%s2543 + $0x152] sm:$0xff]
      %v3185 = vld [vmem:[%s2543 + $0x15a] sm:$0xff]
      %v3186 = vld [vmem:[%s2543 + $0x16a] sm:$0xff]
      %v3187 = vld [vmem:[%s2543 + $0x172] sm:$0xff]
      %v3188 = vpack.c.bf16 %v3157, %v3156
      %v3189 = vpack.c.bf16 %v3159, %v3158
      %v3190 = vpack.c.bf16 %v3161, %v3160
      %v3191 = vpack.c.bf16 %v3163, %v3162
      %v3192 = vpack.c.bf16 %v3165, %v3164
      %v3193 = vpack.c.bf16 %v3167, %v3166
      %v3194 = vpack.c.bf16 %v3169, %v3168
      %v3195 = vpack.c.bf16 %v3171, %v3170
      %v3196 = vpack.c.bf16 %v3173, %v3172
      %v3197 = vpack.c.bf16 %v3175, %v3174
      %v3198 = vpack.c.bf16 %v3177, %v3176
      %v3199 = vpack.c.bf16 %v3179, %v3178
      %v3200 = vpack.c.bf16 %v3181, %v3180
      %v3201 = vpack.c.bf16 %v3183, %v3182
      %v3202 = vpack.c.bf16 %v3185, %v3184
      %v3203 = vpack.c.bf16 %v3187, %v3186
      %s3204 = scalar_lea.vmem %s5, 128
      %v3205 = vld [vmem:[%s3204] sm:$0xf]
      %v3206 = vld [vmem:[%s3204 + $0x4] sm:$0xf]
      %v3207 = vld [vmem:[%s3204 + $0x8] sm:$0xf]
      %v3208 = vld [vmem:[%s3204 + $0xc] sm:$0xf]
      %v3213 = vunpack.c.l.b16 %v3205
      %v3214 = vunpack.c.l.b16 %v3206
      %v3215 = vunpack.c.l.b16 %v3207
      %v3216 = vunpack.c.l.b16 %v3208
      %v3217 = vpack.c.b16 %v3214, %v3213
      %v3218 = vpack.c.b16 %v3216, %v3215
      %v3222 = vsel %vm697, %v3188, 0
      %v3225 = vsel %vm697, %v3189, 0
      %v3228 = vsel %vm697, %v3190, 0
      %v3231 = vsel %vm697, %v3191, 0
      %v3234 = vsel %vm697, %v3192, 0
      %v3237 = vsel %vm697, %v3193, 0
      %v3240 = vsel %vm697, %v3194, 0
      %v3243 = vsel %vm697, %v3195, 0
      %v3246 = vsel %vm697, %v3196, 0
      %v3249 = vsel %vm697, %v3197, 0
      %v3252 = vsel %vm697, %v3198, 0
      %v3255 = vsel %vm697, %v3199, 0
      %v3258 = vsel %vm697, %v3200, 0
      %v3261 = vsel %vm697, %v3201, 0
      %v3264 = vsel %vm697, %v3202, 0
      %v3267 = vsel %vm697, %v3203, 0
      %3269 = vmatprep.subr.bf16.mxu0 0
      %3270 = vmatpush1.bf16.msra.mxu0 0
      %3271 = vmatprep.subr.bf16.mxu0 0
      %3272 = vmatpush1.bf16.msra.mxu0 0
      %3273 = vmatprep.subr.bf16.mxu0 0
      %3274 = vmatpush1.bf16.msra.mxu0 0
      %3275 = vmatprep.subr.bf16.mxu0 0
      %3276 = vmatpush1.bf16.msra.mxu0 0
      %3277 = vmatprep.subr.bf16.mxu0 0
      %3278 = vmatpush1.bf16.msra.mxu0 0
      %3279 = vmatprep.subr.bf16.mxu0 0
      %3280 = vmatpush1.bf16.msra.mxu0 0
      %3281 = vmatprep.subr.bf16.mxu0 0
      %3282 = vmatpush1.bf16.msra.mxu0 %v3218
      %3283 = vmatprep.subr.bf16.mxu0 0
      %3284 = vmatpush1.bf16.msra.mxu0 %v3217
      %3285 = vmatprep.subr.bf16.mxu0 0
      %3286 = vmatpush2.bf16.msra.mxu0 0
      %3287 = vmatprep.subr.bf16.mxu0 0
      %3288 = vmatpush2.bf16.msra.mxu0 0
      %3289 = vmatprep.subr.bf16.mxu0 0
      %3290 = vmatpush2.bf16.msra.mxu0 0
      %3291 = vmatprep.subr.bf16.mxu0 0
      %3292 = vmatpush2.bf16.msra.mxu0 0
      %3293 = vmatprep.subr.bf16.mxu0 0
      %3294 = vmatpush2.bf16.msra.mxu0 0
      %3295 = vmatprep.subr.bf16.mxu0 0
      %3296 = vmatpush2.bf16.msra.mxu0 0
      %3297 = vmatprep.subr.bf16.mxu0 0
      %3298 = vmatpush2.bf16.msra.mxu0 0
      %3299 = vmatprep.subr.bf16.mxu0 0
      %3300 = vmatpush2.bf16.msra.mxu0 0
      %3301 = vmatprep.mubr.bf16.mxu0 0
      %3302 = vmatmul.mubr.bf16.gmra.mxu0 %v3222
      %v3303 = vpop.f32.mrf.mxu0
      %v3304 = vadd.f32 0.0, %v3303
      %v3305 = vpop.f32.mrf.mxu0
      %v3306 = vpop.f32.mrf.mxu0
      %v3307 = vadd.f32 0.0, %v3306
      %v3308 = vpop.f32.mrf.mxu0
      %3309 = vmatprep.mubr.bf16.mxu0 0
      %3310 = vmatmul.mubr.bf16.gmra.mxu0 %v3225
      %v3311 = vpop.f32.mrf.mxu0
      %v3312 = vadd.f32 0.0, %v3311
      %v3313 = vpop.f32.mrf.mxu0
      %v3314 = vpop.f32.mrf.mxu0
      %v3315 = vadd.f32 0.0, %v3314
      %v3316 = vpop.f32.mrf.mxu0
      %3317 = vmatprep.mubr.bf16.mxu0 0
      %3318 = vmatmul.mubr.bf16.gmra.mxu0 %v3228
      %v3319 = vpop.f32.mrf.mxu0
      %v3320 = vadd.f32 0.0, %v3319
      %v3321 = vpop.f32.mrf.mxu0
      %v3322 = vpop.f32.mrf.mxu0
      %v3323 = vadd.f32 0.0, %v3322
      %v3324 = vpop.f32.mrf.mxu0
      %3325 = vmatprep.mubr.bf16.mxu0 0
      %3326 = vmatmul.mubr.bf16.gmra.mxu0 %v3231
      %v3327 = vpop.f32.mrf.mxu0
      %v3328 = vadd.f32 0.0, %v3327
      %v3329 = vpop.f32.mrf.mxu0
      %v3330 = vpop.f32.mrf.mxu0
      %v3331 = vadd.f32 0.0, %v3330
      %v3332 = vpop.f32.mrf.mxu0
      %3333 = vmatprep.mubr.bf16.mxu0 0
      %3334 = vmatmul.mubr.bf16.gmra.mxu0 %v3234
      %v3335 = vpop.f32.mrf.mxu0
      %v3336 = vadd.f32 0.0, %v3335
      %v3337 = vpop.f32.mrf.mxu0
      %v3338 = vpop.f32.mrf.mxu0
      %v3339 = vadd.f32 0.0, %v3338
      %v3340 = vpop.f32.mrf.mxu0
      %3341 = vmatprep.mubr.bf16.mxu0 0
      %3342 = vmatmul.mubr.bf16.gmra.mxu0 %v3237
      %v3343 = vpop.f32.mrf.mxu0
      %v3344 = vadd.f32 0.0, %v3343
      %v3345 = vpop.f32.mrf.mxu0
      %v3346 = vpop.f32.mrf.mxu0
      %v3347 = vadd.f32 0.0, %v3346
      %v3348 = vpop.f32.mrf.mxu0
      %3349 = vmatprep.mubr.bf16.mxu0 0
      %3350 = vmatmul.mubr.bf16.gmra.mxu0 %v3240
      %v3351 = vpop.f32.mrf.mxu0
      %v3352 = vadd.f32 0.0, %v3351
      %v3353 = vpop.f32.mrf.mxu0
      %v3354 = vpop.f32.mrf.mxu0
      %v3355 = vadd.f32 0.0, %v3354
      %v3356 = vpop.f32.mrf.mxu0
      %3357 = vmatprep.mubr.bf16.mxu0 0
      %3358 = vmatmul.mubr.bf16.gmra.mxu0 %v3243
      %v3359 = vpop.f32.mrf.mxu0
      %v3360 = vadd.f32 0.0, %v3359
      %v3361 = vpop.f32.mrf.mxu0
      %v3362 = vpop.f32.mrf.mxu0
      %v3363 = vadd.f32 0.0, %v3362
      %v3364 = vpop.f32.mrf.mxu0
      %3365 = vmatprep.mubr.bf16.mxu0 0
      %3366 = vmatmul.mubr.bf16.gmra.mxu0 %v3246
      %v3367 = vpop.f32.mrf.mxu0
      %v3368 = vadd.f32 0.0, %v3367
      %v3369 = vpop.f32.mrf.mxu0
      %v3370 = vpop.f32.mrf.mxu0
      %v3371 = vadd.f32 0.0, %v3370
      %v3372 = vpop.f32.mrf.mxu0
      %3373 = vmatprep.mubr.bf16.mxu0 0
      %3374 = vmatmul.mubr.bf16.gmra.mxu0 %v3249
      %v3375 = vpop.f32.mrf.mxu0
      %v3376 = vadd.f32 0.0, %v3375
      %v3377 = vpop.f32.mrf.mxu0
      %v3378 = vpop.f32.mrf.mxu0
      %v3379 = vadd.f32 0.0, %v3378
      %v3380 = vpop.f32.mrf.mxu0
      %3381 = vmatprep.mubr.bf16.mxu0 0
      %3382 = vmatmul.mubr.bf16.gmra.mxu0 %v3252
      %v3383 = vpop.f32.mrf.mxu0
      %v3384 = vadd.f32 0.0, %v3383
      %v3385 = vpop.f32.mrf.mxu0
      %v3386 = vpop.f32.mrf.mxu0
      %v3387 = vadd.f32 0.0, %v3386
      %v3388 = vpop.f32.mrf.mxu0
      %3389 = vmatprep.mubr.bf16.mxu0 0
      %3390 = vmatmul.mubr.bf16.gmra.mxu0 %v3255
      %v3391 = vpop.f32.mrf.mxu0
      %v3392 = vadd.f32 0.0, %v3391
      %v3393 = vpop.f32.mrf.mxu0
      %v3394 = vpop.f32.mrf.mxu0
      %v3395 = vadd.f32 0.0, %v3394
      %v3396 = vpop.f32.mrf.mxu0
      %3397 = vmatprep.mubr.bf16.mxu0 0
      %3398 = vmatmul.mubr.bf16.gmra.mxu0 %v3258
      %v3399 = vpop.f32.mrf.mxu0
      %v3400 = vadd.f32 0.0, %v3399
      %v3401 = vpop.f32.mrf.mxu0
      %v3402 = vpop.f32.mrf.mxu0
      %v3403 = vadd.f32 0.0, %v3402
      %v3404 = vpop.f32.mrf.mxu0
      %3405 = vmatprep.mubr.bf16.mxu0 0
      %3406 = vmatmul.mubr.bf16.gmra.mxu0 %v3261
      %v3407 = vpop.f32.mrf.mxu0
      %v3408 = vadd.f32 0.0, %v3407
      %v3409 = vpop.f32.mrf.mxu0
      %v3410 = vpop.f32.mrf.mxu0
      %v3411 = vadd.f32 0.0, %v3410
      %v3412 = vpop.f32.mrf.mxu0
      %3413 = vmatprep.mubr.bf16.mxu0 0
      %3414 = vmatmul.mubr.bf16.gmra.mxu0 %v3264
      %v3415 = vpop.f32.mrf.mxu0
      %v3416 = vadd.f32 0.0, %v3415
      %v3417 = vpop.f32.mrf.mxu0
      %v3418 = vpop.f32.mrf.mxu0
      %v3419 = vadd.f32 0.0, %v3418
      %v3420 = vpop.f32.mrf.mxu0
      %3421 = vmatprep.mubr.bf16.mxu0 0
      %3422 = vmatmul.mubr.bf16.gmra.mxu0 %v3267
      %v3423 = vpop.f32.mrf.mxu0
      %v3424 = vadd.f32 0.0, %v3423
      %v3425 = vpop.f32.mrf.mxu0
      %v3426 = vpop.f32.mrf.mxu0
      %v3427 = vadd.f32 0.0, %v3426
      %v3428 = vpop.f32.mrf.mxu0
      %3429 = vdwg.mxu0
      %v3430 = vadd.f32 %v3124, %v3304
      %v3431 = vadd.f32 %v3125, %v3307
      %v3432 = vadd.f32 %v3126, %v3312
      %v3433 = vadd.f32 %v3127, %v3315
      %v3434 = vadd.f32 %v3128, %v3320
      %v3435 = vadd.f32 %v3129, %v3323
      %v3436 = vadd.f32 %v3130, %v3328
      %v3437 = vadd.f32 %v3131, %v3331
      %v3438 = vadd.f32 %v3132, %v3336
      %v3439 = vadd.f32 %v3133, %v3339
      %v3440 = vadd.f32 %v3134, %v3344
      %v3441 = vadd.f32 %v3135, %v3347
      %v3442 = vadd.f32 %v3136, %v3352
      %v3443 = vadd.f32 %v3137, %v3355
      %v3444 = vadd.f32 %v3138, %v3360
      %v3445 = vadd.f32 %v3139, %v3363
      %v3446 = vadd.f32 %v3140, %v3368
      %v3447 = vadd.f32 %v3141, %v3371
      %v3448 = vadd.f32 %v3142, %v3376
      %v3449 = vadd.f32 %v3143, %v3379
      %v3450 = vadd.f32 %v3144, %v3384
      %v3451 = vadd.f32 %v3145, %v3387
      %v3452 = vadd.f32 %v3146, %v3392
      %v3453 = vadd.f32 %v3147, %v3395
      %v3454 = vadd.f32 %v3148, %v3400
      %v3455 = vadd.f32 %v3149, %v3403
      %v3456 = vadd.f32 %v3150, %v3408
      %v3457 = vadd.f32 %v3151, %v3411
      %v3458 = vadd.f32 %v3152, %v3416
      %v3459 = vadd.f32 %v3153, %v3419
      %v3460 = vadd.f32 %v3154, %v3424
      %v3461 = vadd.f32 %v3155, %v3427
      %3494 = vrot.lane.b32.xlu0 %v3430, 4
      %v3495 = vpop.permute.xlu0 %3494
      %3496 = vrot.lane.b32.xlu0 %v3431, 4
      %v3497 = vpop.permute.xlu0 %3496
      %3498 = vrot.lane.b32.xlu0 %v3432, 4
      %v3499 = vpop.permute.xlu0 %3498
      %3500 = vrot.lane.b32.xlu0 %v3433, 4
      %v3501 = vpop.permute.xlu0 %3500
      %3502 = vrot.lane.b32.xlu0 %v3434, 4
      %v3503 = vpop.permute.xlu0 %3502
      %3504 = vrot.lane.b32.xlu0 %v3435, 4
      %v3505 = vpop.permute.xlu0 %3504
      %3506 = vrot.lane.b32.xlu0 %v3436, 4
      %v3507 = vpop.permute.xlu0 %3506
      %3508 = vrot.lane.b32.xlu0 %v3437, 4
      %v3509 = vpop.permute.xlu0 %3508
      %3510 = vrot.lane.b32.xlu0 %v3438, 4
      %v3511 = vpop.permute.xlu0 %3510
      %3512 = vrot.lane.b32.xlu0 %v3439, 4
      %v3513 = vpop.permute.xlu0 %3512
      %3514 = vrot.lane.b32.xlu0 %v3440, 4
      %v3515 = vpop.permute.xlu0 %3514
      %3516 = vrot.lane.b32.xlu0 %v3441, 4
      %v3517 = vpop.permute.xlu0 %3516
      %3518 = vrot.lane.b32.xlu0 %v3442, 4
      %v3519 = vpop.permute.xlu0 %3518
      %3520 = vrot.lane.b32.xlu0 %v3443, 4
      %v3521 = vpop.permute.xlu0 %3520
      %3522 = vrot.lane.b32.xlu0 %v3444, 4
      %v3523 = vpop.permute.xlu0 %3522
      %3524 = vrot.lane.b32.xlu0 %v3445, 4
      %v3525 = vpop.permute.xlu0 %3524
      %3526 = vrot.lane.b32.xlu0 %v3446, 4
      %v3527 = vpop.permute.xlu0 %3526
      %3528 = vrot.lane.b32.xlu0 %v3447, 4
      %v3529 = vpop.permute.xlu0 %3528
      %3530 = vrot.lane.b32.xlu0 %v3448, 4
      %v3531 = vpop.permute.xlu0 %3530
      %3532 = vrot.lane.b32.xlu0 %v3449, 4
      %v3533 = vpop.permute.xlu0 %3532
      %3534 = vrot.lane.b32.xlu0 %v3450, 4
      %v3535 = vpop.permute.xlu0 %3534
      %3536 = vrot.lane.b32.xlu0 %v3451, 4
      %v3537 = vpop.permute.xlu0 %3536
      %3538 = vrot.lane.b32.xlu0 %v3452, 4
      %v3539 = vpop.permute.xlu0 %3538
      %3540 = vrot.lane.b32.xlu0 %v3453, 4
      %v3541 = vpop.permute.xlu0 %3540
      %3542 = vrot.lane.b32.xlu0 %v3454, 4
      %v3543 = vpop.permute.xlu0 %3542
      %3544 = vrot.lane.b32.xlu0 %v3455, 4
      %v3545 = vpop.permute.xlu0 %3544
      %3546 = vrot.lane.b32.xlu0 %v3456, 4
      %v3547 = vpop.permute.xlu0 %3546
      %3548 = vrot.lane.b32.xlu0 %v3457, 4
      %v3549 = vpop.permute.xlu0 %3548
      %3550 = vrot.lane.b32.xlu0 %v3458, 4
      %v3551 = vpop.permute.xlu0 %3550
      %3552 = vrot.lane.b32.xlu0 %v3459, 4
      %v3553 = vpop.permute.xlu0 %3552
      %3554 = vrot.lane.b32.xlu0 %v3460, 4
      %v3555 = vpop.permute.xlu0 %3554
      %3556 = vrot.lane.b32.xlu0 %v3461, 4
      %v3557 = vpop.permute.xlu0 %3556
      %vm3590 = vcmask 97312
      %3591 = vst.msk [vmem:[%s251] sm:$0xff] %vm3590, %v3495
      %3592 = vst.msk [vmem:[%s251 + $0x8] sm:$0xff] %vm3590, %v3497
      %3593 = vst.msk [vmem:[%s251 + $0x10] sm:$0xff] %vm3590, %v3499
      %3594 = vst.msk [vmem:[%s251 + $0x18] sm:$0xff] %vm3590, %v3501
      %3595 = vst.msk [vmem:[%s251 + $0x20] sm:$0xff] %vm3590, %v3503
      %3596 = vst.msk [vmem:[%s251 + $0x28] sm:$0xff] %vm3590, %v3505
      %3597 = vst.msk [vmem:[%s251 + $0x30] sm:$0xff] %vm3590, %v3507
      %3598 = vst.msk [vmem:[%s251 + $0x38] sm:$0xff] %vm3590, %v3509
      %3599 = vst.msk [vmem:[%s251 + $0x40] sm:$0xff] %vm3590, %v3511
      %3600 = vst.msk [vmem:[%s251 + $0x48] sm:$0xff] %vm3590, %v3513
      %3601 = vst.msk [vmem:[%s251 + $0x50] sm:$0xff] %vm3590, %v3515
      %3602 = vst.msk [vmem:[%s251 + $0x58] sm:$0xff] %vm3590, %v3517
      %3603 = vst.msk [vmem:[%s251 + $0x60] sm:$0xff] %vm3590, %v3519
      %3604 = vst.msk [vmem:[%s251 + $0x68] sm:$0xff] %vm3590, %v3521
      %3605 = vst.msk [vmem:[%s251 + $0x70] sm:$0xff] %vm3590, %v3523
      %3606 = vst.msk [vmem:[%s251 + $0x78] sm:$0xff] %vm3590, %v3525
      %3607 = vst.msk [vmem:[%s251 + $0x80] sm:$0xff] %vm3590, %v3527
      %3608 = vst.msk [vmem:[%s251 + $0x88] sm:$0xff] %vm3590, %v3529
      %3609 = vst.msk [vmem:[%s251 + $0x90] sm:$0xff] %vm3590, %v3531
      %3610 = vst.msk [vmem:[%s251 + $0x98] sm:$0xff] %vm3590, %v3533
      %3611 = vst.msk [vmem:[%s251 + $0xa0] sm:$0xff] %vm3590, %v3535
      %3612 = vst.msk [vmem:[%s251 + $0xa8] sm:$0xff] %vm3590, %v3537
      %3613 = vst.msk [vmem:[%s251 + $0xb0] sm:$0xff] %vm3590, %v3539
      %3614 = vst.msk [vmem:[%s251 + $0xb8] sm:$0xff] %vm3590, %v3541
      %3615 = vst.msk [vmem:[%s251 + $0xc0] sm:$0xff] %vm3590, %v3543
      %3616 = vst.msk [vmem:[%s251 + $0xc8] sm:$0xff] %vm3590, %v3545
      %3617 = vst.msk [vmem:[%s251 + $0xd0] sm:$0xff] %vm3590, %v3547
      %3618 = vst.msk [vmem:[%s251 + $0xd8] sm:$0xff] %vm3590, %v3549
      %3619 = vst.msk [vmem:[%s251 + $0xe0] sm:$0xff] %vm3590, %v3551
      %3620 = vst.msk [vmem:[%s251 + $0xe8] sm:$0xff] %vm3590, %v3553
      %3621 = vst.msk [vmem:[%s251 + $0xf0] sm:$0xff] %vm3590, %v3555
      %3622 = vst.msk [vmem:[%s251 + $0xf8] sm:$0xff] %vm3590, %v3557
      %p3623 = scmp.lt.s32.totalorder %s17, 1
      %s3624 = scalar_select %p3623, %s17, 1
      %s3625 = smul.addr %s3624, 32
      %s3626 = smul.addr %s3625, 8
      %s3627 = scalar_lea.vmem %s6, %s3626
      // Predicated region
      $region45: #{tpu_custom_call.1} parent=43 // pred_check
        %p3628 = pneg %p166
      $region46: #{tpu_custom_call.1} parent=43 // pred_check_branch
        %3630 = sbr.rel (%p3628) target = $region48
      $region47: #{tpu_custom_call.1} parent=43 // pred_region
        _
      $region48: #{tpu_custom_call.1} parent=43 // pred_fallthru
        _
    $region44: #{tpu_custom_call.1} parent=5 // pred_fallthru
      _
    %p3631 = scmp.le.s32.totalorder 2, %s12
    // Predicated region
    $region49: #{tpu_custom_call.1} parent=5 // pred_check
      %p3632 = pneg %p3631
    $region50: #{tpu_custom_call.1} parent=5 // pred_check_branch
      %3634 = sbr.rel (%p3632) target = $region52
    $region51: #{tpu_custom_call.1} parent=5 // pred_region
      %s3635 = ssub.s32 %s12, 2
      // Predicated region
      $region53: #{tpu_custom_call.1} parent=51 // pred_check
        %p3636 = pneg %p172
      $region54: #{tpu_custom_call.1} parent=51 // pred_check_branch
        %3638 = sbr.rel (%p3636) target = $region56
      $region55: #{tpu_custom_call.1} parent=51 // pred_region
        %p3639 = scmp.lt.s32.totalorder %s18, 1
        %s3640 = scalar_select %p3639, %s18, 1
        %s3641 = smul.addr %s3640, 32
        %s3642 = smul.addr %s3641, 8
        %s3643 = scalar_lea.vmem %s6, %s3642
      $region56: #{tpu_custom_call.1} parent=51 // pred_fallthru
        _
    $region52: #{tpu_custom_call.1} parent=5 // pred_fallthru
      _
  $region6: #{tpu_custom_call.1} parent=0 // loop_footer
    %s16 = sadd.s32 1, %s12
  $region7: #{tpu_custom_call.1} parent=0 // loop_footer_branch
    %11 = sbr.rel target = $region3
  $region8: #{tpu_custom_call.1} parent=0 // loop_exit
    _

</llo_original>
